<compile_context>
chip_gen: v7x
topology: tpu7x:2x2x1
jax: 0.10.0
libtpu: 0.0.40
codegen_flags: <defaults>
</compile_context>

<pallas_src>
import jax
import jax.numpy as jnp
from jax.experimental import pallas as pl
from jax.experimental.pallas import tpu as pltpu


# ------------------------------ fused Pallas kernel ------------------------------ #

def _mnist_fused_kernel(p1_ref, w1_ref, b1_ref, w2_ref, b2_ref,
                        wf1_ref, bf1_ref, wf2_ref, bf2_ref, o_ref):
    f32 = jnp.float32

    # --- conv1 as GEMM: [576, 32] @ [32, 128] (rows ordered (di, dj, i1, j1)) ---
    y1 = jnp.dot(p1_ref[...], w1_ref[...], preferred_element_type=f32) + b1_ref[...]

    # --- pool1 (2x2 max) + relu: the 4 pool taps are 4 contiguous 144-row chunks ---
    a1 = jnp.maximum(jnp.maximum(y1[0:144], y1[144:288]),
                     jnp.maximum(y1[288:432], y1[432:576]))
    a1 = jnp.maximum(a1, 0.0)            # [144, 128]; rows = 12x12 spatial, lanes = Cin

    # --- conv2: in-kernel im2col via 25 shifted over-read slices, one GEMM ---
    # Tap (ki, kj) needs rows (oh+ki)*12 + (ow+kj); a contiguous 92-row slice starting
    # at ki*12 + kj contains them all at local offsets oh*12 + ow (other rows = junk).
    patches2 = jnp.concatenate(
        [a1[ki * 12 + kj: ki * 12 + kj + 92, :]
         for ki in range(5) for kj in range(5)],
        axis=1)                                                    # [92, 3200]
    y2 = jnp.dot(patches2, w2_ref[...], preferred_element_type=f32) + b2_ref[...]
    # valid rows of y2: oh*12 + ow with oh, ow in [0, 8)

    # --- pool2 (2x2 max) + relu via 4 shifted views ---
    pmax = jnp.maximum(jnp.maximum(y2[0:79], y2[1:80]),
                       jnp.maximum(y2[12:91], y2[13:92]))
    pmax = jnp.maximum(pmax, 0.0)        # [79, 128]; valid pooled rows at 24*i2 + 2*j2

    # --- flatten: pick the 16 valid pooled rows, concat along lanes -> [1, 2048].
    #     PyTorch's view(-1, 320) order (c*16 + i2*4 + j2) is folded into wf1's rows. ---
    feat = jnp.concatenate(
        [pmax[24 * i2 + 2 * j2: 24 * i2 + 2 * j2 + 1, :]
         for i2 in range(4) for j2 in range(4)],
        axis=1)                                                    # [1, 2048]

    # --- fc1 + relu ---
    # TODO(synk): Dropout2d / F.dropout are identity at inference (training=False);
    #             training-mode RNG dropout is not implemented.
    h1 = jnp.dot(feat, wf1_ref[...], preferred_element_type=f32) + bf1_ref[...]
    h1 = jnp.maximum(h1, 0.0)                                      # [1, 128]

    # --- fc2 + masked log_softmax over the 10 real classes ---
    z = jnp.dot(h1, wf2_ref[...], preferred_element_type=f32) + bf2_ref[...]
    col = jax.lax.broadcasted_iota(jnp.int32, (1, 128), 1)
    z = jnp.where(col < 10, z, -1e30)                              # mask padded logits
    zmax = jnp.max(z, axis=1, keepdims=True)
    lse = jnp.log(jnp.sum(jnp.exp(z - zmax), axis=1, keepdims=True)) + zmax
    logp = z - lse                                                 # [1, 128]

    # Output block is a full (8, 128) tile (tile-aligned store); row 0 is the result.
    o_ref[...] = jnp.broadcast_to(logp, (8, 128))


# ----------------------------- parameter / input prep ---------------------------- #

def prepare_params(params):
    """One-time weight re-layout: transpose + zero-pad to lane-dense / K-padded GEMMs."""
    # conv1: [10,1,5,5] -> [K=32, N=128], K rows ordered (ki, kj)
    w1 = jnp.pad(params["conv1_w"].reshape(10, 25).T, ((0, 7), (0, 118)))
    b1 = jnp.pad(params["conv1_b"], (0, 118)).reshape(1, 128)
    # conv2: [20,10,5,5] -> [K=3200, N=128], K rows ordered (ki, kj, ci)
    w2 = params["conv2_w"].transpose(2, 3, 1, 0)                   # [5,5,10,20]
    w2 = jnp.pad(w2, ((0, 0), (0, 0), (0, 118), (0, 108))).reshape(3200, 128)
    b2 = jnp.pad(params["conv2_b"], (0, 108)).reshape(1, 128)
    # fc1: [50,320] -> [K=2048, N=128], K rows ordered (s=(i2,j2), c) to match `feat`
    wf1 = params["fc1_w"].reshape(50, 20, 4, 4).transpose(2, 3, 1, 0)   # [4,4,20,50]
    wf1 = jnp.pad(wf1, ((0, 0), (0, 0), (0, 108), (0, 78))).reshape(2048, 128)
    bf1 = jnp.pad(params["fc1_b"], (0, 78)).reshape(1, 128)
    # fc2: [10,50] -> [128, 128]
    wf2 = jnp.pad(params["fc2_w"].T, ((0, 78), (0, 118)))
    bf2 = jnp.pad(params["fc2_b"], (0, 118)).reshape(1, 128)
    return dict(w1=w1, b1=b1, w2=w2, b2=b2, wf1=wf1, bf1=bf1, wf2=wf2, bf2=bf2)


def build_conv1_patches(x):
    """x: [B,1,28,28] -> conv1 im2col patches [B, 576, 32].

    Rows are ordered (di, dj, i1, j1) with conv1 output pixel (2*i1+di, 2*j1+dj), so
    the in-kernel 2x2 max-pool is a max over 4 contiguous 144-row chunks.
    """
    B = x.shape[0]
    xs = x[:, 0]                                                    # [B, 28, 28]
    taps = [xs[:, ki:ki + 24, kj:kj + 24] for ki in range(5) for kj in range(5)]
    p = jnp.stack(taps, axis=-1)                                    # [B, 24, 24, 25]
    p = p.reshape(B, 12, 2, 12, 2, 25)                              # [B, i1, di, j1, dj, k]
    p = p.transpose(0, 2, 4, 1, 3, 5)                               # [B, di, dj, i1, j1, k]
    p = p.reshape(B, 576, 25)
    return jnp.pad(p, ((0, 0), (0, 0), (0, 7)))                     # K: 25 -> 32


# ----------------------------------- forward ------------------------------------- #

def net_forward(prepped, x):
    B = x.shape[0]
    p1 = build_conv1_patches(x)
    out = pl.pallas_call(
        _mnist_fused_kernel,
        out_shape=jax.ShapeDtypeStruct((B, 8, 128), jnp.float32),
        grid=(B,),
        in_specs=[
            pl.BlockSpec((None, 576, 32), lambda b: (b, 0, 0)),     # conv1 patches
            pl.BlockSpec((32, 128), lambda b: (0, 0)),              # w1
            pl.BlockSpec((1, 128), lambda b: (0, 0)),               # b1
            pl.BlockSpec((3200, 128), lambda b: (0, 0)),            # w2
            pl.BlockSpec((1, 128), lambda b: (0, 0)),               # b2
            pl.BlockSpec((2048, 128), lambda b: (0, 0)),            # fc1
            pl.BlockSpec((1, 128), lambda b: (0, 0)),               # bf1
            pl.BlockSpec((128, 128), lambda b: (0, 0)),             # fc2
            pl.BlockSpec((1, 128), lambda b: (0, 0)),               # bf2
        ],
        out_specs=pl.BlockSpec((None, 8, 128), lambda b: (b, 0, 0)),
        compiler_params=pltpu.CompilerParams(
            dimension_semantics=("parallel",),
            vmem_limit_bytes=32 * 1024 * 1024),
    )(p1, prepped["w1"], prepped["b1"], prepped["w2"], prepped["b2"],
      prepped["wf1"], prepped["bf1"], prepped["wf2"], prepped["bf2"])
    return out[:, 0, :10]


# -------------------------- params & pure-JAX reference --------------------------- #

def init_params(key):
    def u(k, shape, fan_in):
        bound = 1.0 / jnp.sqrt(jnp.float32(fan_in))
        return jax.random.uniform(k, shape, jnp.float32, -bound, bound)

    ks = jax.random.split(key, 8)
    return {
        "conv1_w": u(ks[0], (10, 1, 5, 5), 1 * 5 * 5),
        "conv1_b": u(ks[1], (10,), 1 * 5 * 5),
        "conv2_w": u(ks[2], (20, 10, 5, 5), 10 * 5 * 5),
        "conv2_b": u(ks[3], (20,), 10 * 5 * 5),
        "fc1_w":   u(ks[4], (50, 320), 320),
        "fc1_b":   u(ks[5], (50,), 320),
        "fc2_w":   u(ks[6], (10, 50), 50),
        "fc2_b":   u(ks[7], (10,), 50),
    }


def reference_forward(params, x):
    def conv(x, w, b):
        y = jax.lax.conv_general_dilated(
            x, w, window_strides=(1, 1), padding="VALID",
            dimension_numbers=("NCHW", "OIHW", "NCHW"))
        return y + b[None, :, None, None]

    def pool_relu(x):
        B, C, H, W = x.shape
        xr = x.reshape(B, C, H // 2, 2, W // 2, 2)
        return jnp.maximum(xr.max(axis=(3, 5)), 0.0)

    x = pool_relu(conv(x, params["conv1_w"], params["conv1_b"]))
    x = pool_relu(conv(x, params["conv2_w"], params["conv2_b"]))
    x = x.reshape(x.shape[0], 320)
    x = jnp.maximum(x @ params["fc1_w"].T + params["fc1_b"], 0.0)
    z = x @ params["fc2_w"].T + params["fc2_b"]
    return jax.nn.log_softmax(z, axis=1)


# ------------------------------------- main --------------------------------------- #

if __name__ == "__main__":
    key = jax.random.PRNGKey(0)
    pkey, xkey = jax.random.split(key)
    params = init_params(pkey)
    prepped = prepare_params(params)           # one-time weight re-layout (off hot path)

    # MNIST geometry is forced by the 320-wide flatten: 28x28 -> 24 -> 12 -> 8 -> 4.
    x = jax.random.normal(xkey, (2, 1, 28, 28), jnp.float32)

    fwd = jax.jit(net_forward)
    out = jax.block_until_ready(fwd(prepped, x))

    assert out.shape == (2, 10), out.shape
    ref = reference_forward(params, x)
    max_err = float(jnp.max(jnp.abs(out - ref)))
    assert max_err < 1e-2, f"mismatch vs reference: {max_err}"

    print("KERNEL_OK")
</pallas_src>

<mosaic_0001>
module attributes {stable_mosaic.version = 11 : i64} {
  func.func @_mnist_fused_kernel(%arg0: i32, %arg1: memref<1x576x32xf32, #tpu.memory_space<vmem>>, %arg2: memref<32x128xf32, #tpu.memory_space<vmem>>, %arg3: memref<1x128xf32, #tpu.memory_space<vmem>>, %arg4: memref<3200x128xf32, #tpu.memory_space<vmem>>, %arg5: memref<1x128xf32, #tpu.memory_space<vmem>>, %arg6: memref<2048x128xf32, #tpu.memory_space<vmem>>, %arg7: memref<1x128xf32, #tpu.memory_space<vmem>>, %arg8: memref<128x128xf32, #tpu.memory_space<vmem>>, %arg9: memref<1x128xf32, #tpu.memory_space<vmem>>, %arg10: memref<1x8x128xf32, #tpu.memory_space<vmem>>) attributes {dimension_semantics = [#tpu.dimension_semantics<parallel>], iteration_bounds = array<i64: 2>, scalar_prefetch = 0 : i64, scratch_operands = 0 : i64, tpu.core_type = #tpu.core_type<tc>, window_params = [{transform_indices = @transform_0, window_bounds = array<i64: 1, 576, 32>}, {pipeline_mode = #tpu.pipeline_mode<synchronous>, transform_indices = @transform_1, window_bounds = array<i64: 32, 128>}, {pipeline_mode = #tpu.pipeline_mode<synchronous>, transform_indices = @transform_2, window_bounds = array<i64: 1, 128>}, {pipeline_mode = #tpu.pipeline_mode<synchronous>, transform_indices = @transform_3, window_bounds = array<i64: 3200, 128>}, {pipeline_mode = #tpu.pipeline_mode<synchronous>, transform_indices = @transform_4, window_bounds = array<i64: 1, 128>}, {pipeline_mode = #tpu.pipeline_mode<synchronous>, transform_indices = @transform_5, window_bounds = array<i64: 2048, 128>}, {pipeline_mode = #tpu.pipeline_mode<synchronous>, transform_indices = @transform_6, window_bounds = array<i64: 1, 128>}, {pipeline_mode = #tpu.pipeline_mode<synchronous>, transform_indices = @transform_7, window_bounds = array<i64: 128, 128>}, {pipeline_mode = #tpu.pipeline_mode<synchronous>, transform_indices = @transform_8, window_bounds = array<i64: 1, 128>}, {transform_indices = @transform_9, window_bounds = array<i64: 1, 8, 128>}]} {
    %c0 = arith.constant 0 : index
    %c0_0 = arith.constant 0 : index
    %c0_1 = arith.constant 0 : index
    %0 = vector.load %arg1[%c0, %c0_0, %c0_1] : memref<1x576x32xf32, #tpu.memory_space<vmem>>, vector<1x576x32xf32>
    %1 = vector.shape_cast %0 : vector<1x576x32xf32> to vector<576x32xf32>
    %c0_2 = arith.constant 0 : index
    %c0_3 = arith.constant 0 : index
    %2 = vector.load %arg2[%c0_2, %c0_3] : memref<32x128xf32, #tpu.memory_space<vmem>>, vector<32x128xf32>
    %cst = arith.constant dense<0.000000e+00> : vector<576x128xf32>
    %3 = tpu.matmul %1, %2, %cst {dimension_numbers = #tpu.dot_dimension_numbers<[1], [0], [0], [1], [0, 0, 1, 1], [], []>} : vector<576x32xf32>, vector<32x128xf32>, vector<576x128xf32> -> vector<576x128xf32>
    %c0_4 = arith.constant 0 : index
    %c0_5 = arith.constant 0 : index
    %4 = vector.load %arg3[%c0_4, %c0_5] : memref<1x128xf32, #tpu.memory_space<vmem>>, vector<1x128xf32>
    %5 = vector.broadcast %4 : vector<1x128xf32> to vector<576x128xf32>
    %6 = arith.addf %3, %5 : vector<576x128xf32>
    %7 = vector.extract_strided_slice %6 {offsets = [0, 0], sizes = [144, 128], strides = [1, 1]} : vector<576x128xf32> to vector<144x128xf32>
    %8 = vector.extract_strided_slice %6 {offsets = [144, 0], sizes = [144, 128], strides = [1, 1]} : vector<576x128xf32> to vector<144x128xf32>
    %9 = arith.maximumf %7, %8 : vector<144x128xf32>
    %10 = vector.extract_strided_slice %6 {offsets = [288, 0], sizes = [144, 128], strides = [1, 1]} : vector<576x128xf32> to vector<144x128xf32>
    %11 = vector.extract_strided_slice %6 {offsets = [432, 0], sizes = [144, 128], strides = [1, 1]} : vector<576x128xf32> to vector<144x128xf32>
    %12 = arith.maximumf %10, %11 : vector<144x128xf32>
    %13 = arith.maximumf %9, %12 : vector<144x128xf32>
    %cst_6 = arith.constant 0.000000e+00 : f32
    %14 = vector.broadcast %cst_6 : f32 to vector<144x128xf32>
    %15 = arith.maximumf %13, %14 : vector<144x128xf32>
    %16 = vector.extract_strided_slice %15 {offsets = [0, 0], sizes = [92, 128], strides = [1, 1]} : vector<144x128xf32> to vector<92x128xf32>
    %17 = vector.extract_strided_slice %15 {offsets = [1, 0], sizes = [92, 128], strides = [1, 1]} : vector<144x128xf32> to vector<92x128xf32>
    %18 = vector.extract_strided_slice %15 {offsets = [2, 0], sizes = [92, 128], strides = [1, 1]} : vector<144x128xf32> to vector<92x128xf32>
    %19 = vector.extract_strided_slice %15 {offsets = [3, 0], sizes = [92, 128], strides = [1, 1]} : vector<144x128xf32> to vector<92x128xf32>
    %20 = vector.extract_strided_slice %15 {offsets = [4, 0], sizes = [92, 128], strides = [1, 1]} : vector<144x128xf32> to vector<92x128xf32>
    %21 = vector.extract_strided_slice %15 {offsets = [12, 0], sizes = [92, 128], strides = [1, 1]} : vector<144x128xf32> to vector<92x128xf32>
    %22 = vector.extract_strided_slice %15 {offsets = [13, 0], sizes = [92, 128], strides = [1, 1]} : vector<144x128xf32> to vector<92x128xf32>
    %23 = vector.extract_strided_slice %15 {offsets = [14, 0], sizes = [92, 128], strides = [1, 1]} : vector<144x128xf32> to vector<92x128xf32>
    %24 = vector.extract_strided_slice %15 {offsets = [15, 0], sizes = [92, 128], strides = [1, 1]} : vector<144x128xf32> to vector<92x128xf32>
    %25 = vector.extract_strided_slice %15 {offsets = [16, 0], sizes = [92, 128], strides = [1, 1]} : vector<144x128xf32> to vector<92x128xf32>
    %26 = vector.extract_strided_slice %15 {offsets = [24, 0], sizes = [92, 128], strides = [1, 1]} : vector<144x128xf32> to vector<92x128xf32>
    %27 = vector.extract_strided_slice %15 {offsets = [25, 0], sizes = [92, 128], strides = [1, 1]} : vector<144x128xf32> to vector<92x128xf32>
    %28 = vector.extract_strided_slice %15 {offsets = [26, 0], sizes = [92, 128], strides = [1, 1]} : vector<144x128xf32> to vector<92x128xf32>
    %29 = vector.extract_strided_slice %15 {offsets = [27, 0], sizes = [92, 128], strides = [1, 1]} : vector<144x128xf32> to vector<92x128xf32>
    %30 = vector.extract_strided_slice %15 {offsets = [28, 0], sizes = [92, 128], strides = [1, 1]} : vector<144x128xf32> to vector<92x128xf32>
    %31 = vector.extract_strided_slice %15 {offsets = [36, 0], sizes = [92, 128], strides = [1, 1]} : vector<144x128xf32> to vector<92x128xf32>
    %32 = vector.extract_strided_slice %15 {offsets = [37, 0], sizes = [92, 128], strides = [1, 1]} : vector<144x128xf32> to vector<92x128xf32>
    %33 = vector.extract_strided_slice %15 {offsets = [38, 0], sizes = [92, 128], strides = [1, 1]} : vector<144x128xf32> to vector<92x128xf32>
    %34 = vector.extract_strided_slice %15 {offsets = [39, 0], sizes = [92, 128], strides = [1, 1]} : vector<144x128xf32> to vector<92x128xf32>
    %35 = vector.extract_strided_slice %15 {offsets = [40, 0], sizes = [92, 128], strides = [1, 1]} : vector<144x128xf32> to vector<92x128xf32>
    %36 = vector.extract_strided_slice %15 {offsets = [48, 0], sizes = [92, 128], strides = [1, 1]} : vector<144x128xf32> to vector<92x128xf32>
    %37 = vector.extract_strided_slice %15 {offsets = [49, 0], sizes = [92, 128], strides = [1, 1]} : vector<144x128xf32> to vector<92x128xf32>
    %38 = vector.extract_strided_slice %15 {offsets = [50, 0], sizes = [92, 128], strides = [1, 1]} : vector<144x128xf32> to vector<92x128xf32>
    %39 = vector.extract_strided_slice %15 {offsets = [51, 0], sizes = [92, 128], strides = [1, 1]} : vector<144x128xf32> to vector<92x128xf32>
    %40 = vector.extract_strided_slice %15 {offsets = [52, 0], sizes = [92, 128], strides = [1, 1]} : vector<144x128xf32> to vector<92x128xf32>
    %41 = tpu.concatenate %16, %17, %18, %19, %20, %21, %22, %23, %24, %25, %26, %27, %28, %29, %30, %31 in 1 : vector<92x128xf32>, vector<92x128xf32>, vector<92x128xf32>, vector<92x128xf32>, vector<92x128xf32>, vector<92x128xf32>, vector<92x128xf32>, vector<92x128xf32>, vector<92x128xf32>, vector<92x128xf32>, vector<92x128xf32>, vector<92x128xf32>, vector<92x128xf32>, vector<92x128xf32>, vector<92x128xf32>, vector<92x128xf32> -> vector<92x2048xf32>
    %42 = tpu.concatenate %32, %33, %34, %35, %36, %37, %38, %39, %40 in 1 : vector<92x128xf32>, vector<92x128xf32>, vector<92x128xf32>, vector<92x128xf32>, vector<92x128xf32>, vector<92x128xf32>, vector<92x128xf32>, vector<92x128xf32>, vector<92x128xf32> -> vector<92x1152xf32>
    %43 = tpu.concatenate %41, %42 in 1 : vector<92x2048xf32>, vector<92x1152xf32> -> vector<92x3200xf32>
    %c0_7 = arith.constant 0 : index
    %c0_8 = arith.constant 0 : index
    %44 = vector.load %arg4[%c0_7, %c0_8] : memref<3200x128xf32, #tpu.memory_space<vmem>>, vector<3200x128xf32>
    %cst_9 = arith.constant dense<0.000000e+00> : vector<92x128xf32>
    %45 = tpu.matmul %43, %44, %cst_9 {dimension_numbers = #tpu.dot_dimension_numbers<[1], [0], [0], [1], [0, 0, 1, 1], [], []>} : vector<92x3200xf32>, vector<3200x128xf32>, vector<92x128xf32> -> vector<92x128xf32>
    %c0_10 = arith.constant 0 : index
    %c0_11 = arith.constant 0 : index
    %46 = vector.load %arg5[%c0_10, %c0_11] : memref<1x128xf32, #tpu.memory_space<vmem>>, vector<1x128xf32>
    %47 = vector.broadcast %46 : vector<1x128xf32> to vector<92x128xf32>
    %48 = arith.addf %45, %47 : vector<92x128xf32>
    %49 = vector.extract_strided_slice %48 {offsets = [0, 0], sizes = [79, 128], strides = [1, 1]} : vector<92x128xf32> to vector<79x128xf32>
    %50 = vector.extract_strided_slice %48 {offsets = [1, 0], sizes = [79, 128], strides = [1, 1]} : vector<92x128xf32> to vector<79x128xf32>
    %51 = arith.maximumf %49, %50 : vector<79x128xf32>
    %52 = vector.extract_strided_slice %48 {offsets = [12, 0], sizes = [79, 128], strides = [1, 1]} : vector<92x128xf32> to vector<79x128xf32>
    %53 = vector.extract_strided_slice %48 {offsets = [13, 0], sizes = [79, 128], strides = [1, 1]} : vector<92x128xf32> to vector<79x128xf32>
    %54 = arith.maximumf %52, %53 : vector<79x128xf32>
    %55 = arith.maximumf %51, %54 : vector<79x128xf32>
    %cst_12 = arith.constant 0.000000e+00 : f32
    %56 = vector.broadcast %cst_12 : f32 to vector<79x128xf32>
    %57 = arith.maximumf %55, %56 : vector<79x128xf32>
    %58 = vector.extract_strided_slice %57 {offsets = [0, 0], sizes = [1, 128], strides = [1, 1]} : vector<79x128xf32> to vector<1x128xf32>
    %59 = vector.extract_strided_slice %57 {offsets = [2, 0], sizes = [1, 128], strides = [1, 1]} : vector<79x128xf32> to vector<1x128xf32>
    %60 = vector.extract_strided_slice %57 {offsets = [4, 0], sizes = [1, 128], strides = [1, 1]} : vector<79x128xf32> to vector<1x128xf32>
    %61 = vector.extract_strided_slice %57 {offsets = [6, 0], sizes = [1, 128], strides = [1, 1]} : vector<79x128xf32> to vector<1x128xf32>
    %62 = vector.extract_strided_slice %57 {offsets = [24, 0], sizes = [1, 128], strides = [1, 1]} : vector<79x128xf32> to vector<1x128xf32>
    %63 = vector.extract_strided_slice %57 {offsets = [26, 0], sizes = [1, 128], strides = [1, 1]} : vector<79x128xf32> to vector<1x128xf32>
    %64 = vector.extract_strided_slice %57 {offsets = [28, 0], sizes = [1, 128], strides = [1, 1]} : vector<79x128xf32> to vector<1x128xf32>
    %65 = vector.extract_strided_slice %57 {offsets = [30, 0], sizes = [1, 128], strides = [1, 1]} : vector<79x128xf32> to vector<1x128xf32>
    %66 = vector.extract_strided_slice %57 {offsets = [48, 0], sizes = [1, 128], strides = [1, 1]} : vector<79x128xf32> to vector<1x128xf32>
    %67 = vector.extract_strided_slice %57 {offsets = [50, 0], sizes = [1, 128], strides = [1, 1]} : vector<79x128xf32> to vector<1x128xf32>
    %68 = vector.extract_strided_slice %57 {offsets = [52, 0], sizes = [1, 128], strides = [1, 1]} : vector<79x128xf32> to vector<1x128xf32>
    %69 = vector.extract_strided_slice %57 {offsets = [54, 0], sizes = [1, 128], strides = [1, 1]} : vector<79x128xf32> to vector<1x128xf32>
    %70 = vector.extract_strided_slice %57 {offsets = [72, 0], sizes = [1, 128], strides = [1, 1]} : vector<79x128xf32> to vector<1x128xf32>
    %71 = vector.extract_strided_slice %57 {offsets = [74, 0], sizes = [1, 128], strides = [1, 1]} : vector<79x128xf32> to vector<1x128xf32>
    %72 = vector.extract_strided_slice %57 {offsets = [76, 0], sizes = [1, 128], strides = [1, 1]} : vector<79x128xf32> to vector<1x128xf32>
    %73 = vector.extract_strided_slice %57 {offsets = [78, 0], sizes = [1, 128], strides = [1, 1]} : vector<79x128xf32> to vector<1x128xf32>
    %74 = tpu.concatenate %58, %59, %60, %61, %62, %63, %64, %65, %66, %67, %68, %69, %70, %71, %72, %73 in 1 : vector<1x128xf32>, vector<1x128xf32>, vector<1x128xf32>, vector<1x128xf32>, vector<1x128xf32>, vector<1x128xf32>, vector<1x128xf32>, vector<1x128xf32>, vector<1x128xf32>, vector<1x128xf32>, vector<1x128xf32>, vector<1x128xf32>, vector<1x128xf32>, vector<1x128xf32>, vector<1x128xf32>, vector<1x128xf32> -> vector<1x2048xf32>
    %c0_13 = arith.constant 0 : index
    %c0_14 = arith.constant 0 : index
    %75 = vector.load %arg6[%c0_13, %c0_14] : memref<2048x128xf32, #tpu.memory_space<vmem>>, vector<2048x128xf32>
    %cst_15 = arith.constant dense<0.000000e+00> : vector<1x128xf32>
    %76 = tpu.matmul %74, %75, %cst_15 {dimension_numbers = #tpu.dot_dimension_numbers<[1], [0], [0], [1], [0, 0, 1, 1], [], []>} : vector<1x2048xf32>, vector<2048x128xf32>, vector<1x128xf32> -> vector<1x128xf32>
    %c0_16 = arith.constant 0 : index
    %c0_17 = arith.constant 0 : index
    %77 = vector.load %arg7[%c0_16, %c0_17] : memref<1x128xf32, #tpu.memory_space<vmem>>, vector<1x128xf32>
    %78 = arith.addf %76, %77 : vector<1x128xf32>
    %cst_18 = arith.constant 0.000000e+00 : f32
    %79 = vector.broadcast %cst_18 : f32 to vector<1x128xf32>
    %80 = arith.maximumf %78, %79 : vector<1x128xf32>
    %c0_19 = arith.constant 0 : index
    %c0_20 = arith.constant 0 : index
    %81 = vector.load %arg8[%c0_19, %c0_20] : memref<128x128xf32, #tpu.memory_space<vmem>>, vector<128x128xf32>
    %cst_21 = arith.constant dense<0.000000e+00> : vector<1x128xf32>
    %82 = tpu.matmul %80, %81, %cst_21 {dimension_numbers = #tpu.dot_dimension_numbers<[1], [0], [0], [1], [0, 0, 1, 1], [], []>} : vector<1x128xf32>, vector<128x128xf32>, vector<1x128xf32> -> vector<1x128xf32>
    %c0_22 = arith.constant 0 : index
    %c0_23 = arith.constant 0 : index
    %83 = vector.load %arg9[%c0_22, %c0_23] : memref<1x128xf32, #tpu.memory_space<vmem>>, vector<1x128xf32>
    %84 = arith.addf %82, %83 : vector<1x128xf32>
    %85 = tpu.iota {dimensions = array<i32: 1>} : vector<1x128xi32>
    %c10_i32 = arith.constant 10 : i32
    %86 = vector.broadcast %c10_i32 : i32 to vector<1x128xi32>
    %87 = arith.cmpi slt, %85, %86 : vector<1x128xi32>
    %cst_24 = arith.constant -1.000000e+30 : f32
    %88 = vector.broadcast %cst_24 : f32 to vector<1x128xf32>
    %89 = arith.select %87, %84, %88 : vector<1x128xi1>, vector<1x128xf32>
    %cst_25 = arith.constant dense<0xFF800000> : vector<1xf32>
    %90 = vector.multi_reduction <maximumf>, %89, %cst_25 [1] : vector<1x128xf32> to vector<1xf32>
    %91 = vector.shape_cast %90 : vector<1xf32> to vector<1x1xf32>
    %92 = vector.broadcast %91 : vector<1x1xf32> to vector<1x128xf32>
    %93 = arith.subf %89, %92 : vector<1x128xf32>
    %94 = math.exp %93 : vector<1x128xf32>
    %cst_26 = arith.constant dense<0.000000e+00> : vector<1xf32>
    %95 = vector.multi_reduction <add>, %94, %cst_26 [1] : vector<1x128xf32> to vector<1xf32>
    %96 = vector.shape_cast %95 : vector<1xf32> to vector<1x1xf32>
    %97 = math.log %96 : vector<1x1xf32>
    %98 = arith.addf %97, %91 : vector<1x1xf32>
    %99 = vector.broadcast %98 : vector<1x1xf32> to vector<1x128xf32>
    %100 = arith.subf %89, %99 : vector<1x128xf32>
    %101 = vector.shape_cast %100 : vector<1x128xf32> to vector<1x128xf32>
    %102 = vector.broadcast %101 : vector<1x128xf32> to vector<8x128xf32>
    %c0_27 = arith.constant 0 : index
    %c0_28 = arith.constant 0 : index
    %c0_29 = arith.constant 0 : index
    %103 = vector.load %arg10[%c0_27, %c0_28, %c0_29] : memref<1x8x128xf32, #tpu.memory_space<vmem>>, vector<1x8x128xf32>
    %104 = vector.shape_cast %103 : vector<1x8x128xf32> to vector<8x128xf32>
    %105 = vector.shape_cast %102 : vector<8x128xf32> to vector<1x8x128xf32>
    tpu.vector_store %arg10[%c0_27, %c0_28, %c0_29], %105 {strides = array<i32>} : memref<1x8x128xf32, #tpu.memory_space<vmem>>, vector<1x8x128xf32>,
    return
  }
  func.func @transform_0(%arg0: i32) -> (i32, i32, i32) {
    %c0_i32 = arith.constant 0 : i32
    %c0_i32_0 = arith.constant 0 : i32
    %c0_i32_1 = arith.constant 0 : i32
    return %arg0, %c0_i32, %c0_i32_0 : i32, i32, i32
  }
  func.func @transform_1(%arg0: i32) -> (i32, i32) {
    %c0_i32 = arith.constant 0 : i32
    %c0_i32_0 = arith.constant 0 : i32
    %c0_i32_1 = arith.constant 0 : i32
    return %c0_i32, %c0_i32_0 : i32, i32
  }
  func.func @transform_2(%arg0: i32) -> (i32, i32) {
    %c0_i32 = arith.constant 0 : i32
    %c0_i32_0 = arith.constant 0 : i32
    %c0_i32_1 = arith.constant 0 : i32
    return %c0_i32, %c0_i32_0 : i32, i32
  }
  func.func @transform_3(%arg0: i32) -> (i32, i32) {
    %c0_i32 = arith.constant 0 : i32
    %c0_i32_0 = arith.constant 0 : i32
    %c0_i32_1 = arith.constant 0 : i32
    return %c0_i32, %c0_i32_0 : i32, i32
  }
  func.func @transform_4(%arg0: i32) -> (i32, i32) {
    %c0_i32 = arith.constant 0 : i32
    %c0_i32_0 = arith.constant 0 : i32
    %c0_i32_1 = arith.constant 0 : i32
    return %c0_i32, %c0_i32_0 : i32, i32
  }
  func.func @transform_5(%arg0: i32) -> (i32, i32) {
    %c0_i32 = arith.constant 0 : i32
    %c0_i32_0 = arith.constant 0 : i32
    %c0_i32_1 = arith.constant 0 : i32
    return %c0_i32, %c0_i32_0 : i32, i32
  }
  func.func @transform_6(%arg0: i32) -> (i32, i32) {
    %c0_i32 = arith.constant 0 : i32
    %c0_i32_0 = arith.constant 0 : i32
    %c0_i32_1 = arith.constant 0 : i32
    return %c0_i32, %c0_i32_0 : i32, i32
  }
  func.func @transform_7(%arg0: i32) -> (i32, i32) {
    %c0_i32 = arith.constant 0 : i32
    %c0_i32_0 = arith.constant 0 : i32
    %c0_i32_1 = arith.constant 0 : i32
    return %c0_i32, %c0_i32_0 : i32, i32
  }
  func.func @transform_8(%arg0: i32) -> (i32, i32) {
    %c0_i32 = arith.constant 0 : i32
    %c0_i32_0 = arith.constant 0 : i32
    %c0_i32_1 = arith.constant 0 : i32
    return %c0_i32, %c0_i32_0 : i32, i32
  }
  func.func @transform_9(%arg0: i32) -> (i32, i32, i32) {
    %c0_i32 = arith.constant 0 : i32
    %c0_i32_0 = arith.constant 0 : i32
    %c0_i32_1 = arith.constant 0 : i32
    return %arg0, %c0_i32, %c0_i32_0 : i32, i32, i32
  }
}

</mosaic_0001>

<llo_original>
// kernel: net_forward.1
$region0: #{net_forward.1}
  #allocation0 [shape = 'u32[]', space=smem, size = 0x4, offset = 0x4, fixed_abs, tag = 'smem constant byte address 0x4 - core index']
  #allocation1 [shape = 'u32[144,128]{1,0:T(1,128)}', space=vmem, size = 0x12000, scoped, tag = 'internal scratch']
  %s0 = inlined_call_operand.vmem [shape: f32[2,576,32], index: 0, kind: input, shape index: {}]
  %s1 = inlined_call_operand.vmem [shape: f32[32,128], index: 1, kind: input, shape index: {}]
  %s2 = inlined_call_operand.vmem [shape: f32[1,128], index: 2, kind: input, shape index: {}]
  %s3 = inlined_call_operand.vmem [shape: f32[3200,128], index: 3, kind: input, shape index: {}]
  %s4 = inlined_call_operand.vmem [shape: f32[1,128], index: 4, kind: input, shape index: {}]
  %s5 = inlined_call_operand.vmem [shape: f32[2048,128], index: 5, kind: input, shape index: {}]
  %s6 = inlined_call_operand.vmem [shape: f32[1,128], index: 6, kind: input, shape index: {}]
  %s7 = inlined_call_operand.vmem [shape: f32[128,128], index: 7, kind: input, shape index: {}]
  %s8 = inlined_call_operand.vmem [shape: f32[1,128], index: 8, kind: input, shape index: {}]
  %s9 = inlined_call_operand.vmem [shape: f32[2,8,128], index: 9, kind: output, shape index: {}]
  %s10 = sld [smem:[#allocation0]]
  $region69: #{net_forward.1} parent=0
    _
  %s12 = ssub.s32 1, %s10
  %s13 = scalar_select 0, %s12, %s10
  loop: start=0, step=1, limit=4
  $region2: #{net_forward.1} parent=0 // loop_pre_header
    _
  $region3: #{net_forward.1} parent=0 // loop_header
    %s15 = sphi 0, %s19
    %p16 = scmp.ge.s32.totalorder %s15, 4
    %s25 = sphi 0, %s27
    %s28 = sphi 0, %s25
    %s29 = sphi 0, %s28
    %s45 = sphi 0, %s29
    %s49 = sphi 0, %s49
    %s51 = sphi 0, %s49
    %s52 = sphi 0, %s51
    %s66 = sphi 0, %s52
    %s70 = sphi 0, %s70
    %s72 = sphi 0, %s70
    %s73 = sphi 0, %s72
    %s87 = sphi 0, %s73
    %s91 = sphi 0, %s91
    %s93 = sphi 0, %s91
    %s94 = sphi 0, %s93
    %s108 = sphi 0, %s94
    %s112 = sphi 0, %s112
    %s114 = sphi 0, %s112
    %s115 = sphi 0, %s114
    %s129 = sphi 0, %s115
    %s133 = sphi 0, %s133
    %s135 = sphi 0, %s133
    %s136 = sphi 0, %s135
    %s150 = sphi 0, %s136
    %s154 = sphi 0, %s154
    %s156 = sphi 0, %s154
    %s157 = sphi 0, %s156
    %s171 = sphi 0, %s157
    %s175 = sphi 0, %s175
    %s177 = sphi 0, %s175
    %s178 = sphi 0, %s177
    %s192 = sphi 0, %s178
    %s196 = sphi 0, %s196
    %s198 = sphi 0, %s196
    %s199 = sphi 0, %s198
    %s213 = sphi 0, %s199
    %s219 = sphi 0, %s221
    %s222 = sphi 0, %s219
    %s223 = sphi 0, %s222
    %s239 = sphi 0, %s223
  $region4: #{net_forward.1} parent=0 // loop_header_branch
    %18 = sbr.rel (%p16) target = $region8
  $region5: #{net_forward.1} parent=0 // loop_body
    %s20 = ssub.s32 %s15, 1
    %s21 = ssub.s32 %s15, 2
    %s22 = sadd.s32 %s15, 1
    %s23 = ssub.s32 %s15, %s22
    %p24 = scmp.eq.s32.totalorder %s23, 0
    %s26 = sadd.s32 %s25, 1
    %s27 = scalar_select %p24, %s25, %s26
    %p30 = pneg %p24
    %p31 = scmp.eq.s32.totalorder %s15, 1
    %p32 = por %p30, %p31
    %p33 = scmp.ne.s32.totalorder %s25, %s28
    %p34 = scmp.eq.s32.totalorder %s15, 0
    %p35 = por %p33, %p34
    %p36 = scmp.ne.s32.totalorder %s25, %s28
    %p37 = scmp.eq.s32.totalorder %s20, 1
    %p38 = por %p36, %p37
    %p39 = scmp.ne.s32.totalorder %s28, %s29
    %p40 = scmp.eq.s32.totalorder %s20, 0
    %p41 = por %p39, %p40
    %p42 = scmp.ne.s32.totalorder %s28, %s29
    %p43 = scmp.eq.s32.totalorder %s21, 1
    %p44 = por %p42, %p43
    %p46 = scmp.ne.s32.totalorder %s29, %s45
    %p47 = scmp.eq.s32.totalorder %s21, 0
    %p48 = por %p46, %p47
    %s50 = sadd.s32 %s49, 1
    %p53 = scmp.eq.s32.totalorder %s15, 1
    %p54 = scmp.ne.s32.totalorder %s49, %s51
    %p55 = scmp.eq.s32.totalorder %s15, 0
    %p56 = por %p54, %p55
    %p57 = scmp.ne.s32.totalorder %s49, %s51
    %p58 = scmp.eq.s32.totalorder %s20, 1
    %p59 = por %p57, %p58
    %p60 = scmp.ne.s32.totalorder %s51, %s52
    %p61 = scmp.eq.s32.totalorder %s20, 0
    %p62 = por %p60, %p61
    %p63 = scmp.ne.s32.totalorder %s51, %s52
    %p64 = scmp.eq.s32.totalorder %s21, 1
    %p65 = por %p63, %p64
    %p67 = scmp.ne.s32.totalorder %s52, %s66
    %p68 = scmp.eq.s32.totalorder %s21, 0
    %p69 = por %p67, %p68
    %s71 = sadd.s32 %s70, 1
    %p74 = scmp.eq.s32.totalorder %s15, 1
    %p75 = scmp.ne.s32.totalorder %s70, %s72
    %p76 = scmp.eq.s32.totalorder %s15, 0
    %p77 = por %p75, %p76
    %p78 = scmp.ne.s32.totalorder %s70, %s72
    %p79 = scmp.eq.s32.totalorder %s20, 1
    %p80 = por %p78, %p79
    %p81 = scmp.ne.s32.totalorder %s72, %s73
    %p82 = scmp.eq.s32.totalorder %s20, 0
    %p83 = por %p81, %p82
    %p84 = scmp.ne.s32.totalorder %s72, %s73
    %p85 = scmp.eq.s32.totalorder %s21, 1
    %p86 = por %p84, %p85
    %p88 = scmp.ne.s32.totalorder %s73, %s87
    %p89 = scmp.eq.s32.totalorder %s21, 0
    %p90 = por %p88, %p89
    %s92 = sadd.s32 %s91, 1
    %p95 = scmp.eq.s32.totalorder %s15, 1
    %p96 = scmp.ne.s32.totalorder %s91, %s93
    %p97 = scmp.eq.s32.totalorder %s15, 0
    %p98 = por %p96, %p97
    %p99 = scmp.ne.s32.totalorder %s91, %s93
    %p100 = scmp.eq.s32.totalorder %s20, 1
    %p101 = por %p99, %p100
    %p102 = scmp.ne.s32.totalorder %s93, %s94
    %p103 = scmp.eq.s32.totalorder %s20, 0
    %p104 = por %p102, %p103
    %p105 = scmp.ne.s32.totalorder %s93, %s94
    %p106 = scmp.eq.s32.totalorder %s21, 1
    %p107 = por %p105, %p106
    %p109 = scmp.ne.s32.totalorder %s94, %s108
    %p110 = scmp.eq.s32.totalorder %s21, 0
    %p111 = por %p109, %p110
    %s113 = sadd.s32 %s112, 1
    %p116 = scmp.eq.s32.totalorder %s15, 1
    %p117 = scmp.ne.s32.totalorder %s112, %s114
    %p118 = scmp.eq.s32.totalorder %s15, 0
    %p119 = por %p117, %p118
    %p120 = scmp.ne.s32.totalorder %s112, %s114
    %p121 = scmp.eq.s32.totalorder %s20, 1
    %p122 = por %p120, %p121
    %p123 = scmp.ne.s32.totalorder %s114, %s115
    %p124 = scmp.eq.s32.totalorder %s20, 0
    %p125 = por %p123, %p124
    %p126 = scmp.ne.s32.totalorder %s114, %s115
    %p127 = scmp.eq.s32.totalorder %s21, 1
    %p128 = por %p126, %p127
    %p130 = scmp.ne.s32.totalorder %s115, %s129
    %p131 = scmp.eq.s32.totalorder %s21, 0
    %p132 = por %p130, %p131
    %s134 = sadd.s32 %s133, 1
    %p137 = scmp.eq.s32.totalorder %s15, 1
    %p138 = scmp.ne.s32.totalorder %s133, %s135
    %p139 = scmp.eq.s32.totalorder %s15, 0
    %p140 = por %p138, %p139
    %p141 = scmp.ne.s32.totalorder %s133, %s135
    %p142 = scmp.eq.s32.totalorder %s20, 1
    %p143 = por %p141, %p142
    %p144 = scmp.ne.s32.totalorder %s135, %s136
    %p145 = scmp.eq.s32.totalorder %s20, 0
    %p146 = por %p144, %p145
    %p147 = scmp.ne.s32.totalorder %s135, %s136
    %p148 = scmp.eq.s32.totalorder %s21, 1
    %p149 = por %p147, %p148
    %p151 = scmp.ne.s32.totalorder %s136, %s150
    %p152 = scmp.eq.s32.totalorder %s21, 0
    %p153 = por %p151, %p152
    %s155 = sadd.s32 %s154, 1
    %p158 = scmp.eq.s32.totalorder %s15, 1
    %p159 = scmp.ne.s32.totalorder %s154, %s156
    %p160 = scmp.eq.s32.totalorder %s15, 0
    %p161 = por %p159, %p160
    %p162 = scmp.ne.s32.totalorder %s154, %s156
    %p163 = scmp.eq.s32.totalorder %s20, 1
    %p164 = por %p162, %p163
    %p165 = scmp.ne.s32.totalorder %s156, %s157
    %p166 = scmp.eq.s32.totalorder %s20, 0
    %p167 = por %p165, %p166
    %p168 = scmp.ne.s32.totalorder %s156, %s157
    %p169 = scmp.eq.s32.totalorder %s21, 1
    %p170 = por %p168, %p169
    %p172 = scmp.ne.s32.totalorder %s157, %s171
    %p173 = scmp.eq.s32.totalorder %s21, 0
    %p174 = por %p172, %p173
    %s176 = sadd.s32 %s175, 1
    %p179 = scmp.eq.s32.totalorder %s15, 1
    %p180 = scmp.ne.s32.totalorder %s175, %s177
    %p181 = scmp.eq.s32.totalorder %s15, 0
    %p182 = por %p180, %p181
    %p183 = scmp.ne.s32.totalorder %s175, %s177
    %p184 = scmp.eq.s32.totalorder %s20, 1
    %p185 = por %p183, %p184
    %p186 = scmp.ne.s32.totalorder %s177, %s178
    %p187 = scmp.eq.s32.totalorder %s20, 0
    %p188 = por %p186, %p187
    %p189 = scmp.ne.s32.totalorder %s177, %s178
    %p190 = scmp.eq.s32.totalorder %s21, 1
    %p191 = por %p189, %p190
    %p193 = scmp.ne.s32.totalorder %s178, %s192
    %p194 = scmp.eq.s32.totalorder %s21, 0
    %p195 = por %p193, %p194
    %s197 = sadd.s32 %s196, 1
    %p200 = scmp.eq.s32.totalorder %s15, 1
    %p201 = scmp.ne.s32.totalorder %s196, %s198
    %p202 = scmp.eq.s32.totalorder %s15, 0
    %p203 = por %p201, %p202
    %p204 = scmp.ne.s32.totalorder %s196, %s198
    %p205 = scmp.eq.s32.totalorder %s20, 1
    %p206 = por %p204, %p205
    %p207 = scmp.ne.s32.totalorder %s198, %s199
    %p208 = scmp.eq.s32.totalorder %s20, 0
    %p209 = por %p207, %p208
    %p210 = scmp.ne.s32.totalorder %s198, %s199
    %p211 = scmp.eq.s32.totalorder %s21, 1
    %p212 = por %p210, %p211
    %p214 = scmp.ne.s32.totalorder %s199, %s213
    %p215 = scmp.eq.s32.totalorder %s21, 0
    %p216 = por %p214, %p215
    %s217 = ssub.s32 %s15, %s22
    %p218 = scmp.eq.s32.totalorder %s217, 0
    %s220 = sadd.s32 %s219, 1
    %s221 = scalar_select %p218, %s219, %s220
    %p224 = pneg %p218
    %p225 = scmp.eq.s32.totalorder %s15, 1
    %p226 = por %p224, %p225
    %p227 = scmp.ne.s32.totalorder %s219, %s222
    %p228 = scmp.eq.s32.totalorder %s15, 0
    %p229 = por %p227, %p228
    %p230 = scmp.ne.s32.totalorder %s219, %s222
    %p231 = scmp.eq.s32.totalorder %s20, 1
    %p232 = por %p230, %p231
    %p233 = scmp.ne.s32.totalorder %s222, %s223
    %p234 = scmp.eq.s32.totalorder %s20, 0
    %p235 = por %p233, %p234
    %p236 = scmp.ne.s32.totalorder %s222, %s223
    %p237 = scmp.eq.s32.totalorder %s21, 1
    %p238 = por %p236, %p237
    %p240 = scmp.ne.s32.totalorder %s223, %s239
    %p241 = scmp.eq.s32.totalorder %s21, 0
    %p242 = por %p240, %p241
    %p243 = scmp.le.s32.totalorder 1, %s15
    %p244 = scmp.lt.s32.totalorder %s15, 3
    %p245 = pnand %p243, %p244
    %p246 = pneg %p245
    // Predicated region
    $region9: #{net_forward.1} parent=5 // pred_check
      _
    $region10: #{net_forward.1} parent=5 // pred_check_branch
      %248 = sbr.rel (%p245) target = $region12
    $region11: #{net_forward.1} parent=5 // pred_region
      %s249 = ssub.s32 %s15, 1
      // Predicated region
      $region13: #{net_forward.1} parent=11 // pred_check
        %p250 = pneg %p62
      $region14: #{net_forward.1} parent=11 // pred_check_branch
        %252 = sbr.rel (%p250) target = $region16
      $region15: #{net_forward.1} parent=11 // pred_region
        _
      $region16: #{net_forward.1} parent=11 // pred_fallthru
        _
      // Predicated region
      $region17: #{net_forward.1} parent=11 // pred_check
        %p253 = pneg %p83
      $region18: #{net_forward.1} parent=11 // pred_check_branch
        %255 = sbr.rel (%p253) target = $region20
      $region19: #{net_forward.1} parent=11 // pred_region
        _
      $region20: #{net_forward.1} parent=11 // pred_fallthru
        _
      // Predicated region
      $region21: #{net_forward.1} parent=11 // pred_check
        %p256 = pneg %p104
      $region22: #{net_forward.1} parent=11 // pred_check_branch
        %258 = sbr.rel (%p256) target = $region24
      $region23: #{net_forward.1} parent=11 // pred_region
        _
      $region24: #{net_forward.1} parent=11 // pred_fallthru
        _
      // Predicated region
      $region25: #{net_forward.1} parent=11 // pred_check
        %p259 = pneg %p125
      $region26: #{net_forward.1} parent=11 // pred_check_branch
        %261 = sbr.rel (%p259) target = $region28
      $region27: #{net_forward.1} parent=11 // pred_region
        _
      $region28: #{net_forward.1} parent=11 // pred_fallthru
        _
      // Predicated region
      $region29: #{net_forward.1} parent=11 // pred_check
        %p262 = pneg %p146
      $region30: #{net_forward.1} parent=11 // pred_check_branch
        %264 = sbr.rel (%p262) target = $region32
      $region31: #{net_forward.1} parent=11 // pred_region
        _
      $region32: #{net_forward.1} parent=11 // pred_fallthru
        _
      // Predicated region
      $region33: #{net_forward.1} parent=11 // pred_check
        %p265 = pneg %p167
      $region34: #{net_forward.1} parent=11 // pred_check_branch
        %267 = sbr.rel (%p265) target = $region36
      $region35: #{net_forward.1} parent=11 // pred_region
        _
      $region36: #{net_forward.1} parent=11 // pred_fallthru
        _
      // Predicated region
      $region37: #{net_forward.1} parent=11 // pred_check
        %p268 = pneg %p188
      $region38: #{net_forward.1} parent=11 // pred_check_branch
        %270 = sbr.rel (%p268) target = $region40
      $region39: #{net_forward.1} parent=11 // pred_region
        _
      $region40: #{net_forward.1} parent=11 // pred_fallthru
        _
      // Predicated region
      $region41: #{net_forward.1} parent=11 // pred_check
        %p271 = pneg %p209
      $region42: #{net_forward.1} parent=11 // pred_check_branch
        %273 = sbr.rel (%p271) target = $region44
      $region43: #{net_forward.1} parent=11 // pred_region
        _
      $region44: #{net_forward.1} parent=11 // pred_fallthru
        _
    $region12: #{net_forward.1} parent=5 // pred_fallthru
      _
    %p274 = scmp.lt.s32.totalorder %s15, 2
    // Predicated region
    $region45: #{net_forward.1} parent=5 // pred_check
      %p275 = pneg %p274
    $region46: #{net_forward.1} parent=5 // pred_check_branch
      %277 = sbr.rel (%p275) target = $region48
    $region47: #{net_forward.1} parent=5 // pred_region
      // Predicated region
      $region49: #{net_forward.1} parent=47 // pred_check
        %p278 = pneg %p35
      $region50: #{net_forward.1} parent=47 // pred_check_branch
        %280 = sbr.rel (%p278) target = $region52
      $region51: #{net_forward.1} parent=47 // pred_region
        %p281 = scmp.lt.s32.totalorder %s15, 1
        %s282 = scalar_select %p281, %s15, 1
        %s283 = smul.addr %s282, 72
        %s284 = smul.addr %s283, 8
        %s285 = scalar_lea.vmem %s0, %s284
      $region52: #{net_forward.1} parent=47 // pred_fallthru
        _
    $region48: #{net_forward.1} parent=5 // pred_fallthru
      _
    %p286 = scmp.le.s32.totalorder 1, %s15
    %p287 = scmp.lt.s32.totalorder %s15, 3
    %p288 = pnand %p286, %p287
    %p289 = pneg %p288
    // Predicated region
    $region53: #{net_forward.1} parent=5 // pred_check
      _
    $region54: #{net_forward.1} parent=5 // pred_check_branch
      %291 = sbr.rel (%p288) target = $region56
    $region55: #{net_forward.1} parent=5 // pred_region
      %s292 = ssub.s32 %s15, 1
      %p293 = scmp.lt.s32.totalorder %s20, 1
      %s294 = scalar_select %p293, %s20, 1
      %s295 = smul.addr %s294, 72
      %s296 = smul.addr %s295, 8
      %s297 = scalar_lea.vmem %s0, %s296
      %p298 = pneg %p41
      %p299 = pneg %p38
      %p300 = pneg %p62
      %p301 = pneg %p59
      %p302 = pneg %p83
      %p303 = pneg %p80
      %p304 = pneg %p104
      %p305 = pneg %p101
      %p306 = pneg %p125
      %p307 = pneg %p122
      %p308 = pneg %p146
      %p309 = pneg %p143
      %p310 = pneg %p167
      %p311 = pneg %p164
      %p312 = pneg %p188
      %p313 = pneg %p185
      %p314 = pneg %p209
      %p315 = pneg %p206
      %p316 = pneg %p235
      %p317 = pneg %p232
      %p318 = scmp.lt.s32.totalorder %s20, 1
      %s319 = scalar_select %p318, %s20, 1
      %s320 = smul.addr %s319, 8
      %s321 = scalar_lea.vmem %s9, %s320
      %p322 = scmp.lt.s32.totalorder %s20, 1
      %s323 = scalar_select %p322, %s20, 1
      %s324 = smul.addr %s323, 72
      %s325 = smul.addr %s324, 8
      %s326 = scalar_lea.vmem %s0, %s325
      %p327 = scmp.lt.s32.totalorder %s20, 1
      %s328 = scalar_select %p327, %s20, 1
      %s329 = smul.addr %s328, 8
      %s330 = scalar_lea.vmem %s9, %s329
      %v331 = vld [vmem:[%s326] sm:$0xff]
      %v332 = vld [vmem:[%s326 + $0x8] sm:$0xff]
      %v333 = vld [vmem:[%s326 + $0x10] sm:$0xff]
      %v334 = vld [vmem:[%s326 + $0x18] sm:$0xff]
      %v335 = vld [vmem:[%s326 + $0x20] sm:$0xff]
      %v336 = vld [vmem:[%s326 + $0x28] sm:$0xff]
      %v337 = vld [vmem:[%s326 + $0x30] sm:$0xff]
      %v338 = vld [vmem:[%s326 + $0x38] sm:$0xff]
      %v339 = vld [vmem:[%s326 + $0x40] sm:$0xff]
      %v340 = vld [vmem:[%s326 + $0x48] sm:$0xff]
      %v341 = vld [vmem:[%s326 + $0x50] sm:$0xff]
      %v342 = vld [vmem:[%s326 + $0x58] sm:$0xff]
      %v343 = vld [vmem:[%s326 + $0x60] sm:$0xff]
      %v344 = vld [vmem:[%s326 + $0x68] sm:$0xff]
      %v345 = vld [vmem:[%s326 + $0x70] sm:$0xff]
      %v346 = vld [vmem:[%s326 + $0x78] sm:$0xff]
      %v347 = vld [vmem:[%s326 + $0x80] sm:$0xff]
      %v348 = vld [vmem:[%s326 + $0x88] sm:$0xff]
      %v349 = vld [vmem:[%s326 + $0x90] sm:$0xff]
      %v350 = vld [vmem:[%s326 + $0x98] sm:$0xff]
      %v351 = vld [vmem:[%s326 + $0xa0] sm:$0xff]
      %v352 = vld [vmem:[%s326 + $0xa8] sm:$0xff]
      %v353 = vld [vmem:[%s326 + $0xb0] sm:$0xff]
      %v354 = vld [vmem:[%s326 + $0xb8] sm:$0xff]
      %v355 = vld [vmem:[%s326 + $0xc0] sm:$0xff]
      %v356 = vld [vmem:[%s326 + $0xc8] sm:$0xff]
      %v357 = vld [vmem:[%s326 + $0xd0] sm:$0xff]
      %v358 = vld [vmem:[%s326 + $0xd8] sm:$0xff]
      %v359 = vld [vmem:[%s326 + $0xe0] sm:$0xff]
      %v360 = vld [vmem:[%s326 + $0xe8] sm:$0xff]
      %v361 = vld [vmem:[%s326 + $0xf0] sm:$0xff]
      %v362 = vld [vmem:[%s326 + $0xf8] sm:$0xff]
      %v363 = vld [vmem:[%s326 + $0x100] sm:$0xff]
      %v364 = vld [vmem:[%s326 + $0x108] sm:$0xff]
      %v365 = vld [vmem:[%s326 + $0x110] sm:$0xff]
      %v366 = vld [vmem:[%s326 + $0x118] sm:$0xff]
      %v367 = vld [vmem:[%s326 + $0x120] sm:$0xff]
      %v368 = vld [vmem:[%s326 + $0x128] sm:$0xff]
      %v369 = vld [vmem:[%s326 + $0x130] sm:$0xff]
      %v370 = vld [vmem:[%s326 + $0x138] sm:$0xff]
      %v371 = vld [vmem:[%s326 + $0x140] sm:$0xff]
      %v372 = vld [vmem:[%s326 + $0x148] sm:$0xff]
      %v373 = vld [vmem:[%s326 + $0x150] sm:$0xff]
      %v374 = vld [vmem:[%s326 + $0x158] sm:$0xff]
      %v375 = vld [vmem:[%s326 + $0x160] sm:$0xff]
      %v376 = vld [vmem:[%s326 + $0x168] sm:$0xff]
      %v377 = vld [vmem:[%s326 + $0x170] sm:$0xff]
      %v378 = vld [vmem:[%s326 + $0x178] sm:$0xff]
      %v379 = vld [vmem:[%s326 + $0x180] sm:$0xff]
      %v380 = vld [vmem:[%s326 + $0x188] sm:$0xff]
      %v381 = vld [vmem:[%s326 + $0x190] sm:$0xff]
      %v382 = vld [vmem:[%s326 + $0x198] sm:$0xff]
      %v383 = vld [vmem:[%s326 + $0x1a0] sm:$0xff]
      %v384 = vld [vmem:[%s326 + $0x1a8] sm:$0xff]
      %v385 = vld [vmem:[%s326 + $0x1b0] sm:$0xff]
      %v386 = vld [vmem:[%s326 + $0x1b8] sm:$0xff]
      %v387 = vld [vmem:[%s326 + $0x1c0] sm:$0xff]
      %v388 = vld [vmem:[%s326 + $0x1c8] sm:$0xff]
      %v389 = vld [vmem:[%s326 + $0x1d0] sm:$0xff]
      %v390 = vld [vmem:[%s326 + $0x1d8] sm:$0xff]
      %v391 = vld [vmem:[%s326 + $0x1e0] sm:$0xff]
      %v392 = vld [vmem:[%s326 + $0x1e8] sm:$0xff]
      %v393 = vld [vmem:[%s326 + $0x1f0] sm:$0xff]
      %v394 = vld [vmem:[%s326 + $0x1f8] sm:$0xff]
      %v395 = vld [vmem:[%s326 + $0x200] sm:$0xff]
      %v396 = vld [vmem:[%s326 + $0x208] sm:$0xff]
      %v397 = vld [vmem:[%s326 + $0x210] sm:$0xff]
      %v398 = vld [vmem:[%s326 + $0x218] sm:$0xff]
      %v399 = vld [vmem:[%s326 + $0x220] sm:$0xff]
      %v400 = vld [vmem:[%s326 + $0x228] sm:$0xff]
      %v401 = vld [vmem:[%s326 + $0x230] sm:$0xff]
      %v402 = vld [vmem:[%s326 + $0x238] sm:$0xff]
      %v403 = vld [vmem:[%s1] sm:$0xff]
      %v404 = vld [vmem:[%s1 + $0x8] sm:$0xff]
      %v405 = vld [vmem:[%s1 + $0x10] sm:$0xff]
      %v406 = vld [vmem:[%s1 + $0x18] sm:$0xff]
      %v407 = vld [vmem:[%s2] sm:$0x1]
      %v409 = vlaneseq
      %v410 = vshrl.u32 %v409, 7
      %v411 = vsub.s32 0, %v410
      %v412 = vrot.slane %v407, %v411
      %vm414 = vcmask 261120
      %v416 = vsel %vm414, %v331, 0
      %v419 = vsel %vm414, %v332, 0
      %v422 = vsel %vm414, %v333, 0
      %v425 = vsel %vm414, %v334, 0
      %v428 = vsel %vm414, %v335, 0
      %v431 = vsel %vm414, %v336, 0
      %v434 = vsel %vm414, %v337, 0
      %v437 = vsel %vm414, %v338, 0
      %v440 = vsel %vm414, %v339, 0
      %v443 = vsel %vm414, %v340, 0
      %v446 = vsel %vm414, %v341, 0
      %v449 = vsel %vm414, %v342, 0
      %v452 = vsel %vm414, %v343, 0
      %v455 = vsel %vm414, %v344, 0
      %v458 = vsel %vm414, %v345, 0
      %v461 = vsel %vm414, %v346, 0
      %v464 = vsel %vm414, %v347, 0
      %v467 = vsel %vm414, %v348, 0
      %v470 = vsel %vm414, %v349, 0
      %v473 = vsel %vm414, %v350, 0
      %v476 = vsel %vm414, %v351, 0
      %v479 = vsel %vm414, %v352, 0
      %v482 = vsel %vm414, %v353, 0
      %v485 = vsel %vm414, %v354, 0
      %v488 = vsel %vm414, %v355, 0
      %v491 = vsel %vm414, %v356, 0
      %v494 = vsel %vm414, %v357, 0
      %v497 = vsel %vm414, %v358, 0
      %v500 = vsel %vm414, %v359, 0
      %v503 = vsel %vm414, %v360, 0
      %v506 = vsel %vm414, %v361, 0
      %v509 = vsel %vm414, %v362, 0
      %v512 = vsel %vm414, %v363, 0
      %v515 = vsel %vm414, %v364, 0
      %v518 = vsel %vm414, %v365, 0
      %v521 = vsel %vm414, %v366, 0
      %v524 = vsel %vm414, %v367, 0
      %v527 = vsel %vm414, %v368, 0
      %v530 = vsel %vm414, %v369, 0
      %v533 = vsel %vm414, %v370, 0
      %v536 = vsel %vm414, %v371, 0
      %v539 = vsel %vm414, %v372, 0
      %v542 = vsel %vm414, %v373, 0
      %v545 = vsel %vm414, %v374, 0
      %v548 = vsel %vm414, %v375, 0
      %v551 = vsel %vm414, %v376, 0
      %v554 = vsel %vm414, %v377, 0
      %v557 = vsel %vm414, %v378, 0
      %v560 = vsel %vm414, %v379, 0
      %v563 = vsel %vm414, %v380, 0
      %v566 = vsel %vm414, %v381, 0
      %v569 = vsel %vm414, %v382, 0
      %v572 = vsel %vm414, %v383, 0
      %v575 = vsel %vm414, %v384, 0
      %v578 = vsel %vm414, %v385, 0
      %v581 = vsel %vm414, %v386, 0
      %v584 = vsel %vm414, %v387, 0
      %v587 = vsel %vm414, %v388, 0
      %v590 = vsel %vm414, %v389, 0
      %v593 = vsel %vm414, %v390, 0
      %v596 = vsel %vm414, %v391, 0
      %v599 = vsel %vm414, %v392, 0
      %v602 = vsel %vm414, %v393, 0
      %v605 = vsel %vm414, %v394, 0
      %v608 = vsel %vm414, %v395, 0
      %v611 = vsel %vm414, %v396, 0
      %v614 = vsel %vm414, %v397, 0
      %v617 = vsel %vm414, %v398, 0
      %v620 = vsel %vm414, %v399, 0
      %v623 = vsel %vm414, %v400, 0
      %v626 = vsel %vm414, %v401, 0
      %v629 = vsel %vm414, %v402, 0
      %631 = vmatprep.subr.mxu0 0.0
      %632 = vmatpush1.msra.mxu0 %v403
      %633 = vmatprep.subr.mxu0 0.0
      %634 = vmatpush1.msra.mxu0 %v404
      %635 = vmatprep.subr.mxu0 0.0
      %636 = vmatpush1.msra.mxu0 %v405
      %637 = vmatprep.subr.mxu0 0.0
      %638 = vmatpush1.msra.mxu0 %v406
      %639 = vmatprep.subr.mxu0 0.0
      %640 = vmatpush1.msra.mxu0 0.0
      %641 = vmatprep.subr.mxu0 0.0
      %642 = vmatpush1.msra.mxu0 0.0
      %643 = vmatprep.subr.mxu0 0.0
      %644 = vmatpush1.msra.mxu0 0.0
      %645 = vmatprep.subr.mxu0 0.0
      %646 = vmatpush1.msra.mxu0 0.0
      %647 = vmatprep.subr.mxu0 0.0
      %648 = vmatpush1.msra.mxu0 0.0
      %649 = vmatprep.subr.mxu0 0.0
      %650 = vmatpush1.msra.mxu0 0.0
      %651 = vmatprep.subr.mxu0 0.0
      %652 = vmatpush1.msra.mxu0 0.0
      %653 = vmatprep.subr.mxu0 0.0
      %654 = vmatpush1.msra.mxu0 0.0
      %655 = vmatprep.subr.mxu0 0.0
      %656 = vmatpush1.msra.mxu0 0.0
      %657 = vmatprep.subr.mxu0 0.0
      %658 = vmatpush1.msra.mxu0 0.0
      %659 = vmatprep.subr.mxu0 0.0
      %660 = vmatpush1.msra.mxu0 0.0
      %661 = vmatprep.subr.mxu0 0.0
      %662 = vmatpush1.msra.mxu0 0.0
      %663 = vmatprep.subr.mxu0 0.0
      %664 = vmatpush1.msra.mxu0 0.0
      %665 = vmatprep.subr.mxu0 0.0
      %666 = vmatpush1.msra.mxu0 0.0
      %667 = vmatprep.subr.mxu0 0.0
      %668 = vmatpush1.msra.mxu0 0.0
      %669 = vmatprep.subr.mxu0 0.0
      %670 = vmatpush1.msra.mxu0 0.0
      %671 = vmatprep.subr.mxu0 0.0
      %672 = vmatpush1.msra.mxu0 0.0
      %673 = vmatprep.subr.mxu0 0.0
      %674 = vmatpush1.msra.mxu0 0.0
      %675 = vmatprep.subr.mxu0 0.0
      %676 = vmatpush1.msra.mxu0 0.0
      %677 = vmatprep.subr.mxu0 0.0
      %678 = vmatpush1.msra.mxu0 0.0
      %679 = vmatprep.subr.mxu0 0.0
      %680 = vmatpush1.msra.mxu0 0.0
      %681 = vmatprep.subr.mxu0 0.0
      %682 = vmatpush1.msra.mxu0 0.0
      %683 = vmatprep.subr.mxu0 0.0
      %684 = vmatpush1.msra.mxu0 0.0
      %685 = vmatprep.subr.mxu0 0.0
      %686 = vmatpush1.msra.mxu0 0.0
      %687 = vmatprep.subr.mxu0 0.0
      %688 = vmatpush1.msra.mxu0 0.0
      %689 = vmatprep.subr.mxu0 0.0
      %690 = vmatpush1.msra.mxu0 0.0
      %691 = vmatprep.subr.mxu0 0.0
      %692 = vmatpush1.msra.mxu0 0.0
      %693 = vmatprep.subr.mxu0 0.0
      %694 = vmatpush1.msra.mxu0 0.0
      %695 = vmatprep.mubr.f32.mxu0 0.0
      %696 = vmatmul.mubr.f32.gmra.mrb[0].mxu0 %v416
      %v697 = vpop.f32.mrb[0].mxu0
      %v698 = vadd.f32 %v412, %v697
      %v699 = vpop.f32.mrb[0].mxu0
      %700 = vmatprep.mubr.f32.mxu0 0.0
      %701 = vmatmul.mubr.f32.gmra.mrb[0].mxu0 %v419
      %v702 = vpop.f32.mrb[0].mxu0
      %v703 = vadd.f32 %v412, %v702
      %v704 = vpop.f32.mrb[0].mxu0
      %705 = vmatprep.mubr.f32.mxu0 0.0
      %706 = vmatmul.mubr.f32.gmra.mrb[0].mxu0 %v422
      %v707 = vpop.f32.mrb[0].mxu0
      %v708 = vadd.f32 %v412, %v707
      %v709 = vpop.f32.mrb[0].mxu0
      %710 = vmatprep.mubr.f32.mxu0 0.0
      %711 = vmatmul.mubr.f32.gmra.mrb[0].mxu0 %v425
      %v712 = vpop.f32.mrb[0].mxu0
      %v713 = vadd.f32 %v412, %v712
      %v714 = vpop.f32.mrb[0].mxu0
      %715 = vmatprep.mubr.f32.mxu0 0.0
      %716 = vmatmul.mubr.f32.gmra.mrb[0].mxu0 %v428
      %v717 = vpop.f32.mrb[0].mxu0
      %v718 = vadd.f32 %v412, %v717
      %v719 = vpop.f32.mrb[0].mxu0
      %720 = vmatprep.mubr.f32.mxu0 0.0
      %721 = vmatmul.mubr.f32.gmra.mrb[0].mxu0 %v431
      %v722 = vpop.f32.mrb[0].mxu0
      %v723 = vadd.f32 %v412, %v722
      %v724 = vpop.f32.mrb[0].mxu0
      %725 = vmatprep.mubr.f32.mxu0 0.0
      %726 = vmatmul.mubr.f32.gmra.mrb[0].mxu0 %v434
      %v727 = vpop.f32.mrb[0].mxu0
      %v728 = vadd.f32 %v412, %v727
      %v729 = vpop.f32.mrb[0].mxu0
      %730 = vmatprep.mubr.f32.mxu0 0.0
      %731 = vmatmul.mubr.f32.gmra.mrb[0].mxu0 %v437
      %v732 = vpop.f32.mrb[0].mxu0
      %v733 = vadd.f32 %v412, %v732
      %v734 = vpop.f32.mrb[0].mxu0
      %735 = vmatprep.mubr.f32.mxu0 0.0
      %736 = vmatmul.mubr.f32.gmra.mrb[0].mxu0 %v440
      %v737 = vpop.f32.mrb[0].mxu0
      %v738 = vadd.f32 %v412, %v737
      %v739 = vpop.f32.mrb[0].mxu0
      %740 = vmatprep.mubr.f32.mxu0 0.0
      %741 = vmatmul.mubr.f32.gmra.mrb[0].mxu0 %v443
      %v742 = vpop.f32.mrb[0].mxu0
      %v743 = vadd.f32 %v412, %v742
      %v744 = vpop.f32.mrb[0].mxu0
      %745 = vmatprep.mubr.f32.mxu0 0.0
      %746 = vmatmul.mubr.f32.gmra.mrb[0].mxu0 %v446
      %v747 = vpop.f32.mrb[0].mxu0
      %v748 = vadd.f32 %v412, %v747
      %v749 = vpop.f32.mrb[0].mxu0
      %750 = vmatprep.mubr.f32.mxu0 0.0
      %751 = vmatmul.mubr.f32.gmra.mrb[0].mxu0 %v449
      %v752 = vpop.f32.mrb[0].mxu0
      %v753 = vadd.f32 %v412, %v752
      %v754 = vpop.f32.mrb[0].mxu0
      %755 = vmatprep.mubr.f32.mxu0 0.0
      %756 = vmatmul.mubr.f32.gmra.mrb[0].mxu0 %v452
      %v757 = vpop.f32.mrb[0].mxu0
      %v758 = vadd.f32 %v412, %v757
      %v759 = vpop.f32.mrb[0].mxu0
      %760 = vmatprep.mubr.f32.mxu0 0.0
      %761 = vmatmul.mubr.f32.gmra.mrb[0].mxu0 %v455
      %v762 = vpop.f32.mrb[0].mxu0
      %v763 = vadd.f32 %v412, %v762
      %v764 = vpop.f32.mrb[0].mxu0
      %765 = vmatprep.mubr.f32.mxu0 0.0
      %766 = vmatmul.mubr.f32.gmra.mrb[0].mxu0 %v458
      %v767 = vpop.f32.mrb[0].mxu0
      %v768 = vadd.f32 %v412, %v767
      %v769 = vpop.f32.mrb[0].mxu0
      %770 = vmatprep.mubr.f32.mxu0 0.0
      %771 = vmatmul.mubr.f32.gmra.mrb[0].mxu0 %v461
      %v772 = vpop.f32.mrb[0].mxu0
      %v773 = vadd.f32 %v412, %v772
      %v774 = vpop.f32.mrb[0].mxu0
      %775 = vmatprep.mubr.f32.mxu0 0.0
      %776 = vmatmul.mubr.f32.gmra.mrb[0].mxu0 %v464
      %v777 = vpop.f32.mrb[0].mxu0
      %v778 = vadd.f32 %v412, %v777
      %v779 = vpop.f32.mrb[0].mxu0
      %780 = vmatprep.mubr.f32.mxu0 0.0
      %781 = vmatmul.mubr.f32.gmra.mrb[0].mxu0 %v467
      %v782 = vpop.f32.mrb[0].mxu0
      %v783 = vadd.f32 %v412, %v782
      %v784 = vpop.f32.mrb[0].mxu0
      %785 = vmatprep.mubr.f32.mxu0 0.0
      %786 = vmatmul.mubr.f32.gmra.mrb[0].mxu0 %v470
      %v787 = vpop.f32.mrb[0].mxu0
      %v788 = vadd.f32 %v412, %v787
      %v789 = vpop.f32.mrb[0].mxu0
      %790 = vmatprep.mubr.f32.mxu0 0.0
      %791 = vmatmul.mubr.f32.gmra.mrb[0].mxu0 %v473
      %v792 = vpop.f32.mrb[0].mxu0
      %v793 = vadd.f32 %v412, %v792
      %v794 = vpop.f32.mrb[0].mxu0
      %795 = vmatprep.mubr.f32.mxu0 0.0
      %796 = vmatmul.mubr.f32.gmra.mrb[0].mxu0 %v476
      %v797 = vpop.f32.mrb[0].mxu0
      %v798 = vadd.f32 %v412, %v797
      %v799 = vpop.f32.mrb[0].mxu0
      %800 = vmatprep.mubr.f32.mxu0 0.0
      %801 = vmatmul.mubr.f32.gmra.mrb[0].mxu0 %v479
      %v802 = vpop.f32.mrb[0].mxu0
      %v803 = vadd.f32 %v412, %v802
      %v804 = vpop.f32.mrb[0].mxu0
      %805 = vmatprep.mubr.f32.mxu0 0.0
      %806 = vmatmul.mubr.f32.gmra.mrb[0].mxu0 %v482
      %v807 = vpop.f32.mrb[0].mxu0
      %v808 = vadd.f32 %v412, %v807
      %v809 = vpop.f32.mrb[0].mxu0
      %810 = vmatprep.mubr.f32.mxu0 0.0
      %811 = vmatmul.mubr.f32.gmra.mrb[0].mxu0 %v485
      %v812 = vpop.f32.mrb[0].mxu0
      %v813 = vadd.f32 %v412, %v812
      %v814 = vpop.f32.mrb[0].mxu0
      %815 = vmatprep.mubr.f32.mxu0 0.0
      %816 = vmatmul.mubr.f32.gmra.mrb[0].mxu0 %v488
      %v817 = vpop.f32.mrb[0].mxu0
      %v818 = vadd.f32 %v412, %v817
      %v819 = vpop.f32.mrb[0].mxu0
      %820 = vmatprep.mubr.f32.mxu0 0.0
      %821 = vmatmul.mubr.f32.gmra.mrb[0].mxu0 %v491
      %v822 = vpop.f32.mrb[0].mxu0
      %v823 = vadd.f32 %v412, %v822
      %v824 = vpop.f32.mrb[0].mxu0
      %825 = vmatprep.mubr.f32.mxu0 0.0
      %826 = vmatmul.mubr.f32.gmra.mrb[0].mxu0 %v494
      %v827 = vpop.f32.mrb[0].mxu0
      %v828 = vadd.f32 %v412, %v827
      %v829 = vpop.f32.mrb[0].mxu0
      %830 = vmatprep.mubr.f32.mxu0 0.0
      %831 = vmatmul.mubr.f32.gmra.mrb[0].mxu0 %v497
      %v832 = vpop.f32.mrb[0].mxu0
      %v833 = vadd.f32 %v412, %v832
      %v834 = vpop.f32.mrb[0].mxu0
      %835 = vmatprep.mubr.f32.mxu0 0.0
      %836 = vmatmul.mubr.f32.gmra.mrb[0].mxu0 %v500
      %v837 = vpop.f32.mrb[0].mxu0
      %v838 = vadd.f32 %v412, %v837
      %v839 = vpop.f32.mrb[0].mxu0
      %840 = vmatprep.mubr.f32.mxu0 0.0
      %841 = vmatmul.mubr.f32.gmra.mrb[0].mxu0 %v503
      %v842 = vpop.f32.mrb[0].mxu0
      %v843 = vadd.f32 %v412, %v842
      %v844 = vpop.f32.mrb[0].mxu0
      %845 = vmatprep.mubr.f32.mxu0 0.0
      %846 = vmatmul.mubr.f32.gmra.mrb[0].mxu0 %v506
      %v847 = vpop.f32.mrb[0].mxu0
      %v848 = vadd.f32 %v412, %v847
      %v849 = vpop.f32.mrb[0].mxu0
      %850 = vmatprep.mubr.f32.mxu0 0.0
      %851 = vmatmul.mubr.f32.gmra.mrb[0].mxu0 %v509
      %v852 = vpop.f32.mrb[0].mxu0
      %v853 = vadd.f32 %v412, %v852
      %v854 = vpop.f32.mrb[0].mxu0
      %855 = vmatprep.mubr.f32.mxu0 0.0
      %856 = vmatmul.mubr.f32.gmra.mrb[0].mxu0 %v512
      %v857 = vpop.f32.mrb[0].mxu0
      %v858 = vadd.f32 %v412, %v857
      %v859 = vpop.f32.mrb[0].mxu0
      %860 = vmatprep.mubr.f32.mxu0 0.0
      %861 = vmatmul.mubr.f32.gmra.mrb[0].mxu0 %v515
      %v862 = vpop.f32.mrb[0].mxu0
      %v863 = vadd.f32 %v412, %v862
      %v864 = vpop.f32.mrb[0].mxu0
      %865 = vmatprep.mubr.f32.mxu0 0.0
      %866 = vmatmul.mubr.f32.gmra.mrb[0].mxu0 %v518
      %v867 = vpop.f32.mrb[0].mxu0
      %v868 = vadd.f32 %v412, %v867
      %v869 = vpop.f32.mrb[0].mxu0
      %870 = vmatprep.mubr.f32.mxu0 0.0
      %871 = vmatmul.mubr.f32.gmra.mrb[0].mxu0 %v521
      %v872 = vpop.f32.mrb[0].mxu0
      %v873 = vadd.f32 %v412, %v872
      %v874 = vpop.f32.mrb[0].mxu0
      %875 = vmatprep.mubr.f32.mxu0 0.0
      %876 = vmatmul.mubr.f32.gmra.mrb[0].mxu0 %v524
      %v877 = vpop.f32.mrb[0].mxu0
      %v878 = vadd.f32 %v412, %v877
      %v879 = vpop.f32.mrb[0].mxu0
      %880 = vmatprep.mubr.f32.mxu0 0.0
      %881 = vmatmul.mubr.f32.gmra.mrb[0].mxu0 %v527
      %v882 = vpop.f32.mrb[0].mxu0
      %v883 = vadd.f32 %v412, %v882
      %v884 = vpop.f32.mrb[0].mxu0
      %885 = vmatprep.mubr.f32.mxu0 0.0
      %886 = vmatmul.mubr.f32.gmra.mrb[0].mxu0 %v530
      %v887 = vpop.f32.mrb[0].mxu0
      %v888 = vadd.f32 %v412, %v887
      %v889 = vpop.f32.mrb[0].mxu0
      %890 = vmatprep.mubr.f32.mxu0 0.0
      %891 = vmatmul.mubr.f32.gmra.mrb[0].mxu0 %v533
      %v892 = vpop.f32.mrb[0].mxu0
      %v893 = vadd.f32 %v412, %v892
      %v894 = vpop.f32.mrb[0].mxu0
      %895 = vmatprep.mubr.f32.mxu0 0.0
      %896 = vmatmul.mubr.f32.gmra.mrb[0].mxu0 %v536
      %v897 = vpop.f32.mrb[0].mxu0
      %v898 = vadd.f32 %v412, %v897
      %v899 = vpop.f32.mrb[0].mxu0
      %900 = vmatprep.mubr.f32.mxu0 0.0
      %901 = vmatmul.mubr.f32.gmra.mrb[0].mxu0 %v539
      %v902 = vpop.f32.mrb[0].mxu0
      %v903 = vadd.f32 %v412, %v902
      %v904 = vpop.f32.mrb[0].mxu0
      %905 = vmatprep.mubr.f32.mxu0 0.0
      %906 = vmatmul.mubr.f32.gmra.mrb[0].mxu0 %v542
      %v907 = vpop.f32.mrb[0].mxu0
      %v908 = vadd.f32 %v412, %v907
      %v909 = vpop.f32.mrb[0].mxu0
      %910 = vmatprep.mubr.f32.mxu0 0.0
      %911 = vmatmul.mubr.f32.gmra.mrb[0].mxu0 %v545
      %v912 = vpop.f32.mrb[0].mxu0
      %v913 = vadd.f32 %v412, %v912
      %v914 = vpop.f32.mrb[0].mxu0
      %915 = vmatprep.mubr.f32.mxu0 0.0
      %916 = vmatmul.mubr.f32.gmra.mrb[0].mxu0 %v548
      %v917 = vpop.f32.mrb[0].mxu0
      %v918 = vadd.f32 %v412, %v917
      %v919 = vpop.f32.mrb[0].mxu0
      %920 = vmatprep.mubr.f32.mxu0 0.0
      %921 = vmatmul.mubr.f32.gmra.mrb[0].mxu0 %v551
      %v922 = vpop.f32.mrb[0].mxu0
      %v923 = vadd.f32 %v412, %v922
      %v924 = vpop.f32.mrb[0].mxu0
      %925 = vmatprep.mubr.f32.mxu0 0.0
      %926 = vmatmul.mubr.f32.gmra.mrb[0].mxu0 %v554
      %v927 = vpop.f32.mrb[0].mxu0
      %v928 = vadd.f32 %v412, %v927
      %v929 = vpop.f32.mrb[0].mxu0
      %930 = vmatprep.mubr.f32.mxu0 0.0
      %931 = vmatmul.mubr.f32.gmra.mrb[0].mxu0 %v557
      %v932 = vpop.f32.mrb[0].mxu0
      %v933 = vadd.f32 %v412, %v932
      %v934 = vpop.f32.mrb[0].mxu0
      %935 = vmatprep.mubr.f32.mxu0 0.0
      %936 = vmatmul.mubr.f32.gmra.mrb[0].mxu0 %v560
      %v937 = vpop.f32.mrb[0].mxu0
      %v938 = vadd.f32 %v412, %v937
      %v939 = vpop.f32.mrb[0].mxu0
      %940 = vmatprep.mubr.f32.mxu0 0.0
      %941 = vmatmul.mubr.f32.gmra.mrb[0].mxu0 %v563
      %v942 = vpop.f32.mrb[0].mxu0
      %v943 = vadd.f32 %v412, %v942
      %v944 = vpop.f32.mrb[0].mxu0
      %945 = vmatprep.mubr.f32.mxu0 0.0
      %946 = vmatmul.mubr.f32.gmra.mrb[0].mxu0 %v566
      %v947 = vpop.f32.mrb[0].mxu0
      %v948 = vadd.f32 %v412, %v947
      %v949 = vpop.f32.mrb[0].mxu0
      %950 = vmatprep.mubr.f32.mxu0 0.0
      %951 = vmatmul.mubr.f32.gmra.mrb[0].mxu0 %v569
      %v952 = vpop.f32.mrb[0].mxu0
      %v953 = vadd.f32 %v412, %v952
      %v954 = vpop.f32.mrb[0].mxu0
      %955 = vmatprep.mubr.f32.mxu0 0.0
      %956 = vmatmul.mubr.f32.gmra.mrb[0].mxu0 %v572
      %v957 = vpop.f32.mrb[0].mxu0
      %v958 = vadd.f32 %v412, %v957
      %v959 = vpop.f32.mrb[0].mxu0
      %960 = vmatprep.mubr.f32.mxu0 0.0
      %961 = vmatmul.mubr.f32.gmra.mrb[0].mxu0 %v575
      %v962 = vpop.f32.mrb[0].mxu0
      %v963 = vadd.f32 %v412, %v962
      %v964 = vpop.f32.mrb[0].mxu0
      %965 = vmatprep.mubr.f32.mxu0 0.0
      %966 = vmatmul.mubr.f32.gmra.mrb[0].mxu0 %v578
      %v967 = vpop.f32.mrb[0].mxu0
      %v968 = vadd.f32 %v412, %v967
      %v969 = vpop.f32.mrb[0].mxu0
      %970 = vmatprep.mubr.f32.mxu0 0.0
      %971 = vmatmul.mubr.f32.gmra.mrb[0].mxu0 %v581
      %v972 = vpop.f32.mrb[0].mxu0
      %v973 = vadd.f32 %v412, %v972
      %v974 = vpop.f32.mrb[0].mxu0
      %975 = vmatprep.mubr.f32.mxu0 0.0
      %976 = vmatmul.mubr.f32.gmra.mrb[0].mxu0 %v584
      %v977 = vpop.f32.mrb[0].mxu0
      %v978 = vadd.f32 %v412, %v977
      %v979 = vpop.f32.mrb[0].mxu0
      %980 = vmatprep.mubr.f32.mxu0 0.0
      %981 = vmatmul.mubr.f32.gmra.mrb[0].mxu0 %v587
      %v982 = vpop.f32.mrb[0].mxu0
      %v983 = vadd.f32 %v412, %v982
      %v984 = vpop.f32.mrb[0].mxu0
      %985 = vmatprep.mubr.f32.mxu0 0.0
      %986 = vmatmul.mubr.f32.gmra.mrb[0].mxu0 %v590
      %v987 = vpop.f32.mrb[0].mxu0
      %v988 = vadd.f32 %v412, %v987
      %v989 = vpop.f32.mrb[0].mxu0
      %990 = vmatprep.mubr.f32.mxu0 0.0
      %991 = vmatmul.mubr.f32.gmra.mrb[0].mxu0 %v593
      %v992 = vpop.f32.mrb[0].mxu0
      %v993 = vadd.f32 %v412, %v992
      %v994 = vpop.f32.mrb[0].mxu0
      %995 = vmatprep.mubr.f32.mxu0 0.0
      %996 = vmatmul.mubr.f32.gmra.mrb[0].mxu0 %v596
      %v997 = vpop.f32.mrb[0].mxu0
      %v998 = vadd.f32 %v412, %v997
      %v999 = vpop.f32.mrb[0].mxu0
      %1000 = vmatprep.mubr.f32.mxu0 0.0
      %1001 = vmatmul.mubr.f32.gmra.mrb[0].mxu0 %v599
      %v1002 = vpop.f32.mrb[0].mxu0
      %v1003 = vadd.f32 %v412, %v1002
      %v1004 = vpop.f32.mrb[0].mxu0
      %1005 = vmatprep.mubr.f32.mxu0 0.0
      %1006 = vmatmul.mubr.f32.gmra.mrb[0].mxu0 %v602
      %v1007 = vpop.f32.mrb[0].mxu0
      %v1008 = vadd.f32 %v412, %v1007
      %v1009 = vpop.f32.mrb[0].mxu0
      %1010 = vmatprep.mubr.f32.mxu0 0.0
      %1011 = vmatmul.mubr.f32.gmra.mrb[0].mxu0 %v605
      %v1012 = vpop.f32.mrb[0].mxu0
      %v1013 = vadd.f32 %v412, %v1012
      %v1014 = vpop.f32.mrb[0].mxu0
      %1015 = vmatprep.mubr.f32.mxu0 0.0
      %1016 = vmatmul.mubr.f32.gmra.mrb[0].mxu0 %v608
      %v1017 = vpop.f32.mrb[0].mxu0
      %v1018 = vadd.f32 %v412, %v1017
      %v1019 = vpop.f32.mrb[0].mxu0
      %1020 = vmatprep.mubr.f32.mxu0 0.0
      %1021 = vmatmul.mubr.f32.gmra.mrb[0].mxu0 %v611
      %v1022 = vpop.f32.mrb[0].mxu0
      %v1023 = vadd.f32 %v412, %v1022
      %v1024 = vpop.f32.mrb[0].mxu0
      %1025 = vmatprep.mubr.f32.mxu0 0.0
      %1026 = vmatmul.mubr.f32.gmra.mrb[0].mxu0 %v614
      %v1027 = vpop.f32.mrb[0].mxu0
      %v1028 = vadd.f32 %v412, %v1027
      %v1029 = vpop.f32.mrb[0].mxu0
      %1030 = vmatprep.mubr.f32.mxu0 0.0
      %1031 = vmatmul.mubr.f32.gmra.mrb[0].mxu0 %v617
      %v1032 = vpop.f32.mrb[0].mxu0
      %v1033 = vadd.f32 %v412, %v1032
      %v1034 = vpop.f32.mrb[0].mxu0
      %1035 = vmatprep.mubr.f32.mxu0 0.0
      %1036 = vmatmul.mubr.f32.gmra.mrb[0].mxu0 %v620
      %v1037 = vpop.f32.mrb[0].mxu0
      %v1038 = vadd.f32 %v412, %v1037
      %v1039 = vpop.f32.mrb[0].mxu0
      %1040 = vmatprep.mubr.f32.mxu0 0.0
      %1041 = vmatmul.mubr.f32.gmra.mrb[0].mxu0 %v623
      %v1042 = vpop.f32.mrb[0].mxu0
      %v1043 = vadd.f32 %v412, %v1042
      %v1044 = vpop.f32.mrb[0].mxu0
      %1045 = vmatprep.mubr.f32.mxu0 0.0
      %1046 = vmatmul.mubr.f32.gmra.mrb[0].mxu0 %v626
      %v1047 = vpop.f32.mrb[0].mxu0
      %v1048 = vadd.f32 %v412, %v1047
      %v1049 = vpop.f32.mrb[0].mxu0
      %1050 = vmatprep.mubr.f32.mxu0 0.0
      %1051 = vmatmul.mubr.f32.gmra.mrb[0].mxu0 %v629
      %v1052 = vpop.f32.mrb[0].mxu0
      %v1053 = vadd.f32 %v412, %v1052
      %v1054 = vpop.f32.mrb[0].mxu0
      %1055 = vdwg.mxu0
      %v1056 = vmax.f32 %v698, %v788
      %v1057 = vmax.f32 %v703, %v793
      %v1058 = vmax.f32 %v708, %v798
      %v1059 = vmax.f32 %v713, %v803
      %v1060 = vmax.f32 %v718, %v808
      %v1061 = vmax.f32 %v723, %v813
      %v1062 = vmax.f32 %v728, %v818
      %v1063 = vmax.f32 %v733, %v823
      %v1064 = vmax.f32 %v738, %v828
      %v1065 = vmax.f32 %v743, %v833
      %v1066 = vmax.f32 %v748, %v838
      %v1067 = vmax.f32 %v753, %v843
      %v1068 = vmax.f32 %v758, %v848
      %v1069 = vmax.f32 %v763, %v853
      %v1070 = vmax.f32 %v768, %v858
      %v1071 = vmax.f32 %v773, %v863
      %v1072 = vmax.f32 %v778, %v868
      %v1073 = vmax.f32 %v783, %v873
      %v1074 = vmax.f32 %v878, %v968
      %v1075 = vmax.f32 %v883, %v973
      %v1076 = vmax.f32 %v888, %v978
      %v1077 = vmax.f32 %v893, %v983
      %v1078 = vmax.f32 %v898, %v988
      %v1079 = vmax.f32 %v903, %v993
      %v1080 = vmax.f32 %v908, %v998
      %v1081 = vmax.f32 %v913, %v1003
      %v1082 = vmax.f32 %v918, %v1008
      %v1083 = vmax.f32 %v923, %v1013
      %v1084 = vmax.f32 %v928, %v1018
      %v1085 = vmax.f32 %v933, %v1023
      %v1086 = vmax.f32 %v938, %v1028
      %v1087 = vmax.f32 %v943, %v1033
      %v1088 = vmax.f32 %v948, %v1038
      %v1089 = vmax.f32 %v953, %v1043
      %v1090 = vmax.f32 %v958, %v1048
      %v1091 = vmax.f32 %v963, %v1053
      %v1092 = vmax.f32 %v1056, %v1074
      %v1093 = vmax.f32 %v1057, %v1075
      %v1094 = vmax.f32 %v1058, %v1076
      %v1095 = vmax.f32 %v1059, %v1077
      %v1096 = vmax.f32 %v1060, %v1078
      %v1097 = vmax.f32 %v1061, %v1079
      %v1098 = vmax.f32 %v1062, %v1080
      %v1099 = vmax.f32 %v1063, %v1081
      %v1100 = vmax.f32 %v1064, %v1082
      %v1101 = vmax.f32 %v1065, %v1083
      %v1102 = vmax.f32 %v1066, %v1084
      %v1103 = vmax.f32 %v1067, %v1085
      %v1104 = vmax.f32 %v1068, %v1086
      %v1105 = vmax.f32 %v1069, %v1087
      %v1106 = vmax.f32 %v1070, %v1088
      %v1107 = vmax.f32 %v1071, %v1089
      %v1108 = vmax.f32 %v1072, %v1090
      %v1109 = vmax.f32 %v1073, %v1091
      %v1110 = vmax.f32 %v1092, 0.0
      %v1111 = vmax.f32 %v1093, 0.0
      %v1112 = vmax.f32 %v1094, 0.0
      %v1113 = vmax.f32 %v1095, 0.0
      %v1114 = vmax.f32 %v1096, 0.0
      %v1115 = vmax.f32 %v1097, 0.0
      %v1116 = vmax.f32 %v1098, 0.0
      %v1117 = vmax.f32 %v1099, 0.0
      %v1118 = vmax.f32 %v1100, 0.0
      %v1119 = vmax.f32 %v1101, 0.0
      %v1120 = vmax.f32 %v1102, 0.0
      %v1121 = vmax.f32 %v1103, 0.0
      %v1122 = vmax.f32 %v1104, 0.0
      %v1123 = vmax.f32 %v1105, 0.0
      %v1124 = vmax.f32 %v1106, 0.0
      %v1125 = vmax.f32 %v1107, 0.0
      %v1126 = vmax.f32 %v1108, 0.0
      %v1127 = vmax.f32 %v1109, 0.0
      %vm1140 = vcmask 1046528
      %v1141 = vrot.slane %v1110, 1
      %v1142 = vrot.slane %v1111, 1
      %v1143 = vsel %vm1140, %v1141, %v1142
      %v1144 = vrot.slane %v1112, 1
      %v1145 = vsel %vm1140, %v1142, %v1144
      %v1146 = vrot.slane %v1113, 1
      %v1147 = vsel %vm1140, %v1144, %v1146
      %v1148 = vrot.slane %v1114, 1
      %v1149 = vsel %vm1140, %v1146, %v1148
      %v1150 = vrot.slane %v1115, 1
      %v1151 = vsel %vm1140, %v1148, %v1150
      %v1152 = vrot.slane %v1116, 1
      %v1153 = vsel %vm1140, %v1150, %v1152
      %v1154 = vrot.slane %v1117, 1
      %v1155 = vsel %vm1140, %v1152, %v1154
      %v1156 = vrot.slane %v1118, 1
      %v1157 = vsel %vm1140, %v1154, %v1156
      %v1158 = vrot.slane %v1119, 1
      %v1159 = vsel %vm1140, %v1156, %v1158
      %v1160 = vrot.slane %v1120, 1
      %v1161 = vsel %vm1140, %v1158, %v1160
      %v1162 = vrot.slane %v1121, 1
      %v1163 = vsel %vm1140, %v1160, %v1162
      %vm1176 = vcmask 1045504
      %v1177 = vrot.slane %v1110, 2
      %v1178 = vrot.slane %v1111, 2
      %v1179 = vsel %vm1176, %v1177, %v1178
      %v1180 = vrot.slane %v1112, 2
      %v1181 = vsel %vm1176, %v1178, %v1180
      %v1182 = vrot.slane %v1113, 2
      %v1183 = vsel %vm1176, %v1180, %v1182
      %v1184 = vrot.slane %v1114, 2
      %v1185 = vsel %vm1176, %v1182, %v1184
      %v1186 = vrot.slane %v1115, 2
      %v1187 = vsel %vm1176, %v1184, %v1186
      %v1188 = vrot.slane %v1116, 2
      %v1189 = vsel %vm1176, %v1186, %v1188
      %v1190 = vrot.slane %v1117, 2
      %v1191 = vsel %vm1176, %v1188, %v1190
      %v1192 = vrot.slane %v1118, 2
      %v1193 = vsel %vm1176, %v1190, %v1192
      %v1194 = vrot.slane %v1119, 2
      %v1195 = vsel %vm1176, %v1192, %v1194
      %v1196 = vrot.slane %v1120, 2
      %v1197 = vsel %vm1176, %v1194, %v1196
      %v1198 = vrot.slane %v1121, 2
      %v1199 = vsel %vm1176, %v1196, %v1198
      %vm1212 = vcmask 1044480
      %v1213 = vrot.slane %v1110, 3
      %v1214 = vrot.slane %v1111, 3
      %v1215 = vsel %vm1212, %v1213, %v1214
      %v1216 = vrot.slane %v1112, 3
      %v1217 = vsel %vm1212, %v1214, %v1216
      %v1218 = vrot.slane %v1113, 3
      %v1219 = vsel %vm1212, %v1216, %v1218
      %v1220 = vrot.slane %v1114, 3
      %v1221 = vsel %vm1212, %v1218, %v1220
      %v1222 = vrot.slane %v1115, 3
      %v1223 = vsel %vm1212, %v1220, %v1222
      %v1224 = vrot.slane %v1116, 3
      %v1225 = vsel %vm1212, %v1222, %v1224
      %v1226 = vrot.slane %v1117, 3
      %v1227 = vsel %vm1212, %v1224, %v1226
      %v1228 = vrot.slane %v1118, 3
      %v1229 = vsel %vm1212, %v1226, %v1228
      %v1230 = vrot.slane %v1119, 3
      %v1231 = vsel %vm1212, %v1228, %v1230
      %v1232 = vrot.slane %v1120, 3
      %v1233 = vsel %vm1212, %v1230, %v1232
      %v1234 = vrot.slane %v1121, 3
      %v1235 = vsel %vm1212, %v1232, %v1234
      %vm1248 = vcmask 1043456
      %v1249 = vrot.slane %v1110, 4
      %v1250 = vrot.slane %v1111, 4
      %v1251 = vsel %vm1248, %v1249, %v1250
      %v1252 = vrot.slane %v1112, 4
      %v1253 = vsel %vm1248, %v1250, %v1252
      %v1254 = vrot.slane %v1113, 4
      %v1255 = vsel %vm1248, %v1252, %v1254
      %v1256 = vrot.slane %v1114, 4
      %v1257 = vsel %vm1248, %v1254, %v1256
      %v1258 = vrot.slane %v1115, 4
      %v1259 = vsel %vm1248, %v1256, %v1258
      %v1260 = vrot.slane %v1116, 4
      %v1261 = vsel %vm1248, %v1258, %v1260
      %v1262 = vrot.slane %v1117, 4
      %v1263 = vsel %vm1248, %v1260, %v1262
      %v1264 = vrot.slane %v1118, 4
      %v1265 = vsel %vm1248, %v1262, %v1264
      %v1266 = vrot.slane %v1119, 4
      %v1267 = vsel %vm1248, %v1264, %v1266
      %v1268 = vrot.slane %v1120, 4
      %v1269 = vsel %vm1248, %v1266, %v1268
      %v1270 = vrot.slane %v1121, 4
      %v1271 = vsel %vm1248, %v1268, %v1270
      %v1285 = vrot.slane %v1122, 4
      %v1286 = vsel %vm1248, %v1270, %v1285
      %vm1290 = vcmask 1042432
      %v1291 = vrot.slane %v1111, 5
      %v1292 = vrot.slane %v1112, 5
      %v1293 = vsel %vm1290, %v1291, %v1292
      %v1294 = vrot.slane %v1113, 5
      %v1295 = vsel %vm1290, %v1292, %v1294
      %v1296 = vrot.slane %v1114, 5
      %v1297 = vsel %vm1290, %v1294, %v1296
      %v1298 = vrot.slane %v1115, 5
      %v1299 = vsel %vm1290, %v1296, %v1298
      %v1300 = vrot.slane %v1116, 5
      %v1301 = vsel %vm1290, %v1298, %v1300
      %v1302 = vrot.slane %v1117, 5
      %v1303 = vsel %vm1290, %v1300, %v1302
      %v1304 = vrot.slane %v1118, 5
      %v1305 = vsel %vm1290, %v1302, %v1304
      %v1306 = vrot.slane %v1119, 5
      %v1307 = vsel %vm1290, %v1304, %v1306
      %v1308 = vrot.slane %v1120, 5
      %v1309 = vsel %vm1290, %v1306, %v1308
      %v1310 = vrot.slane %v1121, 5
      %v1311 = vsel %vm1290, %v1308, %v1310
      %v1312 = vrot.slane %v1122, 5
      %v1313 = vsel %vm1290, %v1310, %v1312
      %v1314 = vrot.slane %v1123, 5
      %v1315 = vsel %vm1290, %v1312, %v1314
      %vm1328 = vcmask 1041408
      %v1329 = vrot.slane %v1111, 6
      %v1330 = vrot.slane %v1112, 6
      %v1331 = vsel %vm1328, %v1329, %v1330
      %v1332 = vrot.slane %v1113, 6
      %v1333 = vsel %vm1328, %v1330, %v1332
      %v1334 = vrot.slane %v1114, 6
      %v1335 = vsel %vm1328, %v1332, %v1334
      %v1336 = vrot.slane %v1115, 6
      %v1337 = vsel %vm1328, %v1334, %v1336
      %v1338 = vrot.slane %v1116, 6
      %v1339 = vsel %vm1328, %v1336, %v1338
      %v1340 = vrot.slane %v1117, 6
      %v1341 = vsel %vm1328, %v1338, %v1340
      %v1342 = vrot.slane %v1118, 6
      %v1343 = vsel %vm1328, %v1340, %v1342
      %v1344 = vrot.slane %v1119, 6
      %v1345 = vsel %vm1328, %v1342, %v1344
      %v1346 = vrot.slane %v1120, 6
      %v1347 = vsel %vm1328, %v1344, %v1346
      %v1348 = vrot.slane %v1121, 6
      %v1349 = vsel %vm1328, %v1346, %v1348
      %v1350 = vrot.slane %v1122, 6
      %v1351 = vsel %vm1328, %v1348, %v1350
      %v1352 = vrot.slane %v1123, 6
      %v1353 = vsel %vm1328, %v1350, %v1352
      %vm1366 = vcmask 1040384
      %v1367 = vrot.slane %v1111, 7
      %v1368 = vrot.slane %v1112, 7
      %v1369 = vsel %vm1366, %v1367, %v1368
      %v1370 = vrot.slane %v1113, 7
      %v1371 = vsel %vm1366, %v1368, %v1370
      %v1372 = vrot.slane %v1114, 7
      %v1373 = vsel %vm1366, %v1370, %v1372
      %v1374 = vrot.slane %v1115, 7
      %v1375 = vsel %vm1366, %v1372, %v1374
      %v1376 = vrot.slane %v1116, 7
      %v1377 = vsel %vm1366, %v1374, %v1376
      %v1378 = vrot.slane %v1117, 7
      %v1379 = vsel %vm1366, %v1376, %v1378
      %v1380 = vrot.slane %v1118, 7
      %v1381 = vsel %vm1366, %v1378, %v1380
      %v1382 = vrot.slane %v1119, 7
      %v1383 = vsel %vm1366, %v1380, %v1382
      %v1384 = vrot.slane %v1120, 7
      %v1385 = vsel %vm1366, %v1382, %v1384
      %v1386 = vrot.slane %v1121, 7
      %v1387 = vsel %vm1366, %v1384, %v1386
      %v1388 = vrot.slane %v1122, 7
      %v1389 = vsel %vm1366, %v1386, %v1388
      %v1390 = vrot.slane %v1123, 7
      %v1391 = vsel %vm1366, %v1388, %v1390
      %v1405 = vrot.slane %v1122, 1
      %v1406 = vsel %vm1140, %v1162, %v1405
      %v1407 = vrot.slane %v1123, 1
      %v1408 = vsel %vm1140, %v1405, %v1407
      %v1409 = vrot.slane %v1124, 1
      %v1410 = vsel %vm1140, %v1407, %v1409
      %v1415 = vrot.slane %v1122, 2
      %v1416 = vsel %vm1176, %v1198, %v1415
      %v1417 = vrot.slane %v1123, 2
      %v1418 = vsel %vm1176, %v1415, %v1417
      %v1419 = vrot.slane %v1124, 2
      %v1420 = vsel %vm1176, %v1417, %v1419
      %v1425 = vrot.slane %v1122, 3
      %v1426 = vsel %vm1212, %v1234, %v1425
      %v1427 = vrot.slane %v1123, 3
      %v1428 = vsel %vm1212, %v1425, %v1427
      %v1429 = vrot.slane %v1124, 3
      %v1430 = vsel %vm1212, %v1427, %v1429
      %v1435 = vrot.slane %v1123, 4
      %v1436 = vsel %vm1248, %v1285, %v1435
      %v1437 = vrot.slane %v1124, 4
      %v1438 = vsel %vm1248, %v1435, %v1437
      %v1443 = vrot.slane %v1125, 4
      %v1444 = vsel %vm1248, %v1437, %v1443
      %v1448 = vrot.slane %v1125, 1
      %v1449 = vsel %vm1140, %v1409, %v1448
      %v1450 = vrot.slane %v1126, 1
      %v1451 = vsel %vm1140, %v1448, %v1450
      %v1452 = vrot.slane %v1125, 2
      %v1453 = vsel %vm1176, %v1419, %v1452
      %v1454 = vrot.slane %v1126, 2
      %v1455 = vsel %vm1176, %v1452, %v1454
      %v1456 = vrot.slane %v1125, 3
      %v1457 = vsel %vm1212, %v1429, %v1456
      %v1458 = vrot.slane %v1126, 3
      %v1459 = vsel %vm1212, %v1456, %v1458
      %v1461 = vrot.slane %v1127, 3
      %v1462 = vsel %vm1212, %v1458, %v1461
      %v1463 = vrot.slane %v1126, 4
      %v1464 = vsel %vm1248, %v1443, %v1463
      %v1465 = vrot.slane %v1127, 4
      %v1466 = vsel %vm1248, %v1463, %v1465
      %v1467 = vrot.slane %v1124, 5
      %v1468 = vsel %vm1290, %v1314, %v1467
      %v1469 = vrot.slane %v1125, 5
      %v1470 = vsel %vm1290, %v1467, %v1469
      %v1471 = vrot.slane %v1126, 5
      %v1472 = vsel %vm1290, %v1469, %v1471
      %v1473 = vrot.slane %v1127, 5
      %v1474 = vsel %vm1290, %v1471, %v1473
      %v1475 = vrot.slane %v1124, 6
      %v1476 = vsel %vm1328, %v1352, %v1475
      %v1477 = vrot.slane %v1125, 6
      %v1478 = vsel %vm1328, %v1475, %v1477
      %v1479 = vrot.slane %v1126, 6
      %v1480 = vsel %vm1328, %v1477, %v1479
      %v1481 = vrot.slane %v1127, 6
      %v1482 = vsel %vm1328, %v1479, %v1481
      %v1483 = vrot.slane %v1124, 7
      %v1484 = vsel %vm1366, %v1390, %v1483
      %v1485 = vrot.slane %v1125, 7
      %v1486 = vsel %vm1366, %v1483, %v1485
      %v1487 = vrot.slane %v1126, 7
      %v1488 = vsel %vm1366, %v1485, %v1487
      %v1489 = vrot.slane %v1127, 7
      %v1490 = vsel %vm1366, %v1487, %v1489
      %v1491 = vrot.slane %v1151, 5
      %v1492 = vrot.slane %v1153, 5
      %v1493 = vsel %vm1290, %v1491, %v1492
      %v1494 = vrot.slane %v1187, 5
      %v1495 = vrot.slane %v1189, 5
      %v1496 = vsel %vm1290, %v1494, %v1495
      %v1497 = vrot.slane %v1222, 5
      %v1498 = vrot.slane %v1225, 5
      %v1499 = vsel %vm1290, %v1497, %v1498
      %v1500 = vrot.slane %v1224, 5
      %v1501 = vrot.slane %v1227, 5
      %v1502 = vsel %vm1290, %v1500, %v1501
      %v1503 = vrot.slane %v1260, 5
      %v1504 = vrot.slane %v1263, 5
      %v1505 = vsel %vm1290, %v1503, %v1504
      %v1506 = vrot.slane %v1300, 5
      %v1507 = vrot.slane %v1303, 5
      %v1508 = vsel %vm1290, %v1506, %v1507
      %v1509 = vrot.slane %v1338, 5
      %v1510 = vrot.slane %v1341, 5
      %v1511 = vsel %vm1290, %v1509, %v1510
      %v1512 = vrot.slane %v1376, 5
      %v1513 = vrot.slane %v1379, 5
      %v1514 = vsel %vm1290, %v1512, %v1513
      %v1515 = vrot.slane %v1155, 5
      %v1516 = vsel %vm1290, %v1492, %v1515
      %v1517 = vrot.slane %v1191, 5
      %v1518 = vsel %vm1290, %v1495, %v1517
      %v1519 = vsel %vm1290, %v1498, %v1501
      %v1520 = vrot.slane %v1229, 5
      %v1521 = vsel %vm1290, %v1501, %v1520
      %v1522 = vrot.slane %v1265, 5
      %v1523 = vsel %vm1290, %v1504, %v1522
      %v1524 = vrot.slane %v1305, 5
      %v1525 = vsel %vm1290, %v1507, %v1524
      %v1526 = vrot.slane %v1343, 5
      %v1527 = vsel %vm1290, %v1510, %v1526
      %v1528 = vrot.slane %v1381, 5
      %v1529 = vsel %vm1290, %v1513, %v1528
      %v1530 = vrot.slane %v1157, 5
      %v1531 = vsel %vm1290, %v1515, %v1530
      %v1532 = vrot.slane %v1193, 5
      %v1533 = vsel %vm1290, %v1517, %v1532
      %v1534 = vrot.slane %v1231, 5
      %v1535 = vsel %vm1290, %v1520, %v1534
      %v1536 = vrot.slane %v1267, 5
      %v1537 = vsel %vm1290, %v1522, %v1536
      %v1538 = vrot.slane %v1307, 5
      %v1539 = vsel %vm1290, %v1524, %v1538
      %v1540 = vrot.slane %v1345, 5
      %v1541 = vsel %vm1290, %v1526, %v1540
      %v1542 = vrot.slane %v1383, 5
      %v1543 = vsel %vm1290, %v1528, %v1542
      %v1544 = vrot.slane %v1159, 5
      %v1545 = vsel %vm1290, %v1530, %v1544
      %v1546 = vrot.slane %v1195, 5
      %v1547 = vsel %vm1290, %v1532, %v1546
      %v1548 = vrot.slane %v1233, 5
      %v1549 = vsel %vm1290, %v1534, %v1548
      %v1550 = vrot.slane %v1269, 5
      %v1551 = vsel %vm1290, %v1536, %v1550
      %v1552 = vrot.slane %v1309, 5
      %v1553 = vsel %vm1290, %v1538, %v1552
      %v1554 = vrot.slane %v1347, 5
      %v1555 = vsel %vm1290, %v1540, %v1554
      %v1556 = vrot.slane %v1385, 5
      %v1557 = vsel %vm1290, %v1542, %v1556
      %v1558 = vrot.slane %v1161, 5
      %v1559 = vsel %vm1290, %v1544, %v1558
      %v1560 = vrot.slane %v1197, 5
      %v1561 = vsel %vm1290, %v1546, %v1560
      %v1562 = vrot.slane %v1235, 5
      %v1563 = vsel %vm1290, %v1548, %v1562
      %v1564 = vrot.slane %v1271, 5
      %v1565 = vsel %vm1290, %v1550, %v1564
      %v1566 = vrot.slane %v1311, 5
      %v1567 = vsel %vm1290, %v1552, %v1566
      %v1568 = vrot.slane %v1349, 5
      %v1569 = vsel %vm1290, %v1554, %v1568
      %v1570 = vrot.slane %v1387, 5
      %v1571 = vsel %vm1290, %v1556, %v1570
      %v1572 = vrot.slane %v1163, 5
      %v1573 = vsel %vm1290, %v1558, %v1572
      %v1574 = vrot.slane %v1199, 5
      %v1575 = vsel %vm1290, %v1560, %v1574
      %v1576 = vrot.slane %v1426, 5
      %v1577 = vsel %vm1290, %v1562, %v1576
      %v1578 = vrot.slane %v1286, 5
      %v1579 = vsel %vm1290, %v1564, %v1578
      %v1580 = vrot.slane %v1313, 5
      %v1581 = vsel %vm1290, %v1566, %v1580
      %v1582 = vrot.slane %v1351, 5
      %v1583 = vsel %vm1290, %v1568, %v1582
      %v1584 = vrot.slane %v1389, 5
      %v1585 = vsel %vm1290, %v1570, %v1584
      %v1586 = vrot.slane %v1406, 5
      %v1587 = vsel %vm1290, %v1572, %v1586
      %v1588 = vrot.slane %v1416, 5
      %v1589 = vsel %vm1290, %v1574, %v1588
      %v1590 = vrot.slane %v1428, 5
      %v1591 = vsel %vm1290, %v1576, %v1590
      %v1592 = vrot.slane %v1436, 5
      %v1593 = vsel %vm1290, %v1578, %v1592
      %v1594 = vrot.slane %v1315, 5
      %v1595 = vsel %vm1290, %v1580, %v1594
      %v1596 = vrot.slane %v1353, 5
      %v1597 = vsel %vm1290, %v1582, %v1596
      %v1598 = vrot.slane %v1391, 5
      %v1599 = vsel %vm1290, %v1584, %v1598
      %v1600 = vrot.slane %v1408, 5
      %v1601 = vsel %vm1290, %v1586, %v1600
      %v1602 = vrot.slane %v1418, 5
      %v1603 = vsel %vm1290, %v1588, %v1602
      %v1604 = vrot.slane %v1430, 5
      %v1605 = vsel %vm1290, %v1590, %v1604
      %v1606 = vrot.slane %v1438, 5
      %v1607 = vsel %vm1290, %v1592, %v1606
      %v1608 = vrot.slane %v1468, 5
      %v1609 = vsel %vm1290, %v1594, %v1608
      %v1610 = vrot.slane %v1476, 5
      %v1611 = vsel %vm1290, %v1596, %v1610
      %v1612 = vrot.slane %v1484, 5
      %v1613 = vsel %vm1290, %v1598, %v1612
      %v1614 = vrot.slane %v1410, 5
      %v1615 = vsel %vm1290, %v1600, %v1614
      %v1616 = vrot.slane %v1420, 5
      %v1617 = vsel %vm1290, %v1602, %v1616
      %v1618 = vrot.slane %v1457, 5
      %v1619 = vsel %vm1290, %v1604, %v1618
      %v1620 = vrot.slane %v1444, 5
      %v1621 = vsel %vm1290, %v1606, %v1620
      %v1622 = vrot.slane %v1470, 5
      %v1623 = vsel %vm1290, %v1608, %v1622
      %v1624 = vrot.slane %v1478, 5
      %v1625 = vsel %vm1290, %v1610, %v1624
      %v1626 = vrot.slane %v1486, 5
      %v1627 = vsel %vm1290, %v1612, %v1626
      %v1628 = vrot.slane %v1449, 5
      %v1629 = vsel %vm1290, %v1614, %v1628
      %v1630 = vrot.slane %v1453, 5
      %v1631 = vsel %vm1290, %v1616, %v1630
      %v1632 = vrot.slane %v1459, 5
      %v1633 = vsel %vm1290, %v1618, %v1632
      %v1634 = vrot.slane %v1464, 5
      %v1635 = vsel %vm1290, %v1620, %v1634
      %v1636 = vrot.slane %v1472, 5
      %v1637 = vsel %vm1290, %v1622, %v1636
      %v1638 = vrot.slane %v1480, 5
      %v1639 = vsel %vm1290, %v1624, %v1638
      %v1640 = vrot.slane %v1488, 5
      %v1641 = vsel %vm1290, %v1626, %v1640
      %v1642 = vrot.slane %v1451, 5
      %v1643 = vsel %vm1290, %v1628, %v1642
      %v1644 = vrot.slane %v1455, 5
      %v1645 = vsel %vm1290, %v1630, %v1644
      %v1646 = vrot.slane %v1462, 5
      %v1647 = vsel %vm1290, %v1632, %v1646
      %v1648 = vrot.slane %v1466, 5
      %v1649 = vsel %vm1290, %v1634, %v1648
      %v1650 = vrot.slane %v1474, 5
      %v1651 = vsel %vm1290, %v1636, %v1650
      %v1652 = vrot.slane %v1482, 5
      %v1653 = vsel %vm1290, %v1638, %v1652
      %v1654 = vrot.slane %v1490, 5
      %v1655 = vsel %vm1290, %v1640, %v1654
      %v1656 = vrot.slane %v1450, 5
      %v1657 = vsel %vm1290, %v1642, %v1656
      %v1658 = vrot.slane %v1454, 5
      %v1659 = vsel %vm1290, %v1644, %v1658
      %v1660 = vrot.slane %v1458, 5
      %v1661 = vsel %vm1290, %v1632, %v1660
      %v1662 = vrot.slane %v1461, 5
      %v1663 = vsel %vm1290, %v1646, %v1662
      %v1664 = vrot.slane %v1465, 5
      %v1665 = vsel %vm1290, %v1648, %v1664
      %v1666 = vrot.slane %v1473, 5
      %v1667 = vsel %vm1290, %v1650, %v1666
      %v1668 = vrot.slane %v1481, 5
      %v1669 = vsel %vm1290, %v1652, %v1668
      %v1670 = vrot.slane %v1489, 5
      %v1671 = vsel %vm1290, %v1654, %v1670
      %v1762 = vld [vmem:[%s3] sm:$0xff]
      %v1763 = vld [vmem:[%s3 + $0x8] sm:$0xff]
      %v1764 = vld [vmem:[%s3 + $0x10] sm:$0xff]
      %v1765 = vld [vmem:[%s3 + $0x18] sm:$0xff]
      %v1766 = vld [vmem:[%s3 + $0x20] sm:$0xff]
      %v1767 = vld [vmem:[%s3 + $0x28] sm:$0xff]
      %v1768 = vld [vmem:[%s3 + $0x30] sm:$0xff]
      %v1769 = vld [vmem:[%s3 + $0x38] sm:$0xff]
      %v1770 = vld [vmem:[%s3 + $0x40] sm:$0xff]
      %v1771 = vld [vmem:[%s3 + $0x48] sm:$0xff]
      %v1772 = vld [vmem:[%s3 + $0x50] sm:$0xff]
      %v1773 = vld [vmem:[%s3 + $0x58] sm:$0xff]
      %v1774 = vld [vmem:[%s3 + $0x60] sm:$0xff]
      %v1775 = vld [vmem:[%s3 + $0x68] sm:$0xff]
      %v1776 = vld [vmem:[%s3 + $0x70] sm:$0xff]
      %v1777 = vld [vmem:[%s3 + $0x78] sm:$0xff]
      %v1778 = vld [vmem:[%s3 + $0x80] sm:$0xff]
      %v1779 = vld [vmem:[%s3 + $0x88] sm:$0xff]
      %v1780 = vld [vmem:[%s3 + $0x90] sm:$0xff]
      %v1781 = vld [vmem:[%s3 + $0x98] sm:$0xff]
      %v1782 = vld [vmem:[%s3 + $0xa0] sm:$0xff]
      %v1783 = vld [vmem:[%s3 + $0xa8] sm:$0xff]
      %v1784 = vld [vmem:[%s3 + $0xb0] sm:$0xff]
      %v1785 = vld [vmem:[%s3 + $0xb8] sm:$0xff]
      %v1786 = vld [vmem:[%s3 + $0xc0] sm:$0xff]
      %v1787 = vld [vmem:[%s3 + $0xc8] sm:$0xff]
      %v1788 = vld [vmem:[%s3 + $0xd0] sm:$0xff]
      %v1789 = vld [vmem:[%s3 + $0xd8] sm:$0xff]
      %v1790 = vld [vmem:[%s3 + $0xe0] sm:$0xff]
      %v1791 = vld [vmem:[%s3 + $0xe8] sm:$0xff]
      %v1792 = vld [vmem:[%s3 + $0xf0] sm:$0xff]
      %v1793 = vld [vmem:[%s3 + $0xf8] sm:$0xff]
      %v1794 = vld [vmem:[%s3 + $0x100] sm:$0xff]
      %v1795 = vld [vmem:[%s3 + $0x108] sm:$0xff]
      %v1796 = vld [vmem:[%s3 + $0x110] sm:$0xff]
      %v1797 = vld [vmem:[%s3 + $0x118] sm:$0xff]
      %v1798 = vld [vmem:[%s3 + $0x120] sm:$0xff]
      %v1799 = vld [vmem:[%s3 + $0x128] sm:$0xff]
      %v1800 = vld [vmem:[%s3 + $0x130] sm:$0xff]
      %v1801 = vld [vmem:[%s3 + $0x138] sm:$0xff]
      %v1802 = vld [vmem:[%s3 + $0x140] sm:$0xff]
      %v1803 = vld [vmem:[%s3 + $0x148] sm:$0xff]
      %v1804 = vld [vmem:[%s3 + $0x150] sm:$0xff]
      %v1805 = vld [vmem:[%s3 + $0x158] sm:$0xff]
      %v1806 = vld [vmem:[%s3 + $0x160] sm:$0xff]
      %v1807 = vld [vmem:[%s3 + $0x168] sm:$0xff]
      %v1808 = vld [vmem:[%s3 + $0x170] sm:$0xff]
      %v1809 = vld [vmem:[%s3 + $0x178] sm:$0xff]
      %v1810 = vld [vmem:[%s3 + $0x180] sm:$0xff]
      %v1811 = vld [vmem:[%s3 + $0x188] sm:$0xff]
      %v1812 = vld [vmem:[%s3 + $0x190] sm:$0xff]
      %v1813 = vld [vmem:[%s3 + $0x198] sm:$0xff]
      %v1814 = vld [vmem:[%s3 + $0x1a0] sm:$0xff]
      %v1815 = vld [vmem:[%s3 + $0x1a8] sm:$0xff]
      %v1816 = vld [vmem:[%s3 + $0x1b0] sm:$0xff]
      %v1817 = vld [vmem:[%s3 + $0x1b8] sm:$0xff]
      %v1818 = vld [vmem:[%s3 + $0x1c0] sm:$0xff]
      %v1819 = vld [vmem:[%s3 + $0x1c8] sm:$0xff]
      %v1820 = vld [vmem:[%s3 + $0x1d0] sm:$0xff]
      %v1821 = vld [vmem:[%s3 + $0x1d8] sm:$0xff]
      %v1822 = vld [vmem:[%s3 + $0x1e0] sm:$0xff]
      %v1823 = vld [vmem:[%s3 + $0x1e8] sm:$0xff]
      %v1824 = vld [vmem:[%s3 + $0x1f0] sm:$0xff]
      %v1825 = vld [vmem:[%s3 + $0x1f8] sm:$0xff]
      %v1826 = vld [vmem:[%s3 + $0x200] sm:$0xff]
      %v1827 = vld [vmem:[%s3 + $0x208] sm:$0xff]
      %v1828 = vld [vmem:[%s3 + $0x210] sm:$0xff]
      %v1829 = vld [vmem:[%s3 + $0x218] sm:$0xff]
      %v1830 = vld [vmem:[%s3 + $0x220] sm:$0xff]
      %v1831 = vld [vmem:[%s3 + $0x228] sm:$0xff]
      %v1832 = vld [vmem:[%s3 + $0x230] sm:$0xff]
      %v1833 = vld [vmem:[%s3 + $0x238] sm:$0xff]
      %v1834 = vld [vmem:[%s3 + $0x240] sm:$0xff]
      %v1835 = vld [vmem:[%s3 + $0x248] sm:$0xff]
      %v1836 = vld [vmem:[%s3 + $0x250] sm:$0xff]
      %v1837 = vld [vmem:[%s3 + $0x258] sm:$0xff]
      %v1838 = vld [vmem:[%s3 + $0x260] sm:$0xff]
      %v1839 = vld [vmem:[%s3 + $0x268] sm:$0xff]
      %v1840 = vld [vmem:[%s3 + $0x270] sm:$0xff]
      %v1841 = vld [vmem:[%s3 + $0x278] sm:$0xff]
      %v1842 = vld [vmem:[%s3 + $0x280] sm:$0xff]
      %v1843 = vld [vmem:[%s3 + $0x288] sm:$0xff]
      %v1844 = vld [vmem:[%s3 + $0x290] sm:$0xff]
      %v1845 = vld [vmem:[%s3 + $0x298] sm:$0xff]
      %v1846 = vld [vmem:[%s3 + $0x2a0] sm:$0xff]
      %v1847 = vld [vmem:[%s3 + $0x2a8] sm:$0xff]
      %v1848 = vld [vmem:[%s3 + $0x2b0] sm:$0xff]
      %v1849 = vld [vmem:[%s3 + $0x2b8] sm:$0xff]
      %v1850 = vld [vmem:[%s3 + $0x2c0] sm:$0xff]
      %v1851 = vld [vmem:[%s3 + $0x2c8] sm:$0xff]
      %v1852 = vld [vmem:[%s3 + $0x2d0] sm:$0xff]
      %v1853 = vld [vmem:[%s3 + $0x2d8] sm:$0xff]
      %v1854 = vld [vmem:[%s3 + $0x2e0] sm:$0xff]
      %v1855 = vld [vmem:[%s3 + $0x2e8] sm:$0xff]
      %v1856 = vld [vmem:[%s3 + $0x2f0] sm:$0xff]
      %v1857 = vld [vmem:[%s3 + $0x2f8] sm:$0xff]
      %v1858 = vld [vmem:[%s3 + $0x300] sm:$0xff]
      %v1859 = vld [vmem:[%s3 + $0x308] sm:$0xff]
      %v1860 = vld [vmem:[%s3 + $0x310] sm:$0xff]
      %v1861 = vld [vmem:[%s3 + $0x318] sm:$0xff]
      %v1862 = vld [vmem:[%s3 + $0x320] sm:$0xff]
      %v1863 = vld [vmem:[%s3 + $0x328] sm:$0xff]
      %v1864 = vld [vmem:[%s3 + $0x330] sm:$0xff]
      %v1865 = vld [vmem:[%s3 + $0x338] sm:$0xff]
      %v1866 = vld [vmem:[%s3 + $0x340] sm:$0xff]
      %v1867 = vld [vmem:[%s3 + $0x348] sm:$0xff]
      %v1868 = vld [vmem:[%s3 + $0x350] sm:$0xff]
      %v1869 = vld [vmem:[%s3 + $0x358] sm:$0xff]
      %v1870 = vld [vmem:[%s3 + $0x360] sm:$0xff]
      %v1871 = vld [vmem:[%s3 + $0x368] sm:$0xff]
      %v1872 = vld [vmem:[%s3 + $0x370] sm:$0xff]
      %v1873 = vld [vmem:[%s3 + $0x378] sm:$0xff]
      %v1874 = vld [vmem:[%s3 + $0x380] sm:$0xff]
      %v1875 = vld [vmem:[%s3 + $0x388] sm:$0xff]
      %v1876 = vld [vmem:[%s3 + $0x390] sm:$0xff]
      %v1877 = vld [vmem:[%s3 + $0x398] sm:$0xff]
      %v1878 = vld [vmem:[%s3 + $0x3a0] sm:$0xff]
      %v1879 = vld [vmem:[%s3 + $0x3a8] sm:$0xff]
      %v1880 = vld [vmem:[%s3 + $0x3b0] sm:$0xff]
      %v1881 = vld [vmem:[%s3 + $0x3b8] sm:$0xff]
      %v1882 = vld [vmem:[%s3 + $0x3c0] sm:$0xff]
      %v1883 = vld [vmem:[%s3 + $0x3c8] sm:$0xff]
      %v1884 = vld [vmem:[%s3 + $0x3d0] sm:$0xff]
      %v1885 = vld [vmem:[%s3 + $0x3d8] sm:$0xff]
      %v1886 = vld [vmem:[%s3 + $0x3e0] sm:$0xff]
      %v1887 = vld [vmem:[%s3 + $0x3e8] sm:$0xff]
      %v1888 = vld [vmem:[%s3 + $0x3f0] sm:$0xff]
      %v1889 = vld [vmem:[%s3 + $0x3f8] sm:$0xff]
      %v1890 = vld [vmem:[%s3 + $0x400] sm:$0xff]
      %v1891 = vld [vmem:[%s3 + $0x408] sm:$0xff]
      %v1892 = vld [vmem:[%s3 + $0x410] sm:$0xff]
      %v1893 = vld [vmem:[%s3 + $0x418] sm:$0xff]
      %v1894 = vld [vmem:[%s3 + $0x420] sm:$0xff]
      %v1895 = vld [vmem:[%s3 + $0x428] sm:$0xff]
      %v1896 = vld [vmem:[%s3 + $0x430] sm:$0xff]
      %v1897 = vld [vmem:[%s3 + $0x438] sm:$0xff]
      %v1898 = vld [vmem:[%s3 + $0x440] sm:$0xff]
      %v1899 = vld [vmem:[%s3 + $0x448] sm:$0xff]
      %v1900 = vld [vmem:[%s3 + $0x450] sm:$0xff]
      %v1901 = vld [vmem:[%s3 + $0x458] sm:$0xff]
      %v1902 = vld [vmem:[%s3 + $0x460] sm:$0xff]
      %v1903 = vld [vmem:[%s3 + $0x468] sm:$0xff]
      %v1904 = vld [vmem:[%s3 + $0x470] sm:$0xff]
      %v1905 = vld [vmem:[%s3 + $0x478] sm:$0xff]
      %v1906 = vld [vmem:[%s3 + $0x480] sm:$0xff]
      %v1907 = vld [vmem:[%s3 + $0x488] sm:$0xff]
      %v1908 = vld [vmem:[%s3 + $0x490] sm:$0xff]
      %v1909 = vld [vmem:[%s3 + $0x498] sm:$0xff]
      %v1910 = vld [vmem:[%s3 + $0x4a0] sm:$0xff]
      %v1911 = vld [vmem:[%s3 + $0x4a8] sm:$0xff]
      %v1912 = vld [vmem:[%s3 + $0x4b0] sm:$0xff]
      %v1913 = vld [vmem:[%s3 + $0x4b8] sm:$0xff]
      %v1914 = vld [vmem:[%s3 + $0x4c0] sm:$0xff]
      %v1915 = vld [vmem:[%s3 + $0x4c8] sm:$0xff]
      %v1916 = vld [vmem:[%s3 + $0x4d0] sm:$0xff]
      %v1917 = vld [vmem:[%s3 + $0x4d8] sm:$0xff]
      %v1918 = vld [vmem:[%s3 + $0x4e0] sm:$0xff]
      %v1919 = vld [vmem:[%s3 + $0x4e8] sm:$0xff]
      %v1920 = vld [vmem:[%s3 + $0x4f0] sm:$0xff]
      %v1921 = vld [vmem:[%s3 + $0x4f8] sm:$0xff]
      %v1922 = vld [vmem:[%s3 + $0x500] sm:$0xff]
      %v1923 = vld [vmem:[%s3 + $0x508] sm:$0xff]
      %v1924 = vld [vmem:[%s3 + $0x510] sm:$0xff]
      %v1925 = vld [vmem:[%s3 + $0x518] sm:$0xff]
      %v1926 = vld [vmem:[%s3 + $0x520] sm:$0xff]
      %v1927 = vld [vmem:[%s3 + $0x528] sm:$0xff]
      %v1928 = vld [vmem:[%s3 + $0x530] sm:$0xff]
      %v1929 = vld [vmem:[%s3 + $0x538] sm:$0xff]
      %v1930 = vld [vmem:[%s3 + $0x540] sm:$0xff]
      %v1931 = vld [vmem:[%s3 + $0x548] sm:$0xff]
      %v1932 = vld [vmem:[%s3 + $0x550] sm:$0xff]
      %v1933 = vld [vmem:[%s3 + $0x558] sm:$0xff]
      %v1934 = vld [vmem:[%s3 + $0x560] sm:$0xff]
      %v1935 = vld [vmem:[%s3 + $0x568] sm:$0xff]
      %v1936 = vld [vmem:[%s3 + $0x570] sm:$0xff]
      %v1937 = vld [vmem:[%s3 + $0x578] sm:$0xff]
      %v1938 = vld [vmem:[%s3 + $0x580] sm:$0xff]
      %v1939 = vld [vmem:[%s3 + $0x588] sm:$0xff]
      %v1940 = vld [vmem:[%s3 + $0x590] sm:$0xff]
      %v1941 = vld [vmem:[%s3 + $0x598] sm:$0xff]
      %v1942 = vld [vmem:[%s3 + $0x5a0] sm:$0xff]
      %v1943 = vld [vmem:[%s3 + $0x5a8] sm:$0xff]
      %v1944 = vld [vmem:[%s3 + $0x5b0] sm:$0xff]
      %v1945 = vld [vmem:[%s3 + $0x5b8] sm:$0xff]
      %v1946 = vld [vmem:[%s3 + $0x5c0] sm:$0xff]
      %v1947 = vld [vmem:[%s3 + $0x5c8] sm:$0xff]
      %v1948 = vld [vmem:[%s3 + $0x5d0] sm:$0xff]
      %v1949 = vld [vmem:[%s3 + $0x5d8] sm:$0xff]
      %v1950 = vld [vmem:[%s3 + $0x5e0] sm:$0xff]
      %v1951 = vld [vmem:[%s3 + $0x5e8] sm:$0xff]
      %v1952 = vld [vmem:[%s3 + $0x5f0] sm:$0xff]
      %v1953 = vld [vmem:[%s3 + $0x5f8] sm:$0xff]
      %v1954 = vld [vmem:[%s3 + $0x600] sm:$0xff]
      %v1955 = vld [vmem:[%s3 + $0x608] sm:$0xff]
      %v1956 = vld [vmem:[%s3 + $0x610] sm:$0xff]
      %v1957 = vld [vmem:[%s3 + $0x618] sm:$0xff]
      %v1958 = vld [vmem:[%s3 + $0x620] sm:$0xff]
      %v1959 = vld [vmem:[%s3 + $0x628] sm:$0xff]
      %v1960 = vld [vmem:[%s3 + $0x630] sm:$0xff]
      %v1961 = vld [vmem:[%s3 + $0x638] sm:$0xff]
      %v1962 = vld [vmem:[%s3 + $0x640] sm:$0xff]
      %v1963 = vld [vmem:[%s3 + $0x648] sm:$0xff]
      %v1964 = vld [vmem:[%s3 + $0x650] sm:$0xff]
      %v1965 = vld [vmem:[%s3 + $0x658] sm:$0xff]
      %v1966 = vld [vmem:[%s3 + $0x660] sm:$0xff]
      %v1967 = vld [vmem:[%s3 + $0x668] sm:$0xff]
      %v1968 = vld [vmem:[%s3 + $0x670] sm:$0xff]
      %v1969 = vld [vmem:[%s3 + $0x678] sm:$0xff]
      %v1970 = vld [vmem:[%s3 + $0x680] sm:$0xff]
      %v1971 = vld [vmem:[%s3 + $0x688] sm:$0xff]
      %v1972 = vld [vmem:[%s3 + $0x690] sm:$0xff]
      %v1973 = vld [vmem:[%s3 + $0x698] sm:$0xff]
      %v1974 = vld [vmem:[%s3 + $0x6a0] sm:$0xff]
      %v1975 = vld [vmem:[%s3 + $0x6a8] sm:$0xff]
      %v1976 = vld [vmem:[%s3 + $0x6b0] sm:$0xff]
      %v1977 = vld [vmem:[%s3 + $0x6b8] sm:$0xff]
      %v1978 = vld [vmem:[%s3 + $0x6c0] sm:$0xff]
      %v1979 = vld [vmem:[%s3 + $0x6c8] sm:$0xff]
      %v1980 = vld [vmem:[%s3 + $0x6d0] sm:$0xff]
      %v1981 = vld [vmem:[%s3 + $0x6d8] sm:$0xff]
      %v1982 = vld [vmem:[%s3 + $0x6e0] sm:$0xff]
      %v1983 = vld [vmem:[%s3 + $0x6e8] sm:$0xff]
      %v1984 = vld [vmem:[%s3 + $0x6f0] sm:$0xff]
      %v1985 = vld [vmem:[%s3 + $0x6f8] sm:$0xff]
      %v1986 = vld [vmem:[%s3 + $0x700] sm:$0xff]
      %v1987 = vld [vmem:[%s3 + $0x708] sm:$0xff]
      %v1988 = vld [vmem:[%s3 + $0x710] sm:$0xff]
      %v1989 = vld [vmem:[%s3 + $0x718] sm:$0xff]
      %v1990 = vld [vmem:[%s3 + $0x720] sm:$0xff]
      %v1991 = vld [vmem:[%s3 + $0x728] sm:$0xff]
      %v1992 = vld [vmem:[%s3 + $0x730] sm:$0xff]
      %v1993 = vld [vmem:[%s3 + $0x738] sm:$0xff]
      %v1994 = vld [vmem:[%s3 + $0x740] sm:$0xff]
      %v1995 = vld [vmem:[%s3 + $0x748] sm:$0xff]
      %v1996 = vld [vmem:[%s3 + $0x750] sm:$0xff]
      %v1997 = vld [vmem:[%s3 + $0x758] sm:$0xff]
      %v1998 = vld [vmem:[%s3 + $0x760] sm:$0xff]
      %v1999 = vld [vmem:[%s3 + $0x768] sm:$0xff]
      %v2000 = vld [vmem:[%s3 + $0x770] sm:$0xff]
      %v2001 = vld [vmem:[%s3 + $0x778] sm:$0xff]
      %v2002 = vld [vmem:[%s3 + $0x780] sm:$0xff]
      %v2003 = vld [vmem:[%s3 + $0x788] sm:$0xff]
      %v2004 = vld [vmem:[%s3 + $0x790] sm:$0xff]
      %v2005 = vld [vmem:[%s3 + $0x798] sm:$0xff]
      %v2006 = vld [vmem:[%s3 + $0x7a0] sm:$0xff]
      %v2007 = vld [vmem:[%s3 + $0x7a8] sm:$0xff]
      %v2008 = vld [vmem:[%s3 + $0x7b0] sm:$0xff]
      %v2009 = vld [vmem:[%s3 + $0x7b8] sm:$0xff]
      %v2010 = vld [vmem:[%s3 + $0x7c0] sm:$0xff]
      %v2011 = vld [vmem:[%s3 + $0x7c8] sm:$0xff]
      %v2012 = vld [vmem:[%s3 + $0x7d0] sm:$0xff]
      %v2013 = vld [vmem:[%s3 + $0x7d8] sm:$0xff]
      %v2014 = vld [vmem:[%s3 + $0x7e0] sm:$0xff]
      %v2015 = vld [vmem:[%s3 + $0x7e8] sm:$0xff]
      %v2016 = vld [vmem:[%s3 + $0x7f0] sm:$0xff]
      %v2017 = vld [vmem:[%s3 + $0x7f8] sm:$0xff]
      %v2018 = vld [vmem:[%s3 + $0x800] sm:$0xff]
      %v2019 = vld [vmem:[%s3 + $0x808] sm:$0xff]
      %v2020 = vld [vmem:[%s3 + $0x810] sm:$0xff]
      %v2021 = vld [vmem:[%s3 + $0x818] sm:$0xff]
      %v2022 = vld [vmem:[%s3 + $0x820] sm:$0xff]
      %v2023 = vld [vmem:[%s3 + $0x828] sm:$0xff]
      %v2024 = vld [vmem:[%s3 + $0x830] sm:$0xff]
      %v2025 = vld [vmem:[%s3 + $0x838] sm:$0xff]
      %v2026 = vld [vmem:[%s3 + $0x840] sm:$0xff]
      %v2027 = vld [vmem:[%s3 + $0x848] sm:$0xff]
      %v2028 = vld [vmem:[%s3 + $0x850] sm:$0xff]
      %v2029 = vld [vmem:[%s3 + $0x858] sm:$0xff]
      %v2030 = vld [vmem:[%s3 + $0x860] sm:$0xff]
      %v2031 = vld [vmem:[%s3 + $0x868] sm:$0xff]
      %v2032 = vld [vmem:[%s3 + $0x870] sm:$0xff]
      %v2033 = vld [vmem:[%s3 + $0x878] sm:$0xff]
      %v2034 = vld [vmem:[%s3 + $0x880] sm:$0xff]
      %v2035 = vld [vmem:[%s3 + $0x888] sm:$0xff]
      %v2036 = vld [vmem:[%s3 + $0x890] sm:$0xff]
      %v2037 = vld [vmem:[%s3 + $0x898] sm:$0xff]
      %v2038 = vld [vmem:[%s3 + $0x8a0] sm:$0xff]
      %v2039 = vld [vmem:[%s3 + $0x8a8] sm:$0xff]
      %v2040 = vld [vmem:[%s3 + $0x8b0] sm:$0xff]
      %v2041 = vld [vmem:[%s3 + $0x8b8] sm:$0xff]
      %v2042 = vld [vmem:[%s3 + $0x8c0] sm:$0xff]
      %v2043 = vld [vmem:[%s3 + $0x8c8] sm:$0xff]
      %v2044 = vld [vmem:[%s3 + $0x8d0] sm:$0xff]
      %v2045 = vld [vmem:[%s3 + $0x8d8] sm:$0xff]
      %v2046 = vld [vmem:[%s3 + $0x8e0] sm:$0xff]
      %v2047 = vld [vmem:[%s3 + $0x8e8] sm:$0xff]
      %v2048 = vld [vmem:[%s3 + $0x8f0] sm:$0xff]
      %v2049 = vld [vmem:[%s3 + $0x8f8] sm:$0xff]
      %v2050 = vld [vmem:[%s3 + $0x900] sm:$0xff]
      %v2051 = vld [vmem:[%s3 + $0x908] sm:$0xff]
      %v2052 = vld [vmem:[%s3 + $0x910] sm:$0xff]
      %v2053 = vld [vmem:[%s3 + $0x918] sm:$0xff]
      %v2054 = vld [vmem:[%s3 + $0x920] sm:$0xff]
      %v2055 = vld [vmem:[%s3 + $0x928] sm:$0xff]
      %v2056 = vld [vmem:[%s3 + $0x930] sm:$0xff]
      %v2057 = vld [vmem:[%s3 + $0x938] sm:$0xff]
      %v2058 = vld [vmem:[%s3 + $0x940] sm:$0xff]
      %v2059 = vld [vmem:[%s3 + $0x948] sm:$0xff]
      %v2060 = vld [vmem:[%s3 + $0x950] sm:$0xff]
      %v2061 = vld [vmem:[%s3 + $0x958] sm:$0xff]
      %v2062 = vld [vmem:[%s3 + $0x960] sm:$0xff]
      %v2063 = vld [vmem:[%s3 + $0x968] sm:$0xff]
      %v2064 = vld [vmem:[%s3 + $0x970] sm:$0xff]
      %v2065 = vld [vmem:[%s3 + $0x978] sm:$0xff]
      %v2066 = vld [vmem:[%s3 + $0x980] sm:$0xff]
      %v2067 = vld [vmem:[%s3 + $0x988] sm:$0xff]
      %v2068 = vld [vmem:[%s3 + $0x990] sm:$0xff]
      %v2069 = vld [vmem:[%s3 + $0x998] sm:$0xff]
      %v2070 = vld [vmem:[%s3 + $0x9a0] sm:$0xff]
      %v2071 = vld [vmem:[%s3 + $0x9a8] sm:$0xff]
      %v2072 = vld [vmem:[%s3 + $0x9b0] sm:$0xff]
      %v2073 = vld [vmem:[%s3 + $0x9b8] sm:$0xff]
      %v2074 = vld [vmem:[%s3 + $0x9c0] sm:$0xff]
      %v2075 = vld [vmem:[%s3 + $0x9c8] sm:$0xff]
      %v2076 = vld [vmem:[%s3 + $0x9d0] sm:$0xff]
      %v2077 = vld [vmem:[%s3 + $0x9d8] sm:$0xff]
      %v2078 = vld [vmem:[%s3 + $0x9e0] sm:$0xff]
      %v2079 = vld [vmem:[%s3 + $0x9e8] sm:$0xff]
      %v2080 = vld [vmem:[%s3 + $0x9f0] sm:$0xff]
      %v2081 = vld [vmem:[%s3 + $0x9f8] sm:$0xff]
      %v2082 = vld [vmem:[%s3 + $0xa00] sm:$0xff]
      %v2083 = vld [vmem:[%s3 + $0xa08] sm:$0xff]
      %v2084 = vld [vmem:[%s3 + $0xa10] sm:$0xff]
      %v2085 = vld [vmem:[%s3 + $0xa18] sm:$0xff]
      %v2086 = vld [vmem:[%s3 + $0xa20] sm:$0xff]
      %v2087 = vld [vmem:[%s3 + $0xa28] sm:$0xff]
      %v2088 = vld [vmem:[%s3 + $0xa30] sm:$0xff]
      %v2089 = vld [vmem:[%s3 + $0xa38] sm:$0xff]
      %v2090 = vld [vmem:[%s3 + $0xa40] sm:$0xff]
      %v2091 = vld [vmem:[%s3 + $0xa48] sm:$0xff]
      %v2092 = vld [vmem:[%s3 + $0xa50] sm:$0xff]
      %v2093 = vld [vmem:[%s3 + $0xa58] sm:$0xff]
      %v2094 = vld [vmem:[%s3 + $0xa60] sm:$0xff]
      %v2095 = vld [vmem:[%s3 + $0xa68] sm:$0xff]
      %v2096 = vld [vmem:[%s3 + $0xa70] sm:$0xff]
      %v2097 = vld [vmem:[%s3 + $0xa78] sm:$0xff]
      %v2098 = vld [vmem:[%s3 + $0xa80] sm:$0xff]
      %v2099 = vld [vmem:[%s3 + $0xa88] sm:$0xff]
      %v2100 = vld [vmem:[%s3 + $0xa90] sm:$0xff]
      %v2101 = vld [vmem:[%s3 + $0xa98] sm:$0xff]
      %v2102 = vld [vmem:[%s3 + $0xaa0] sm:$0xff]
      %v2103 = vld [vmem:[%s3 + $0xaa8] sm:$0xff]
      %v2104 = vld [vmem:[%s3 + $0xab0] sm:$0xff]
      %v2105 = vld [vmem:[%s3 + $0xab8] sm:$0xff]
      %v2106 = vld [vmem:[%s3 + $0xac0] sm:$0xff]
      %v2107 = vld [vmem:[%s3 + $0xac8] sm:$0xff]
      %v2108 = vld [vmem:[%s3 + $0xad0] sm:$0xff]
      %v2109 = vld [vmem:[%s3 + $0xad8] sm:$0xff]
      %v2110 = vld [vmem:[%s3 + $0xae0] sm:$0xff]
      %v2111 = vld [vmem:[%s3 + $0xae8] sm:$0xff]
      %v2112 = vld [vmem:[%s3 + $0xaf0] sm:$0xff]
      %v2113 = vld [vmem:[%s3 + $0xaf8] sm:$0xff]
      %v2114 = vld [vmem:[%s3 + $0xb00] sm:$0xff]
      %v2115 = vld [vmem:[%s3 + $0xb08] sm:$0xff]
      %v2116 = vld [vmem:[%s3 + $0xb10] sm:$0xff]
      %v2117 = vld [vmem:[%s3 + $0xb18] sm:$0xff]
      %v2118 = vld [vmem:[%s3 + $0xb20] sm:$0xff]
      %v2119 = vld [vmem:[%s3 + $0xb28] sm:$0xff]
      %v2120 = vld [vmem:[%s3 + $0xb30] sm:$0xff]
      %v2121 = vld [vmem:[%s3 + $0xb38] sm:$0xff]
      %v2122 = vld [vmem:[%s3 + $0xb40] sm:$0xff]
      %v2123 = vld [vmem:[%s3 + $0xb48] sm:$0xff]
      %v2124 = vld [vmem:[%s3 + $0xb50] sm:$0xff]
      %v2125 = vld [vmem:[%s3 + $0xb58] sm:$0xff]
      %v2126 = vld [vmem:[%s3 + $0xb60] sm:$0xff]
      %v2127 = vld [vmem:[%s3 + $0xb68] sm:$0xff]
      %v2128 = vld [vmem:[%s3 + $0xb70] sm:$0xff]
      %v2129 = vld [vmem:[%s3 + $0xb78] sm:$0xff]
      %v2130 = vld [vmem:[%s3 + $0xb80] sm:$0xff]
      %v2131 = vld [vmem:[%s3 + $0xb88] sm:$0xff]
      %v2132 = vld [vmem:[%s3 + $0xb90] sm:$0xff]
      %v2133 = vld [vmem:[%s3 + $0xb98] sm:$0xff]
      %v2134 = vld [vmem:[%s3 + $0xba0] sm:$0xff]
      %v2135 = vld [vmem:[%s3 + $0xba8] sm:$0xff]
      %v2136 = vld [vmem:[%s3 + $0xbb0] sm:$0xff]
      %v2137 = vld [vmem:[%s3 + $0xbb8] sm:$0xff]
      %v2138 = vld [vmem:[%s3 + $0xbc0] sm:$0xff]
      %v2139 = vld [vmem:[%s3 + $0xbc8] sm:$0xff]
      %v2140 = vld [vmem:[%s3 + $0xbd0] sm:$0xff]
      %v2141 = vld [vmem:[%s3 + $0xbd8] sm:$0xff]
      %v2142 = vld [vmem:[%s3 + $0xbe0] sm:$0xff]
      %v2143 = vld [vmem:[%s3 + $0xbe8] sm:$0xff]
      %v2144 = vld [vmem:[%s3 + $0xbf0] sm:$0xff]
      %v2145 = vld [vmem:[%s3 + $0xbf8] sm:$0xff]
      %v2146 = vld [vmem:[%s3 + $0xc00] sm:$0xff]
      %v2147 = vld [vmem:[%s3 + $0xc08] sm:$0xff]
      %v2148 = vld [vmem:[%s3 + $0xc10] sm:$0xff]
      %v2149 = vld [vmem:[%s3 + $0xc18] sm:$0xff]
      %v2150 = vld [vmem:[%s3 + $0xc20] sm:$0xff]
      %v2151 = vld [vmem:[%s3 + $0xc28] sm:$0xff]
      %v2152 = vld [vmem:[%s3 + $0xc30] sm:$0xff]
      %v2153 = vld [vmem:[%s3 + $0xc38] sm:$0xff]
      %v2154 = vld [vmem:[%s3 + $0xc40] sm:$0xff]
      %v2155 = vld [vmem:[%s3 + $0xc48] sm:$0xff]
      %v2156 = vld [vmem:[%s3 + $0xc50] sm:$0xff]
      %v2157 = vld [vmem:[%s3 + $0xc58] sm:$0xff]
      %v2158 = vld [vmem:[%s3 + $0xc60] sm:$0xff]
      %v2159 = vld [vmem:[%s3 + $0xc68] sm:$0xff]
      %v2160 = vld [vmem:[%s3 + $0xc70] sm:$0xff]
      %v2161 = vld [vmem:[%s3 + $0xc78] sm:$0xff]
      %v2162 = vld [vmem:[%s4] sm:$0x1]
      %v2164 = vlaneseq
      %v2165 = vshrl.u32 %v2164, 7
      %v2166 = vsub.s32 0, %v2165
      %v2167 = vrot.slane %v2162, %v2166
      %2169 = vmatprep.subr.mxu0 0.0
      %2170 = vmatpush1.msra.mxu0 %v1762
      %2171 = vmatprep.subr.mxu0 0.0
      %2172 = vmatpush1.msra.mxu0 %v1763
      %2173 = vmatprep.subr.mxu0 0.0
      %2174 = vmatpush1.msra.mxu0 %v1764
      %2175 = vmatprep.subr.mxu0 0.0
      %2176 = vmatpush1.msra.mxu0 %v1765
      %2177 = vmatprep.subr.mxu0 0.0
      %2178 = vmatpush1.msra.mxu0 %v1766
      %2179 = vmatprep.subr.mxu0 0.0
      %2180 = vmatpush1.msra.mxu0 %v1767
      %2181 = vmatprep.subr.mxu0 0.0
      %2182 = vmatpush1.msra.mxu0 %v1768
      %2183 = vmatprep.subr.mxu0 0.0
      %2184 = vmatpush1.msra.mxu0 %v1769
      %2185 = vmatprep.subr.mxu0 0.0
      %2186 = vmatpush1.msra.mxu0 %v1770
      %2187 = vmatprep.subr.mxu0 0.0
      %2188 = vmatpush1.msra.mxu0 %v1771
      %2189 = vmatprep.subr.mxu0 0.0
      %2190 = vmatpush1.msra.mxu0 %v1772
      %2191 = vmatprep.subr.mxu0 0.0
      %2192 = vmatpush1.msra.mxu0 %v1773
      %2193 = vmatprep.subr.mxu0 0.0
      %2194 = vmatpush1.msra.mxu0 %v1774
      %2195 = vmatprep.subr.mxu0 0.0
      %2196 = vmatpush1.msra.mxu0 %v1775
      %2197 = vmatprep.subr.mxu0 0.0
      %2198 = vmatpush1.msra.mxu0 %v1776
      %2199 = vmatprep.subr.mxu0 0.0
      %2200 = vmatpush1.msra.mxu0 %v1777
      %2201 = vmatprep.subr.mxu0 0.0
      %2202 = vmatpush1.msra.mxu0 %v1778
      %2203 = vmatprep.subr.mxu0 0.0
      %2204 = vmatpush1.msra.mxu0 %v1779
      %2205 = vmatprep.subr.mxu0 0.0
      %2206 = vmatpush1.msra.mxu0 %v1780
      %2207 = vmatprep.subr.mxu0 0.0
      %2208 = vmatpush1.msra.mxu0 %v1781
      %2209 = vmatprep.subr.mxu0 0.0
      %2210 = vmatpush1.msra.mxu0 %v1782
      %2211 = vmatprep.subr.mxu0 0.0
      %2212 = vmatpush1.msra.mxu0 %v1783
      %2213 = vmatprep.subr.mxu0 0.0
      %2214 = vmatpush1.msra.mxu0 %v1784
      %2215 = vmatprep.subr.mxu0 0.0
      %2216 = vmatpush1.msra.mxu0 %v1785
      %2217 = vmatprep.subr.mxu0 0.0
      %2218 = vmatpush1.msra.mxu0 %v1786
      %2219 = vmatprep.subr.mxu0 0.0
      %2220 = vmatpush1.msra.mxu0 %v1787
      %2221 = vmatprep.subr.mxu0 0.0
      %2222 = vmatpush1.msra.mxu0 %v1788
      %2223 = vmatprep.subr.mxu0 0.0
      %2224 = vmatpush1.msra.mxu0 %v1789
      %2225 = vmatprep.subr.mxu0 0.0
      %2226 = vmatpush1.msra.mxu0 %v1790
      %2227 = vmatprep.subr.mxu0 0.0
      %2228 = vmatpush1.msra.mxu0 %v1791
      %2229 = vmatprep.subr.mxu0 0.0
      %2230 = vmatpush1.msra.mxu0 %v1792
      %2231 = vmatprep.subr.mxu0 0.0
      %2232 = vmatpush1.msra.mxu0 %v1793
      %2233 = vmatprep.mubr.f32.mxu0 %v1143
      %2234 = vmatmul.mubr.f32.gmra.mrb[0].mxu0 %v1110
      %v2235 = vpop.f32.mrb[0].mxu0
      %v2236 = vadd.f32 %v2167, %v2235
      %v2237 = vpop.f32.mrb[0].mxu0
      %2238 = vmatprep.mubr.f32.mxu0 %v1145
      %2239 = vmatmul.mubr.f32.gmra.mrb[0].mxu0 %v1111
      %v2240 = vpop.f32.mrb[0].mxu0
      %v2241 = vadd.f32 %v2167, %v2240
      %v2242 = vpop.f32.mrb[0].mxu0
      %2243 = vmatprep.mubr.f32.mxu0 %v1147
      %2244 = vmatmul.mubr.f32.gmra.mrb[0].mxu0 %v1112
      %v2245 = vpop.f32.mrb[0].mxu0
      %v2246 = vadd.f32 %v2167, %v2245
      %v2247 = vpop.f32.mrb[0].mxu0
      %2248 = vmatprep.mubr.f32.mxu0 %v1149
      %2249 = vmatmul.mubr.f32.gmra.mrb[0].mxu0 %v1113
      %v2250 = vpop.f32.mrb[0].mxu0
      %v2251 = vadd.f32 %v2167, %v2250
      %v2252 = vpop.f32.mrb[0].mxu0
      %2253 = vmatprep.mubr.f32.mxu0 %v1151
      %2254 = vmatmul.mubr.f32.gmra.mrb[0].mxu0 %v1114
      %v2255 = vpop.f32.mrb[0].mxu0
      %v2256 = vadd.f32 %v2167, %v2255
      %v2257 = vpop.f32.mrb[0].mxu0
      %2258 = vmatprep.mubr.f32.mxu0 %v1153
      %2259 = vmatmul.mubr.f32.gmra.mrb[0].mxu0 %v1115
      %v2260 = vpop.f32.mrb[0].mxu0
      %v2261 = vadd.f32 %v2167, %v2260
      %v2262 = vpop.f32.mrb[0].mxu0
      %2263 = vmatprep.mubr.f32.mxu0 %v1155
      %2264 = vmatmul.mubr.f32.gmra.mrb[0].mxu0 %v1116
      %v2265 = vpop.f32.mrb[0].mxu0
      %v2266 = vadd.f32 %v2167, %v2265
      %v2267 = vpop.f32.mrb[0].mxu0
      %2268 = vmatprep.mubr.f32.mxu0 %v1157
      %2269 = vmatmul.mubr.f32.gmra.mrb[0].mxu0 %v1117
      %v2270 = vpop.f32.mrb[0].mxu0
      %v2271 = vadd.f32 %v2167, %v2270
      %v2272 = vpop.f32.mrb[0].mxu0
      %2273 = vmatprep.mubr.f32.mxu0 %v1159
      %2274 = vmatmul.mubr.f32.gmra.mrb[0].mxu0 %v1118
      %v2275 = vpop.f32.mrb[0].mxu0
      %v2276 = vadd.f32 %v2167, %v2275
      %v2277 = vpop.f32.mrb[0].mxu0
      %2278 = vmatprep.mubr.f32.mxu0 %v1161
      %2279 = vmatmul.mubr.f32.gmra.mrb[0].mxu0 %v1119
      %v2280 = vpop.f32.mrb[0].mxu0
      %v2281 = vadd.f32 %v2167, %v2280
      %v2282 = vpop.f32.mrb[0].mxu0
      %2283 = vmatprep.mubr.f32.mxu0 %v1163
      %2284 = vmatmul.mubr.f32.gmra.mrb[0].mxu0 %v1120
      %v2285 = vpop.f32.mrb[0].mxu0
      %v2286 = vadd.f32 %v2167, %v2285
      %v2287 = vpop.f32.mrb[0].mxu0
      %2288 = vmatprep.mubr.f32.mxu0 %v1162
      %2289 = vmatmul.mubr.f32.gmra.mrb[0].mxu0 %v1121
      %v2290 = vpop.f32.mrb[0].mxu0
      %v2291 = vadd.f32 %v2167, %v2290
      %v2292 = vpop.f32.mrb[0].mxu0
      %2293 = vdwg.mxu0
      %2294 = vmatprep.subr.mxu0 0.0
      %2295 = vmatpush1.msra.mxu0 %v1794
      %2296 = vmatprep.subr.mxu0 0.0
      %2297 = vmatpush1.msra.mxu0 %v1795
      %2298 = vmatprep.subr.mxu0 0.0
      %2299 = vmatpush1.msra.mxu0 %v1796
      %2300 = vmatprep.subr.mxu0 0.0
      %2301 = vmatpush1.msra.mxu0 %v1797
      %2302 = vmatprep.subr.mxu0 0.0
      %2303 = vmatpush1.msra.mxu0 %v1798
      %2304 = vmatprep.subr.mxu0 0.0
      %2305 = vmatpush1.msra.mxu0 %v1799
      %2306 = vmatprep.subr.mxu0 0.0
      %2307 = vmatpush1.msra.mxu0 %v1800
      %2308 = vmatprep.subr.mxu0 0.0
      %2309 = vmatpush1.msra.mxu0 %v1801
      %2310 = vmatprep.subr.mxu0 0.0
      %2311 = vmatpush1.msra.mxu0 %v1802
      %2312 = vmatprep.subr.mxu0 0.0
      %2313 = vmatpush1.msra.mxu0 %v1803
      %2314 = vmatprep.subr.mxu0 0.0
      %2315 = vmatpush1.msra.mxu0 %v1804
      %2316 = vmatprep.subr.mxu0 0.0
      %2317 = vmatpush1.msra.mxu0 %v1805
      %2318 = vmatprep.subr.mxu0 0.0
      %2319 = vmatpush1.msra.mxu0 %v1806
      %2320 = vmatprep.subr.mxu0 0.0
      %2321 = vmatpush1.msra.mxu0 %v1807
      %2322 = vmatprep.subr.mxu0 0.0
      %2323 = vmatpush1.msra.mxu0 %v1808
      %2324 = vmatprep.subr.mxu0 0.0
      %2325 = vmatpush1.msra.mxu0 %v1809
      %2326 = vmatprep.subr.mxu0 0.0
      %2327 = vmatpush1.msra.mxu0 %v1810
      %2328 = vmatprep.subr.mxu0 0.0
      %2329 = vmatpush1.msra.mxu0 %v1811
      %2330 = vmatprep.subr.mxu0 0.0
      %2331 = vmatpush1.msra.mxu0 %v1812
      %2332 = vmatprep.subr.mxu0 0.0
      %2333 = vmatpush1.msra.mxu0 %v1813
      %2334 = vmatprep.subr.mxu0 0.0
      %2335 = vmatpush1.msra.mxu0 %v1814
      %2336 = vmatprep.subr.mxu0 0.0
      %2337 = vmatpush1.msra.mxu0 %v1815
      %2338 = vmatprep.subr.mxu0 0.0
      %2339 = vmatpush1.msra.mxu0 %v1816
      %2340 = vmatprep.subr.mxu0 0.0
      %2341 = vmatpush1.msra.mxu0 %v1817
      %2342 = vmatprep.subr.mxu0 0.0
      %2343 = vmatpush1.msra.mxu0 %v1818
      %2344 = vmatprep.subr.mxu0 0.0
      %2345 = vmatpush1.msra.mxu0 %v1819
      %2346 = vmatprep.subr.mxu0 0.0
      %2347 = vmatpush1.msra.mxu0 %v1820
      %2348 = vmatprep.subr.mxu0 0.0
      %2349 = vmatpush1.msra.mxu0 %v1821
      %2350 = vmatprep.subr.mxu0 0.0
      %2351 = vmatpush1.msra.mxu0 %v1822
      %2352 = vmatprep.subr.mxu0 0.0
      %2353 = vmatpush1.msra.mxu0 %v1823
      %2354 = vmatprep.subr.mxu0 0.0
      %2355 = vmatpush1.msra.mxu0 %v1824
      %2356 = vmatprep.subr.mxu0 0.0
      %2357 = vmatpush1.msra.mxu0 %v1825
      %2358 = vmatprep.mubr.f32.mxu0 %v1215
      %2359 = vmatmul.mubr.f32.gmra.mrb[0].mxu0 %v1179
      %v2360 = vpop.f32.mrb[0].mxu0
      %v2361 = vadd.f32 %v2236, %v2360
      %v2362 = vpop.f32.mrb[0].mxu0
      %2363 = vmatprep.mubr.f32.mxu0 %v1217
      %2364 = vmatmul.mubr.f32.gmra.mrb[0].mxu0 %v1181
      %v2365 = vpop.f32.mrb[0].mxu0
      %v2366 = vadd.f32 %v2241, %v2365
      %v2367 = vpop.f32.mrb[0].mxu0
      %2368 = vmatprep.mubr.f32.mxu0 %v1219
      %2369 = vmatmul.mubr.f32.gmra.mrb[0].mxu0 %v1183
      %v2370 = vpop.f32.mrb[0].mxu0
      %v2371 = vadd.f32 %v2246, %v2370
      %v2372 = vpop.f32.mrb[0].mxu0
      %2373 = vmatprep.mubr.f32.mxu0 %v1221
      %2374 = vmatmul.mubr.f32.gmra.mrb[0].mxu0 %v1185
      %v2375 = vpop.f32.mrb[0].mxu0
      %v2376 = vadd.f32 %v2251, %v2375
      %v2377 = vpop.f32.mrb[0].mxu0
      %2378 = vmatprep.mubr.f32.mxu0 %v1223
      %2379 = vmatmul.mubr.f32.gmra.mrb[0].mxu0 %v1187
      %v2380 = vpop.f32.mrb[0].mxu0
      %v2381 = vadd.f32 %v2256, %v2380
      %v2382 = vpop.f32.mrb[0].mxu0
      %2383 = vmatprep.mubr.f32.mxu0 %v1225
      %2384 = vmatmul.mubr.f32.gmra.mrb[0].mxu0 %v1189
      %v2385 = vpop.f32.mrb[0].mxu0
      %v2386 = vadd.f32 %v2261, %v2385
      %v2387 = vpop.f32.mrb[0].mxu0
      %2388 = vmatprep.mubr.f32.mxu0 %v1227
      %2389 = vmatmul.mubr.f32.gmra.mrb[0].mxu0 %v1191
      %v2390 = vpop.f32.mrb[0].mxu0
      %v2391 = vadd.f32 %v2266, %v2390
      %v2392 = vpop.f32.mrb[0].mxu0
      %2393 = vmatprep.mubr.f32.mxu0 %v1229
      %2394 = vmatmul.mubr.f32.gmra.mrb[0].mxu0 %v1193
      %v2395 = vpop.f32.mrb[0].mxu0
      %v2396 = vadd.f32 %v2271, %v2395
      %v2397 = vpop.f32.mrb[0].mxu0
      %2398 = vmatprep.mubr.f32.mxu0 %v1231
      %2399 = vmatmul.mubr.f32.gmra.mrb[0].mxu0 %v1195
      %v2400 = vpop.f32.mrb[0].mxu0
      %v2401 = vadd.f32 %v2276, %v2400
      %v2402 = vpop.f32.mrb[0].mxu0
      %2403 = vmatprep.mubr.f32.mxu0 %v1233
      %2404 = vmatmul.mubr.f32.gmra.mrb[0].mxu0 %v1197
      %v2405 = vpop.f32.mrb[0].mxu0
      %v2406 = vadd.f32 %v2281, %v2405
      %v2407 = vpop.f32.mrb[0].mxu0
      %2408 = vmatprep.mubr.f32.mxu0 %v1235
      %2409 = vmatmul.mubr.f32.gmra.mrb[0].mxu0 %v1199
      %v2410 = vpop.f32.mrb[0].mxu0
      %v2411 = vadd.f32 %v2286, %v2410
      %v2412 = vpop.f32.mrb[0].mxu0
      %2413 = vmatprep.mubr.f32.mxu0 %v1234
      %2414 = vmatmul.mubr.f32.gmra.mrb[0].mxu0 %v1198
      %v2415 = vpop.f32.mrb[0].mxu0
      %v2416 = vadd.f32 %v2291, %v2415
      %v2417 = vpop.f32.mrb[0].mxu0
      %2418 = vdwg.mxu0
      %2419 = vmatprep.subr.mxu0 0.0
      %2420 = vmatpush1.msra.mxu0 %v1826
      %2421 = vmatprep.subr.mxu0 0.0
      %2422 = vmatpush1.msra.mxu0 %v1827
      %2423 = vmatprep.subr.mxu0 0.0
      %2424 = vmatpush1.msra.mxu0 %v1828
      %2425 = vmatprep.subr.mxu0 0.0
      %2426 = vmatpush1.msra.mxu0 %v1829
      %2427 = vmatprep.subr.mxu0 0.0
      %2428 = vmatpush1.msra.mxu0 %v1830
      %2429 = vmatprep.subr.mxu0 0.0
      %2430 = vmatpush1.msra.mxu0 %v1831
      %2431 = vmatprep.subr.mxu0 0.0
      %2432 = vmatpush1.msra.mxu0 %v1832
      %2433 = vmatprep.subr.mxu0 0.0
      %2434 = vmatpush1.msra.mxu0 %v1833
      %2435 = vmatprep.subr.mxu0 0.0
      %2436 = vmatpush1.msra.mxu0 %v1834
      %2437 = vmatprep.subr.mxu0 0.0
      %2438 = vmatpush1.msra.mxu0 %v1835
      %2439 = vmatprep.subr.mxu0 0.0
      %2440 = vmatpush1.msra.mxu0 %v1836
      %2441 = vmatprep.subr.mxu0 0.0
      %2442 = vmatpush1.msra.mxu0 %v1837
      %2443 = vmatprep.subr.mxu0 0.0
      %2444 = vmatpush1.msra.mxu0 %v1838
      %2445 = vmatprep.subr.mxu0 0.0
      %2446 = vmatpush1.msra.mxu0 %v1839
      %2447 = vmatprep.subr.mxu0 0.0
      %2448 = vmatpush1.msra.mxu0 %v1840
      %2449 = vmatprep.subr.mxu0 0.0
      %2450 = vmatpush1.msra.mxu0 %v1841
      %2451 = vmatprep.subr.mxu0 0.0
      %2452 = vmatpush1.msra.mxu0 %v1842
      %2453 = vmatprep.subr.mxu0 0.0
      %2454 = vmatpush1.msra.mxu0 %v1843
      %2455 = vmatprep.subr.mxu0 0.0
      %2456 = vmatpush1.msra.mxu0 %v1844
      %2457 = vmatprep.subr.mxu0 0.0
      %2458 = vmatpush1.msra.mxu0 %v1845
      %2459 = vmatprep.subr.mxu0 0.0
      %2460 = vmatpush1.msra.mxu0 %v1846
      %2461 = vmatprep.subr.mxu0 0.0
      %2462 = vmatpush1.msra.mxu0 %v1847
      %2463 = vmatprep.subr.mxu0 0.0
      %2464 = vmatpush1.msra.mxu0 %v1848
      %2465 = vmatprep.subr.mxu0 0.0
      %2466 = vmatpush1.msra.mxu0 %v1849
      %2467 = vmatprep.subr.mxu0 0.0
      %2468 = vmatpush1.msra.mxu0 %v1850
      %2469 = vmatprep.subr.mxu0 0.0
      %2470 = vmatpush1.msra.mxu0 %v1851
      %2471 = vmatprep.subr.mxu0 0.0
      %2472 = vmatpush1.msra.mxu0 %v1852
      %2473 = vmatprep.subr.mxu0 0.0
      %2474 = vmatpush1.msra.mxu0 %v1853
      %2475 = vmatprep.subr.mxu0 0.0
      %2476 = vmatpush1.msra.mxu0 %v1854
      %2477 = vmatprep.subr.mxu0 0.0
      %2478 = vmatpush1.msra.mxu0 %v1855
      %2479 = vmatprep.subr.mxu0 0.0
      %2480 = vmatpush1.msra.mxu0 %v1856
      %2481 = vmatprep.subr.mxu0 0.0
      %2482 = vmatpush1.msra.mxu0 %v1857
      %2483 = vmatprep.mubr.f32.mxu0 %v1253
      %2484 = vmatmul.mubr.f32.gmra.mrb[0].mxu0 %v1251
      %v2485 = vpop.f32.mrb[0].mxu0
      %v2486 = vadd.f32 %v2361, %v2485
      %v2487 = vpop.f32.mrb[0].mxu0
      %2488 = vmatprep.mubr.f32.mxu0 %v1255
      %2489 = vmatmul.mubr.f32.gmra.mrb[0].mxu0 %v1253
      %v2490 = vpop.f32.mrb[0].mxu0
      %v2491 = vadd.f32 %v2366, %v2490
      %v2492 = vpop.f32.mrb[0].mxu0
      %2493 = vmatprep.mubr.f32.mxu0 %v1257
      %2494 = vmatmul.mubr.f32.gmra.mrb[0].mxu0 %v1255
      %v2495 = vpop.f32.mrb[0].mxu0
      %v2496 = vadd.f32 %v2371, %v2495
      %v2497 = vpop.f32.mrb[0].mxu0
      %2498 = vmatprep.mubr.f32.mxu0 %v1259
      %2499 = vmatmul.mubr.f32.gmra.mrb[0].mxu0 %v1257
      %v2500 = vpop.f32.mrb[0].mxu0
      %v2501 = vadd.f32 %v2376, %v2500
      %v2502 = vpop.f32.mrb[0].mxu0
      %2503 = vmatprep.mubr.f32.mxu0 %v1261
      %2504 = vmatmul.mubr.f32.gmra.mrb[0].mxu0 %v1259
      %v2505 = vpop.f32.mrb[0].mxu0
      %v2506 = vadd.f32 %v2381, %v2505
      %v2507 = vpop.f32.mrb[0].mxu0
      %2508 = vmatprep.mubr.f32.mxu0 %v1263
      %2509 = vmatmul.mubr.f32.gmra.mrb[0].mxu0 %v1261
      %v2510 = vpop.f32.mrb[0].mxu0
      %v2511 = vadd.f32 %v2386, %v2510
      %v2512 = vpop.f32.mrb[0].mxu0
      %2513 = vmatprep.mubr.f32.mxu0 %v1265
      %2514 = vmatmul.mubr.f32.gmra.mrb[0].mxu0 %v1263
      %v2515 = vpop.f32.mrb[0].mxu0
      %v2516 = vadd.f32 %v2391, %v2515
      %v2517 = vpop.f32.mrb[0].mxu0
      %2518 = vmatprep.mubr.f32.mxu0 %v1267
      %2519 = vmatmul.mubr.f32.gmra.mrb[0].mxu0 %v1265
      %v2520 = vpop.f32.mrb[0].mxu0
      %v2521 = vadd.f32 %v2396, %v2520
      %v2522 = vpop.f32.mrb[0].mxu0
      %2523 = vmatprep.mubr.f32.mxu0 %v1269
      %2524 = vmatmul.mubr.f32.gmra.mrb[0].mxu0 %v1267
      %v2525 = vpop.f32.mrb[0].mxu0
      %v2526 = vadd.f32 %v2401, %v2525
      %v2527 = vpop.f32.mrb[0].mxu0
      %2528 = vmatprep.mubr.f32.mxu0 %v1271
      %2529 = vmatmul.mubr.f32.gmra.mrb[0].mxu0 %v1269
      %v2530 = vpop.f32.mrb[0].mxu0
      %v2531 = vadd.f32 %v2406, %v2530
      %v2532 = vpop.f32.mrb[0].mxu0
      %2533 = vmatprep.mubr.f32.mxu0 %v1286
      %2534 = vmatmul.mubr.f32.gmra.mrb[0].mxu0 %v1271
      %v2535 = vpop.f32.mrb[0].mxu0
      %v2536 = vadd.f32 %v2411, %v2535
      %v2537 = vpop.f32.mrb[0].mxu0
      %2538 = vmatprep.mubr.f32.mxu0 %v1285
      %2539 = vmatmul.mubr.f32.gmra.mrb[0].mxu0 %v1270
      %v2540 = vpop.f32.mrb[0].mxu0
      %v2541 = vadd.f32 %v2416, %v2540
      %v2542 = vpop.f32.mrb[0].mxu0
      %2543 = vdwg.mxu0
      %2544 = vmatprep.subr.mxu0 0.0
      %2545 = vmatpush1.msra.mxu0 %v1858
      %2546 = vmatprep.subr.mxu0 0.0
      %2547 = vmatpush1.msra.mxu0 %v1859
      %2548 = vmatprep.subr.mxu0 0.0
      %2549 = vmatpush1.msra.mxu0 %v1860
      %2550 = vmatprep.subr.mxu0 0.0
      %2551 = vmatpush1.msra.mxu0 %v1861
      %2552 = vmatprep.subr.mxu0 0.0
      %2553 = vmatpush1.msra.mxu0 %v1862
      %2554 = vmatprep.subr.mxu0 0.0
      %2555 = vmatpush1.msra.mxu0 %v1863
      %2556 = vmatprep.subr.mxu0 0.0
      %2557 = vmatpush1.msra.mxu0 %v1864
      %2558 = vmatprep.subr.mxu0 0.0
      %2559 = vmatpush1.msra.mxu0 %v1865
      %2560 = vmatprep.subr.mxu0 0.0
      %2561 = vmatpush1.msra.mxu0 %v1866
      %2562 = vmatprep.subr.mxu0 0.0
      %2563 = vmatpush1.msra.mxu0 %v1867
      %2564 = vmatprep.subr.mxu0 0.0
      %2565 = vmatpush1.msra.mxu0 %v1868
      %2566 = vmatprep.subr.mxu0 0.0
      %2567 = vmatpush1.msra.mxu0 %v1869
      %2568 = vmatprep.subr.mxu0 0.0
      %2569 = vmatpush1.msra.mxu0 %v1870
      %2570 = vmatprep.subr.mxu0 0.0
      %2571 = vmatpush1.msra.mxu0 %v1871
      %2572 = vmatprep.subr.mxu0 0.0
      %2573 = vmatpush1.msra.mxu0 %v1872
      %2574 = vmatprep.subr.mxu0 0.0
      %2575 = vmatpush1.msra.mxu0 %v1873
      %2576 = vmatprep.subr.mxu0 0.0
      %2577 = vmatpush1.msra.mxu0 %v1874
      %2578 = vmatprep.subr.mxu0 0.0
      %2579 = vmatpush1.msra.mxu0 %v1875
      %2580 = vmatprep.subr.mxu0 0.0
      %2581 = vmatpush1.msra.mxu0 %v1876
      %2582 = vmatprep.subr.mxu0 0.0
      %2583 = vmatpush1.msra.mxu0 %v1877
      %2584 = vmatprep.subr.mxu0 0.0
      %2585 = vmatpush1.msra.mxu0 %v1878
      %2586 = vmatprep.subr.mxu0 0.0
      %2587 = vmatpush1.msra.mxu0 %v1879
      %2588 = vmatprep.subr.mxu0 0.0
      %2589 = vmatpush1.msra.mxu0 %v1880
      %2590 = vmatprep.subr.mxu0 0.0
      %2591 = vmatpush1.msra.mxu0 %v1881
      %2592 = vmatprep.subr.mxu0 0.0
      %2593 = vmatpush1.msra.mxu0 %v1882
      %2594 = vmatprep.subr.mxu0 0.0
      %2595 = vmatpush1.msra.mxu0 %v1883
      %2596 = vmatprep.subr.mxu0 0.0
      %2597 = vmatpush1.msra.mxu0 %v1884
      %2598 = vmatprep.subr.mxu0 0.0
      %2599 = vmatpush1.msra.mxu0 %v1885
      %2600 = vmatprep.subr.mxu0 0.0
      %2601 = vmatpush1.msra.mxu0 %v1886
      %2602 = vmatprep.subr.mxu0 0.0
      %2603 = vmatpush1.msra.mxu0 %v1887
      %2604 = vmatprep.subr.mxu0 0.0
      %2605 = vmatpush1.msra.mxu0 %v1888
      %2606 = vmatprep.subr.mxu0 0.0
      %2607 = vmatpush1.msra.mxu0 %v1889
      %2608 = vmatprep.mubr.f32.mxu0 %v1331
      %2609 = vmatmul.mubr.f32.gmra.mrb[0].mxu0 %v1293
      %v2610 = vpop.f32.mrb[0].mxu0
      %v2611 = vadd.f32 %v2486, %v2610
      %v2612 = vpop.f32.mrb[0].mxu0
      %2613 = vmatprep.mubr.f32.mxu0 %v1333
      %2614 = vmatmul.mubr.f32.gmra.mrb[0].mxu0 %v1295
      %v2615 = vpop.f32.mrb[0].mxu0
      %v2616 = vadd.f32 %v2491, %v2615
      %v2617 = vpop.f32.mrb[0].mxu0
      %2618 = vmatprep.mubr.f32.mxu0 %v1335
      %2619 = vmatmul.mubr.f32.gmra.mrb[0].mxu0 %v1297
      %v2620 = vpop.f32.mrb[0].mxu0
      %v2621 = vadd.f32 %v2496, %v2620
      %v2622 = vpop.f32.mrb[0].mxu0
      %2623 = vmatprep.mubr.f32.mxu0 %v1337
      %2624 = vmatmul.mubr.f32.gmra.mrb[0].mxu0 %v1299
      %v2625 = vpop.f32.mrb[0].mxu0
      %v2626 = vadd.f32 %v2501, %v2625
      %v2627 = vpop.f32.mrb[0].mxu0
      %2628 = vmatprep.mubr.f32.mxu0 %v1339
      %2629 = vmatmul.mubr.f32.gmra.mrb[0].mxu0 %v1301
      %v2630 = vpop.f32.mrb[0].mxu0
      %v2631 = vadd.f32 %v2506, %v2630
      %v2632 = vpop.f32.mrb[0].mxu0
      %2633 = vmatprep.mubr.f32.mxu0 %v1341
      %2634 = vmatmul.mubr.f32.gmra.mrb[0].mxu0 %v1303
      %v2635 = vpop.f32.mrb[0].mxu0
      %v2636 = vadd.f32 %v2511, %v2635
      %v2637 = vpop.f32.mrb[0].mxu0
      %2638 = vmatprep.mubr.f32.mxu0 %v1343
      %2639 = vmatmul.mubr.f32.gmra.mrb[0].mxu0 %v1305
      %v2640 = vpop.f32.mrb[0].mxu0
      %v2641 = vadd.f32 %v2516, %v2640
      %v2642 = vpop.f32.mrb[0].mxu0
      %2643 = vmatprep.mubr.f32.mxu0 %v1345
      %2644 = vmatmul.mubr.f32.gmra.mrb[0].mxu0 %v1307
      %v2645 = vpop.f32.mrb[0].mxu0
      %v2646 = vadd.f32 %v2521, %v2645
      %v2647 = vpop.f32.mrb[0].mxu0
      %2648 = vmatprep.mubr.f32.mxu0 %v1347
      %2649 = vmatmul.mubr.f32.gmra.mrb[0].mxu0 %v1309
      %v2650 = vpop.f32.mrb[0].mxu0
      %v2651 = vadd.f32 %v2526, %v2650
      %v2652 = vpop.f32.mrb[0].mxu0
      %2653 = vmatprep.mubr.f32.mxu0 %v1349
      %2654 = vmatmul.mubr.f32.gmra.mrb[0].mxu0 %v1311
      %v2655 = vpop.f32.mrb[0].mxu0
      %v2656 = vadd.f32 %v2531, %v2655
      %v2657 = vpop.f32.mrb[0].mxu0
      %2658 = vmatprep.mubr.f32.mxu0 %v1351
      %2659 = vmatmul.mubr.f32.gmra.mrb[0].mxu0 %v1313
      %v2660 = vpop.f32.mrb[0].mxu0
      %v2661 = vadd.f32 %v2536, %v2660
      %v2662 = vpop.f32.mrb[0].mxu0
      %2663 = vmatprep.mubr.f32.mxu0 %v1353
      %2664 = vmatmul.mubr.f32.gmra.mrb[0].mxu0 %v1315
      %v2665 = vpop.f32.mrb[0].mxu0
      %v2666 = vadd.f32 %v2541, %v2665
      %v2667 = vpop.f32.mrb[0].mxu0
      %2668 = vdwg.mxu0
      %2669 = vmatprep.subr.mxu0 0.0
      %2670 = vmatpush1.msra.mxu0 %v1890
      %2671 = vmatprep.subr.mxu0 0.0
      %2672 = vmatpush1.msra.mxu0 %v1891
      %2673 = vmatprep.subr.mxu0 0.0
      %2674 = vmatpush1.msra.mxu0 %v1892
      %2675 = vmatprep.subr.mxu0 0.0
      %2676 = vmatpush1.msra.mxu0 %v1893
      %2677 = vmatprep.subr.mxu0 0.0
      %2678 = vmatpush1.msra.mxu0 %v1894
      %2679 = vmatprep.subr.mxu0 0.0
      %2680 = vmatpush1.msra.mxu0 %v1895
      %2681 = vmatprep.subr.mxu0 0.0
      %2682 = vmatpush1.msra.mxu0 %v1896
      %2683 = vmatprep.subr.mxu0 0.0
      %2684 = vmatpush1.msra.mxu0 %v1897
      %2685 = vmatprep.subr.mxu0 0.0
      %2686 = vmatpush1.msra.mxu0 %v1898
      %2687 = vmatprep.subr.mxu0 0.0
      %2688 = vmatpush1.msra.mxu0 %v1899
      %2689 = vmatprep.subr.mxu0 0.0
      %2690 = vmatpush1.msra.mxu0 %v1900
      %2691 = vmatprep.subr.mxu0 0.0
      %2692 = vmatpush1.msra.mxu0 %v1901
      %2693 = vmatprep.subr.mxu0 0.0
      %2694 = vmatpush1.msra.mxu0 %v1902
      %2695 = vmatprep.subr.mxu0 0.0
      %2696 = vmatpush1.msra.mxu0 %v1903
      %2697 = vmatprep.subr.mxu0 0.0
      %2698 = vmatpush1.msra.mxu0 %v1904
      %2699 = vmatprep.subr.mxu0 0.0
      %2700 = vmatpush1.msra.mxu0 %v1905
      %2701 = vmatprep.subr.mxu0 0.0
      %2702 = vmatpush1.msra.mxu0 %v1906
      %2703 = vmatprep.subr.mxu0 0.0
      %2704 = vmatpush1.msra.mxu0 %v1907
      %2705 = vmatprep.subr.mxu0 0.0
      %2706 = vmatpush1.msra.mxu0 %v1908
      %2707 = vmatprep.subr.mxu0 0.0
      %2708 = vmatpush1.msra.mxu0 %v1909
      %2709 = vmatprep.subr.mxu0 0.0
      %2710 = vmatpush1.msra.mxu0 %v1910
      %2711 = vmatprep.subr.mxu0 0.0
      %2712 = vmatpush1.msra.mxu0 %v1911
      %2713 = vmatprep.subr.mxu0 0.0
      %2714 = vmatpush1.msra.mxu0 %v1912
      %2715 = vmatprep.subr.mxu0 0.0
      %2716 = vmatpush1.msra.mxu0 %v1913
      %2717 = vmatprep.subr.mxu0 0.0
      %2718 = vmatpush1.msra.mxu0 %v1914
      %2719 = vmatprep.subr.mxu0 0.0
      %2720 = vmatpush1.msra.mxu0 %v1915
      %2721 = vmatprep.subr.mxu0 0.0
      %2722 = vmatpush1.msra.mxu0 %v1916
      %2723 = vmatprep.subr.mxu0 0.0
      %2724 = vmatpush1.msra.mxu0 %v1917
      %2725 = vmatprep.subr.mxu0 0.0
      %2726 = vmatpush1.msra.mxu0 %v1918
      %2727 = vmatprep.subr.mxu0 0.0
      %2728 = vmatpush1.msra.mxu0 %v1919
      %2729 = vmatprep.subr.mxu0 0.0
      %2730 = vmatpush1.msra.mxu0 %v1920
      %2731 = vmatprep.subr.mxu0 0.0
      %2732 = vmatpush1.msra.mxu0 %v1921
      %2733 = vmatprep.mubr.f32.mxu0 %v1112
      %2734 = vmatmul.mubr.f32.gmra.mrb[0].mxu0 %v1369
      %v2735 = vpop.f32.mrb[0].mxu0
      %v2736 = vadd.f32 %v2611, %v2735
      %v2737 = vpop.f32.mrb[0].mxu0
      %2738 = vmatprep.mubr.f32.mxu0 %v1113
      %2739 = vmatmul.mubr.f32.gmra.mrb[0].mxu0 %v1371
      %v2740 = vpop.f32.mrb[0].mxu0
      %v2741 = vadd.f32 %v2616, %v2740
      %v2742 = vpop.f32.mrb[0].mxu0
      %2743 = vmatprep.mubr.f32.mxu0 %v1114
      %2744 = vmatmul.mubr.f32.gmra.mrb[0].mxu0 %v1373
      %v2745 = vpop.f32.mrb[0].mxu0
      %v2746 = vadd.f32 %v2621, %v2745
      %v2747 = vpop.f32.mrb[0].mxu0
      %2748 = vmatprep.mubr.f32.mxu0 %v1115
      %2749 = vmatmul.mubr.f32.gmra.mrb[0].mxu0 %v1375
      %v2750 = vpop.f32.mrb[0].mxu0
      %v2751 = vadd.f32 %v2626, %v2750
      %v2752 = vpop.f32.mrb[0].mxu0
      %2753 = vmatprep.mubr.f32.mxu0 %v1116
      %2754 = vmatmul.mubr.f32.gmra.mrb[0].mxu0 %v1377
      %v2755 = vpop.f32.mrb[0].mxu0
      %v2756 = vadd.f32 %v2631, %v2755
      %v2757 = vpop.f32.mrb[0].mxu0
      %2758 = vmatprep.mubr.f32.mxu0 %v1117
      %2759 = vmatmul.mubr.f32.gmra.mrb[0].mxu0 %v1379
      %v2760 = vpop.f32.mrb[0].mxu0
      %v2761 = vadd.f32 %v2636, %v2760
      %v2762 = vpop.f32.mrb[0].mxu0
      %2763 = vmatprep.mubr.f32.mxu0 %v1118
      %2764 = vmatmul.mubr.f32.gmra.mrb[0].mxu0 %v1381
      %v2765 = vpop.f32.mrb[0].mxu0
      %v2766 = vadd.f32 %v2641, %v2765
      %v2767 = vpop.f32.mrb[0].mxu0
      %2768 = vmatprep.mubr.f32.mxu0 %v1119
      %2769 = vmatmul.mubr.f32.gmra.mrb[0].mxu0 %v1383
      %v2770 = vpop.f32.mrb[0].mxu0
      %v2771 = vadd.f32 %v2646, %v2770
      %v2772 = vpop.f32.mrb[0].mxu0
      %2773 = vmatprep.mubr.f32.mxu0 %v1120
      %2774 = vmatmul.mubr.f32.gmra.mrb[0].mxu0 %v1385
      %v2775 = vpop.f32.mrb[0].mxu0
      %v2776 = vadd.f32 %v2651, %v2775
      %v2777 = vpop.f32.mrb[0].mxu0
      %2778 = vmatprep.mubr.f32.mxu0 %v1121
      %2779 = vmatmul.mubr.f32.gmra.mrb[0].mxu0 %v1387
      %v2780 = vpop.f32.mrb[0].mxu0
      %v2781 = vadd.f32 %v2656, %v2780
      %v2782 = vpop.f32.mrb[0].mxu0
      %2783 = vmatprep.mubr.f32.mxu0 %v1122
      %2784 = vmatmul.mubr.f32.gmra.mrb[0].mxu0 %v1389
      %v2785 = vpop.f32.mrb[0].mxu0
      %v2786 = vadd.f32 %v2661, %v2785
      %v2787 = vpop.f32.mrb[0].mxu0
      %2788 = vmatprep.mubr.f32.mxu0 %v1123
      %2789 = vmatmul.mubr.f32.gmra.mrb[0].mxu0 %v1391
      %v2790 = vpop.f32.mrb[0].mxu0
      %v2791 = vadd.f32 %v2666, %v2790
      %v2792 = vpop.f32.mrb[0].mxu0
      %2793 = vdwg.mxu0
      %2794 = vmatprep.subr.mxu0 0.0
      %2795 = vmatpush1.msra.mxu0 %v1922
      %2796 = vmatprep.subr.mxu0 0.0
      %2797 = vmatpush1.msra.mxu0 %v1923
      %2798 = vmatprep.subr.mxu0 0.0
      %2799 = vmatpush1.msra.mxu0 %v1924
      %2800 = vmatprep.subr.mxu0 0.0
      %2801 = vmatpush1.msra.mxu0 %v1925
      %2802 = vmatprep.subr.mxu0 0.0
      %2803 = vmatpush1.msra.mxu0 %v1926
      %2804 = vmatprep.subr.mxu0 0.0
      %2805 = vmatpush1.msra.mxu0 %v1927
      %2806 = vmatprep.subr.mxu0 0.0
      %2807 = vmatpush1.msra.mxu0 %v1928
      %2808 = vmatprep.subr.mxu0 0.0
      %2809 = vmatpush1.msra.mxu0 %v1929
      %2810 = vmatprep.subr.mxu0 0.0
      %2811 = vmatpush1.msra.mxu0 %v1930
      %2812 = vmatprep.subr.mxu0 0.0
      %2813 = vmatpush1.msra.mxu0 %v1931
      %2814 = vmatprep.subr.mxu0 0.0
      %2815 = vmatpush1.msra.mxu0 %v1932
      %2816 = vmatprep.subr.mxu0 0.0
      %2817 = vmatpush1.msra.mxu0 %v1933
      %2818 = vmatprep.subr.mxu0 0.0
      %2819 = vmatpush1.msra.mxu0 %v1934
      %2820 = vmatprep.subr.mxu0 0.0
      %2821 = vmatpush1.msra.mxu0 %v1935
      %2822 = vmatprep.subr.mxu0 0.0
      %2823 = vmatpush1.msra.mxu0 %v1936
      %2824 = vmatprep.subr.mxu0 0.0
      %2825 = vmatpush1.msra.mxu0 %v1937
      %2826 = vmatprep.subr.mxu0 0.0
      %2827 = vmatpush1.msra.mxu0 %v1938
      %2828 = vmatprep.subr.mxu0 0.0
      %2829 = vmatpush1.msra.mxu0 %v1939
      %2830 = vmatprep.subr.mxu0 0.0
      %2831 = vmatpush1.msra.mxu0 %v1940
      %2832 = vmatprep.subr.mxu0 0.0
      %2833 = vmatpush1.msra.mxu0 %v1941
      %2834 = vmatprep.subr.mxu0 0.0
      %2835 = vmatpush1.msra.mxu0 %v1942
      %2836 = vmatprep.subr.mxu0 0.0
      %2837 = vmatpush1.msra.mxu0 %v1943
      %2838 = vmatprep.subr.mxu0 0.0
      %2839 = vmatpush1.msra.mxu0 %v1944
      %2840 = vmatprep.subr.mxu0 0.0
      %2841 = vmatpush1.msra.mxu0 %v1945
      %2842 = vmatprep.subr.mxu0 0.0
      %2843 = vmatpush1.msra.mxu0 %v1946
      %2844 = vmatprep.subr.mxu0 0.0
      %2845 = vmatpush1.msra.mxu0 %v1947
      %2846 = vmatprep.subr.mxu0 0.0
      %2847 = vmatpush1.msra.mxu0 %v1948
      %2848 = vmatprep.subr.mxu0 0.0
      %2849 = vmatpush1.msra.mxu0 %v1949
      %2850 = vmatprep.subr.mxu0 0.0
      %2851 = vmatpush1.msra.mxu0 %v1950
      %2852 = vmatprep.subr.mxu0 0.0
      %2853 = vmatpush1.msra.mxu0 %v1951
      %2854 = vmatprep.subr.mxu0 0.0
      %2855 = vmatpush1.msra.mxu0 %v1952
      %2856 = vmatprep.subr.mxu0 0.0
      %2857 = vmatpush1.msra.mxu0 %v1953
      %2858 = vmatprep.mubr.f32.mxu0 %v1149
      %2859 = vmatmul.mubr.f32.gmra.mrb[0].mxu0 %v1113
      %v2860 = vpop.f32.mrb[0].mxu0
      %v2861 = vadd.f32 %v2736, %v2860
      %v2862 = vpop.f32.mrb[0].mxu0
      %2863 = vmatprep.mubr.f32.mxu0 %v1151
      %2864 = vmatmul.mubr.f32.gmra.mrb[0].mxu0 %v1114
      %v2865 = vpop.f32.mrb[0].mxu0
      %v2866 = vadd.f32 %v2741, %v2865
      %v2867 = vpop.f32.mrb[0].mxu0
      %2868 = vmatprep.mubr.f32.mxu0 %v1153
      %2869 = vmatmul.mubr.f32.gmra.mrb[0].mxu0 %v1115
      %v2870 = vpop.f32.mrb[0].mxu0
      %v2871 = vadd.f32 %v2746, %v2870
      %v2872 = vpop.f32.mrb[0].mxu0
      %2873 = vmatprep.mubr.f32.mxu0 %v1155
      %2874 = vmatmul.mubr.f32.gmra.mrb[0].mxu0 %v1116
      %v2875 = vpop.f32.mrb[0].mxu0
      %v2876 = vadd.f32 %v2751, %v2875
      %v2877 = vpop.f32.mrb[0].mxu0
      %2878 = vmatprep.mubr.f32.mxu0 %v1157
      %2879 = vmatmul.mubr.f32.gmra.mrb[0].mxu0 %v1117
      %v2880 = vpop.f32.mrb[0].mxu0
      %v2881 = vadd.f32 %v2756, %v2880
      %v2882 = vpop.f32.mrb[0].mxu0
      %2883 = vmatprep.mubr.f32.mxu0 %v1159
      %2884 = vmatmul.mubr.f32.gmra.mrb[0].mxu0 %v1118
      %v2885 = vpop.f32.mrb[0].mxu0
      %v2886 = vadd.f32 %v2761, %v2885
      %v2887 = vpop.f32.mrb[0].mxu0
      %2888 = vmatprep.mubr.f32.mxu0 %v1161
      %2889 = vmatmul.mubr.f32.gmra.mrb[0].mxu0 %v1119
      %v2890 = vpop.f32.mrb[0].mxu0
      %v2891 = vadd.f32 %v2766, %v2890
      %v2892 = vpop.f32.mrb[0].mxu0
      %2893 = vmatprep.mubr.f32.mxu0 %v1163
      %2894 = vmatmul.mubr.f32.gmra.mrb[0].mxu0 %v1120
      %v2895 = vpop.f32.mrb[0].mxu0
      %v2896 = vadd.f32 %v2771, %v2895
      %v2897 = vpop.f32.mrb[0].mxu0
      %2898 = vmatprep.mubr.f32.mxu0 %v1406
      %2899 = vmatmul.mubr.f32.gmra.mrb[0].mxu0 %v1121
      %v2900 = vpop.f32.mrb[0].mxu0
      %v2901 = vadd.f32 %v2776, %v2900
      %v2902 = vpop.f32.mrb[0].mxu0
      %2903 = vmatprep.mubr.f32.mxu0 %v1408
      %2904 = vmatmul.mubr.f32.gmra.mrb[0].mxu0 %v1122
      %v2905 = vpop.f32.mrb[0].mxu0
      %v2906 = vadd.f32 %v2781, %v2905
      %v2907 = vpop.f32.mrb[0].mxu0
      %2908 = vmatprep.mubr.f32.mxu0 %v1410
      %2909 = vmatmul.mubr.f32.gmra.mrb[0].mxu0 %v1123
      %v2910 = vpop.f32.mrb[0].mxu0
      %v2911 = vadd.f32 %v2786, %v2910
      %v2912 = vpop.f32.mrb[0].mxu0
      %2913 = vmatprep.mubr.f32.mxu0 %v1409
      %2914 = vmatmul.mubr.f32.gmra.mrb[0].mxu0 %v1124
      %v2915 = vpop.f32.mrb[0].mxu0
      %v2916 = vadd.f32 %v2791, %v2915
      %v2917 = vpop.f32.mrb[0].mxu0
      %2918 = vdwg.mxu0
      %2919 = vmatprep.subr.mxu0 0.0
      %2920 = vmatpush1.msra.mxu0 %v1954
      %2921 = vmatprep.subr.mxu0 0.0
      %2922 = vmatpush1.msra.mxu0 %v1955
      %2923 = vmatprep.subr.mxu0 0.0
      %2924 = vmatpush1.msra.mxu0 %v1956
      %2925 = vmatprep.subr.mxu0 0.0
      %2926 = vmatpush1.msra.mxu0 %v1957
      %2927 = vmatprep.subr.mxu0 0.0
      %2928 = vmatpush1.msra.mxu0 %v1958
      %2929 = vmatprep.subr.mxu0 0.0
      %2930 = vmatpush1.msra.mxu0 %v1959
      %2931 = vmatprep.subr.mxu0 0.0
      %2932 = vmatpush1.msra.mxu0 %v1960
      %2933 = vmatprep.subr.mxu0 0.0
      %2934 = vmatpush1.msra.mxu0 %v1961
      %2935 = vmatprep.subr.mxu0 0.0
      %2936 = vmatpush1.msra.mxu0 %v1962
      %2937 = vmatprep.subr.mxu0 0.0
      %2938 = vmatpush1.msra.mxu0 %v1963
      %2939 = vmatprep.subr.mxu0 0.0
      %2940 = vmatpush1.msra.mxu0 %v1964
      %2941 = vmatprep.subr.mxu0 0.0
      %2942 = vmatpush1.msra.mxu0 %v1965
      %2943 = vmatprep.subr.mxu0 0.0
      %2944 = vmatpush1.msra.mxu0 %v1966
      %2945 = vmatprep.subr.mxu0 0.0
      %2946 = vmatpush1.msra.mxu0 %v1967
      %2947 = vmatprep.subr.mxu0 0.0
      %2948 = vmatpush1.msra.mxu0 %v1968
      %2949 = vmatprep.subr.mxu0 0.0
      %2950 = vmatpush1.msra.mxu0 %v1969
      %2951 = vmatprep.subr.mxu0 0.0
      %2952 = vmatpush1.msra.mxu0 %v1970
      %2953 = vmatprep.subr.mxu0 0.0
      %2954 = vmatpush1.msra.mxu0 %v1971
      %2955 = vmatprep.subr.mxu0 0.0
      %2956 = vmatpush1.msra.mxu0 %v1972
      %2957 = vmatprep.subr.mxu0 0.0
      %2958 = vmatpush1.msra.mxu0 %v1973
      %2959 = vmatprep.subr.mxu0 0.0
      %2960 = vmatpush1.msra.mxu0 %v1974
      %2961 = vmatprep.subr.mxu0 0.0
      %2962 = vmatpush1.msra.mxu0 %v1975
      %2963 = vmatprep.subr.mxu0 0.0
      %2964 = vmatpush1.msra.mxu0 %v1976
      %2965 = vmatprep.subr.mxu0 0.0
      %2966 = vmatpush1.msra.mxu0 %v1977
      %2967 = vmatprep.subr.mxu0 0.0
      %2968 = vmatpush1.msra.mxu0 %v1978
      %2969 = vmatprep.subr.mxu0 0.0
      %2970 = vmatpush1.msra.mxu0 %v1979
      %2971 = vmatprep.subr.mxu0 0.0
      %2972 = vmatpush1.msra.mxu0 %v1980
      %2973 = vmatprep.subr.mxu0 0.0
      %2974 = vmatpush1.msra.mxu0 %v1981
      %2975 = vmatprep.subr.mxu0 0.0
      %2976 = vmatpush1.msra.mxu0 %v1982
      %2977 = vmatprep.subr.mxu0 0.0
      %2978 = vmatpush1.msra.mxu0 %v1983
      %2979 = vmatprep.subr.mxu0 0.0
      %2980 = vmatpush1.msra.mxu0 %v1984
      %2981 = vmatprep.subr.mxu0 0.0
      %2982 = vmatpush1.msra.mxu0 %v1985
      %2983 = vmatprep.mubr.f32.mxu0 %v1221
      %2984 = vmatmul.mubr.f32.gmra.mrb[0].mxu0 %v1185
      %v2985 = vpop.f32.mrb[0].mxu0
      %v2986 = vadd.f32 %v2861, %v2985
      %v2987 = vpop.f32.mrb[0].mxu0
      %2988 = vmatprep.mubr.f32.mxu0 %v1223
      %2989 = vmatmul.mubr.f32.gmra.mrb[0].mxu0 %v1187
      %v2990 = vpop.f32.mrb[0].mxu0
      %v2991 = vadd.f32 %v2866, %v2990
      %v2992 = vpop.f32.mrb[0].mxu0
      %2993 = vmatprep.mubr.f32.mxu0 %v1225
      %2994 = vmatmul.mubr.f32.gmra.mrb[0].mxu0 %v1189
      %v2995 = vpop.f32.mrb[0].mxu0
      %v2996 = vadd.f32 %v2871, %v2995
      %v2997 = vpop.f32.mrb[0].mxu0
      %2998 = vmatprep.mubr.f32.mxu0 %v1227
      %2999 = vmatmul.mubr.f32.gmra.mrb[0].mxu0 %v1191
      %v3000 = vpop.f32.mrb[0].mxu0
      %v3001 = vadd.f32 %v2876, %v3000
      %v3002 = vpop.f32.mrb[0].mxu0
      %3003 = vmatprep.mubr.f32.mxu0 %v1229
      %3004 = vmatmul.mubr.f32.gmra.mrb[0].mxu0 %v1193
      %v3005 = vpop.f32.mrb[0].mxu0
      %v3006 = vadd.f32 %v2881, %v3005
      %v3007 = vpop.f32.mrb[0].mxu0
      %3008 = vmatprep.mubr.f32.mxu0 %v1231
      %3009 = vmatmul.mubr.f32.gmra.mrb[0].mxu0 %v1195
      %v3010 = vpop.f32.mrb[0].mxu0
      %v3011 = vadd.f32 %v2886, %v3010
      %v3012 = vpop.f32.mrb[0].mxu0
      %3013 = vmatprep.mubr.f32.mxu0 %v1233
      %3014 = vmatmul.mubr.f32.gmra.mrb[0].mxu0 %v1197
      %v3015 = vpop.f32.mrb[0].mxu0
      %v3016 = vadd.f32 %v2891, %v3015
      %v3017 = vpop.f32.mrb[0].mxu0
      %3018 = vmatprep.mubr.f32.mxu0 %v1235
      %3019 = vmatmul.mubr.f32.gmra.mrb[0].mxu0 %v1199
      %v3020 = vpop.f32.mrb[0].mxu0
      %v3021 = vadd.f32 %v2896, %v3020
      %v3022 = vpop.f32.mrb[0].mxu0
      %3023 = vmatprep.mubr.f32.mxu0 %v1426
      %3024 = vmatmul.mubr.f32.gmra.mrb[0].mxu0 %v1416
      %v3025 = vpop.f32.mrb[0].mxu0
      %v3026 = vadd.f32 %v2901, %v3025
      %v3027 = vpop.f32.mrb[0].mxu0
      %3028 = vmatprep.mubr.f32.mxu0 %v1428
      %3029 = vmatmul.mubr.f32.gmra.mrb[0].mxu0 %v1418
      %v3030 = vpop.f32.mrb[0].mxu0
      %v3031 = vadd.f32 %v2906, %v3030
      %v3032 = vpop.f32.mrb[0].mxu0
      %3033 = vmatprep.mubr.f32.mxu0 %v1430
      %3034 = vmatmul.mubr.f32.gmra.mrb[0].mxu0 %v1420
      %v3035 = vpop.f32.mrb[0].mxu0
      %v3036 = vadd.f32 %v2911, %v3035
      %v3037 = vpop.f32.mrb[0].mxu0
      %3038 = vmatprep.mubr.f32.mxu0 %v1429
      %3039 = vmatmul.mubr.f32.gmra.mrb[0].mxu0 %v1419
      %v3040 = vpop.f32.mrb[0].mxu0
      %v3041 = vadd.f32 %v2916, %v3040
      %v3042 = vpop.f32.mrb[0].mxu0
      %3043 = vdwg.mxu0
      %3044 = vmatprep.subr.mxu0 0.0
      %3045 = vmatpush1.msra.mxu0 %v1986
      %3046 = vmatprep.subr.mxu0 0.0
      %3047 = vmatpush1.msra.mxu0 %v1987
      %3048 = vmatprep.subr.mxu0 0.0
      %3049 = vmatpush1.msra.mxu0 %v1988
      %3050 = vmatprep.subr.mxu0 0.0
      %3051 = vmatpush1.msra.mxu0 %v1989
      %3052 = vmatprep.subr.mxu0 0.0
      %3053 = vmatpush1.msra.mxu0 %v1990
      %3054 = vmatprep.subr.mxu0 0.0
      %3055 = vmatpush1.msra.mxu0 %v1991
      %3056 = vmatprep.subr.mxu0 0.0
      %3057 = vmatpush1.msra.mxu0 %v1992
      %3058 = vmatprep.subr.mxu0 0.0
      %3059 = vmatpush1.msra.mxu0 %v1993
      %3060 = vmatprep.subr.mxu0 0.0
      %3061 = vmatpush1.msra.mxu0 %v1994
      %3062 = vmatprep.subr.mxu0 0.0
      %3063 = vmatpush1.msra.mxu0 %v1995
      %3064 = vmatprep.subr.mxu0 0.0
      %3065 = vmatpush1.msra.mxu0 %v1996
      %3066 = vmatprep.subr.mxu0 0.0
      %3067 = vmatpush1.msra.mxu0 %v1997
      %3068 = vmatprep.subr.mxu0 0.0
      %3069 = vmatpush1.msra.mxu0 %v1998
      %3070 = vmatprep.subr.mxu0 0.0
      %3071 = vmatpush1.msra.mxu0 %v1999
      %3072 = vmatprep.subr.mxu0 0.0
      %3073 = vmatpush1.msra.mxu0 %v2000
      %3074 = vmatprep.subr.mxu0 0.0
      %3075 = vmatpush1.msra.mxu0 %v2001
      %3076 = vmatprep.subr.mxu0 0.0
      %3077 = vmatpush1.msra.mxu0 %v2002
      %3078 = vmatprep.subr.mxu0 0.0
      %3079 = vmatpush1.msra.mxu0 %v2003
      %3080 = vmatprep.subr.mxu0 0.0
      %3081 = vmatpush1.msra.mxu0 %v2004
      %3082 = vmatprep.subr.mxu0 0.0
      %3083 = vmatpush1.msra.mxu0 %v2005
      %3084 = vmatprep.subr.mxu0 0.0
      %3085 = vmatpush1.msra.mxu0 %v2006
      %3086 = vmatprep.subr.mxu0 0.0
      %3087 = vmatpush1.msra.mxu0 %v2007
      %3088 = vmatprep.subr.mxu0 0.0
      %3089 = vmatpush1.msra.mxu0 %v2008
      %3090 = vmatprep.subr.mxu0 0.0
      %3091 = vmatpush1.msra.mxu0 %v2009
      %3092 = vmatprep.subr.mxu0 0.0
      %3093 = vmatpush1.msra.mxu0 %v2010
      %3094 = vmatprep.subr.mxu0 0.0
      %3095 = vmatpush1.msra.mxu0 %v2011
      %3096 = vmatprep.subr.mxu0 0.0
      %3097 = vmatpush1.msra.mxu0 %v2012
      %3098 = vmatprep.subr.mxu0 0.0
      %3099 = vmatpush1.msra.mxu0 %v2013
      %3100 = vmatprep.subr.mxu0 0.0
      %3101 = vmatpush1.msra.mxu0 %v2014
      %3102 = vmatprep.subr.mxu0 0.0
      %3103 = vmatpush1.msra.mxu0 %v2015
      %3104 = vmatprep.subr.mxu0 0.0
      %3105 = vmatpush1.msra.mxu0 %v2016
      %3106 = vmatprep.subr.mxu0 0.0
      %3107 = vmatpush1.msra.mxu0 %v2017
      %3108 = vmatprep.mubr.f32.mxu0 %v1259
      %3109 = vmatmul.mubr.f32.gmra.mrb[0].mxu0 %v1257
      %v3110 = vpop.f32.mrb[0].mxu0
      %v3111 = vadd.f32 %v2986, %v3110
      %v3112 = vpop.f32.mrb[0].mxu0
      %3113 = vmatprep.mubr.f32.mxu0 %v1261
      %3114 = vmatmul.mubr.f32.gmra.mrb[0].mxu0 %v1259
      %v3115 = vpop.f32.mrb[0].mxu0
      %v3116 = vadd.f32 %v2991, %v3115
      %v3117 = vpop.f32.mrb[0].mxu0
      %3118 = vmatprep.mubr.f32.mxu0 %v1263
      %3119 = vmatmul.mubr.f32.gmra.mrb[0].mxu0 %v1261
      %v3120 = vpop.f32.mrb[0].mxu0
      %v3121 = vadd.f32 %v2996, %v3120
      %v3122 = vpop.f32.mrb[0].mxu0
      %3123 = vmatprep.mubr.f32.mxu0 %v1265
      %3124 = vmatmul.mubr.f32.gmra.mrb[0].mxu0 %v1263
      %v3125 = vpop.f32.mrb[0].mxu0
      %v3126 = vadd.f32 %v3001, %v3125
      %v3127 = vpop.f32.mrb[0].mxu0
      %3128 = vmatprep.mubr.f32.mxu0 %v1267
      %3129 = vmatmul.mubr.f32.gmra.mrb[0].mxu0 %v1265
      %v3130 = vpop.f32.mrb[0].mxu0
      %v3131 = vadd.f32 %v3006, %v3130
      %v3132 = vpop.f32.mrb[0].mxu0
      %3133 = vmatprep.mubr.f32.mxu0 %v1269
      %3134 = vmatmul.mubr.f32.gmra.mrb[0].mxu0 %v1267
      %v3135 = vpop.f32.mrb[0].mxu0
      %v3136 = vadd.f32 %v3011, %v3135
      %v3137 = vpop.f32.mrb[0].mxu0
      %3138 = vmatprep.mubr.f32.mxu0 %v1271
      %3139 = vmatmul.mubr.f32.gmra.mrb[0].mxu0 %v1269
      %v3140 = vpop.f32.mrb[0].mxu0
      %v3141 = vadd.f32 %v3016, %v3140
      %v3142 = vpop.f32.mrb[0].mxu0
      %3143 = vmatprep.mubr.f32.mxu0 %v1286
      %3144 = vmatmul.mubr.f32.gmra.mrb[0].mxu0 %v1271
      %v3145 = vpop.f32.mrb[0].mxu0
      %v3146 = vadd.f32 %v3021, %v3145
      %v3147 = vpop.f32.mrb[0].mxu0
      %3148 = vmatprep.mubr.f32.mxu0 %v1436
      %3149 = vmatmul.mubr.f32.gmra.mrb[0].mxu0 %v1286
      %v3150 = vpop.f32.mrb[0].mxu0
      %v3151 = vadd.f32 %v3026, %v3150
      %v3152 = vpop.f32.mrb[0].mxu0
      %3153 = vmatprep.mubr.f32.mxu0 %v1438
      %3154 = vmatmul.mubr.f32.gmra.mrb[0].mxu0 %v1436
      %v3155 = vpop.f32.mrb[0].mxu0
      %v3156 = vadd.f32 %v3031, %v3155
      %v3157 = vpop.f32.mrb[0].mxu0
      %3158 = vmatprep.mubr.f32.mxu0 %v1444
      %3159 = vmatmul.mubr.f32.gmra.mrb[0].mxu0 %v1438
      %v3160 = vpop.f32.mrb[0].mxu0
      %v3161 = vadd.f32 %v3036, %v3160
      %v3162 = vpop.f32.mrb[0].mxu0
      %3163 = vmatprep.mubr.f32.mxu0 %v1443
      %3164 = vmatmul.mubr.f32.gmra.mrb[0].mxu0 %v1437
      %v3165 = vpop.f32.mrb[0].mxu0
      %v3166 = vadd.f32 %v3041, %v3165
      %v3167 = vpop.f32.mrb[0].mxu0
      %3168 = vdwg.mxu0
      %3169 = vmatprep.subr.mxu0 0.0
      %3170 = vmatpush1.msra.mxu0 %v2018
      %3171 = vmatprep.subr.mxu0 0.0
      %3172 = vmatpush1.msra.mxu0 %v2019
      %3173 = vmatprep.subr.mxu0 0.0
      %3174 = vmatpush1.msra.mxu0 %v2020
      %3175 = vmatprep.subr.mxu0 0.0
      %3176 = vmatpush1.msra.mxu0 %v2021
      %3177 = vmatprep.subr.mxu0 0.0
      %3178 = vmatpush1.msra.mxu0 %v2022
      %3179 = vmatprep.subr.mxu0 0.0
      %3180 = vmatpush1.msra.mxu0 %v2023
      %3181 = vmatprep.subr.mxu0 0.0
      %3182 = vmatpush1.msra.mxu0 %v2024
      %3183 = vmatprep.subr.mxu0 0.0
      %3184 = vmatpush1.msra.mxu0 %v2025
      %3185 = vmatprep.subr.mxu0 0.0
      %3186 = vmatpush1.msra.mxu0 %v2026
      %3187 = vmatprep.subr.mxu0 0.0
      %3188 = vmatpush1.msra.mxu0 %v2027
      %3189 = vmatprep.subr.mxu0 0.0
      %3190 = vmatpush1.msra.mxu0 %v2028
      %3191 = vmatprep.subr.mxu0 0.0
      %3192 = vmatpush1.msra.mxu0 %v2029
      %3193 = vmatprep.subr.mxu0 0.0
      %3194 = vmatpush1.msra.mxu0 %v2030
      %3195 = vmatprep.subr.mxu0 0.0
      %3196 = vmatpush1.msra.mxu0 %v2031
      %3197 = vmatprep.subr.mxu0 0.0
      %3198 = vmatpush1.msra.mxu0 %v2032
      %3199 = vmatprep.subr.mxu0 0.0
      %3200 = vmatpush1.msra.mxu0 %v2033
      %3201 = vmatprep.subr.mxu0 0.0
      %3202 = vmatpush1.msra.mxu0 %v2034
      %3203 = vmatprep.subr.mxu0 0.0
      %3204 = vmatpush1.msra.mxu0 %v2035
      %3205 = vmatprep.subr.mxu0 0.0
      %3206 = vmatpush1.msra.mxu0 %v2036
      %3207 = vmatprep.subr.mxu0 0.0
      %3208 = vmatpush1.msra.mxu0 %v2037
      %3209 = vmatprep.subr.mxu0 0.0
      %3210 = vmatpush1.msra.mxu0 %v2038
      %3211 = vmatprep.subr.mxu0 0.0
      %3212 = vmatpush1.msra.mxu0 %v2039
      %3213 = vmatprep.subr.mxu0 0.0
      %3214 = vmatpush1.msra.mxu0 %v2040
      %3215 = vmatprep.subr.mxu0 0.0
      %3216 = vmatpush1.msra.mxu0 %v2041
      %3217 = vmatprep.subr.mxu0 0.0
      %3218 = vmatpush1.msra.mxu0 %v2042
      %3219 = vmatprep.subr.mxu0 0.0
      %3220 = vmatpush1.msra.mxu0 %v2043
      %3221 = vmatprep.subr.mxu0 0.0
      %3222 = vmatpush1.msra.mxu0 %v2044
      %3223 = vmatprep.subr.mxu0 0.0
      %3224 = vmatpush1.msra.mxu0 %v2045
      %3225 = vmatprep.subr.mxu0 0.0
      %3226 = vmatpush1.msra.mxu0 %v2046
      %3227 = vmatprep.subr.mxu0 0.0
      %3228 = vmatpush1.msra.mxu0 %v2047
      %3229 = vmatprep.subr.mxu0 0.0
      %3230 = vmatpush1.msra.mxu0 %v2048
      %3231 = vmatprep.subr.mxu0 0.0
      %3232 = vmatpush1.msra.mxu0 %v2049
      %3233 = vmatprep.mubr.f32.mxu0 %v1493
      %3234 = vmatmul.mubr.f32.gmra.mrb[0].mxu0 %v1299
      %v3235 = vpop.f32.mrb[0].mxu0
      %v3236 = vadd.f32 %v3111, %v3235
      %v3237 = vpop.f32.mrb[0].mxu0
      %3238 = vmatprep.mubr.f32.mxu0 %v1516
      %3239 = vmatmul.mubr.f32.gmra.mrb[0].mxu0 %v1301
      %v3240 = vpop.f32.mrb[0].mxu0
      %v3241 = vadd.f32 %v3116, %v3240
      %v3242 = vpop.f32.mrb[0].mxu0
      %3243 = vmatprep.mubr.f32.mxu0 %v1531
      %3244 = vmatmul.mubr.f32.gmra.mrb[0].mxu0 %v1303
      %v3245 = vpop.f32.mrb[0].mxu0
      %v3246 = vadd.f32 %v3121, %v3245
      %v3247 = vpop.f32.mrb[0].mxu0
      %3248 = vmatprep.mubr.f32.mxu0 %v1545
      %3249 = vmatmul.mubr.f32.gmra.mrb[0].mxu0 %v1305
      %v3250 = vpop.f32.mrb[0].mxu0
      %v3251 = vadd.f32 %v3126, %v3250
      %v3252 = vpop.f32.mrb[0].mxu0
      %3253 = vmatprep.mubr.f32.mxu0 %v1559
      %3254 = vmatmul.mubr.f32.gmra.mrb[0].mxu0 %v1307
      %v3255 = vpop.f32.mrb[0].mxu0
      %v3256 = vadd.f32 %v3131, %v3255
      %v3257 = vpop.f32.mrb[0].mxu0
      %3258 = vmatprep.mubr.f32.mxu0 %v1573
      %3259 = vmatmul.mubr.f32.gmra.mrb[0].mxu0 %v1309
      %v3260 = vpop.f32.mrb[0].mxu0
      %v3261 = vadd.f32 %v3136, %v3260
      %v3262 = vpop.f32.mrb[0].mxu0
      %3263 = vmatprep.mubr.f32.mxu0 %v1587
      %3264 = vmatmul.mubr.f32.gmra.mrb[0].mxu0 %v1311
      %v3265 = vpop.f32.mrb[0].mxu0
      %v3266 = vadd.f32 %v3141, %v3265
      %v3267 = vpop.f32.mrb[0].mxu0
      %3268 = vmatprep.mubr.f32.mxu0 %v1601
      %3269 = vmatmul.mubr.f32.gmra.mrb[0].mxu0 %v1313
      %v3270 = vpop.f32.mrb[0].mxu0
      %v3271 = vadd.f32 %v3146, %v3270
      %v3272 = vpop.f32.mrb[0].mxu0
      %3273 = vmatprep.mubr.f32.mxu0 %v1615
      %3274 = vmatmul.mubr.f32.gmra.mrb[0].mxu0 %v1315
      %v3275 = vpop.f32.mrb[0].mxu0
      %v3276 = vadd.f32 %v3151, %v3275
      %v3277 = vpop.f32.mrb[0].mxu0
      %3278 = vmatprep.mubr.f32.mxu0 %v1629
      %3279 = vmatmul.mubr.f32.gmra.mrb[0].mxu0 %v1468
      %v3280 = vpop.f32.mrb[0].mxu0
      %v3281 = vadd.f32 %v3156, %v3280
      %v3282 = vpop.f32.mrb[0].mxu0
      %3283 = vmatprep.mubr.f32.mxu0 %v1643
      %3284 = vmatmul.mubr.f32.gmra.mrb[0].mxu0 %v1470
      %v3285 = vpop.f32.mrb[0].mxu0
      %v3286 = vadd.f32 %v3161, %v3285
      %v3287 = vpop.f32.mrb[0].mxu0
      %3288 = vmatprep.mubr.f32.mxu0 %v1657
      %3289 = vmatmul.mubr.f32.gmra.mrb[0].mxu0 %v1472
      %v3290 = vpop.f32.mrb[0].mxu0
      %v3291 = vadd.f32 %v3166, %v3290
      %v3292 = vpop.f32.mrb[0].mxu0
      %3293 = vdwg.mxu0
      %3294 = vmatprep.subr.mxu0 0.0
      %3295 = vmatpush1.msra.mxu0 %v2050
      %3296 = vmatprep.subr.mxu0 0.0
      %3297 = vmatpush1.msra.mxu0 %v2051
      %3298 = vmatprep.subr.mxu0 0.0
      %3299 = vmatpush1.msra.mxu0 %v2052
      %3300 = vmatprep.subr.mxu0 0.0
      %3301 = vmatpush1.msra.mxu0 %v2053
      %3302 = vmatprep.subr.mxu0 0.0
      %3303 = vmatpush1.msra.mxu0 %v2054
      %3304 = vmatprep.subr.mxu0 0.0
      %3305 = vmatpush1.msra.mxu0 %v2055
      %3306 = vmatprep.subr.mxu0 0.0
      %3307 = vmatpush1.msra.mxu0 %v2056
      %3308 = vmatprep.subr.mxu0 0.0
      %3309 = vmatpush1.msra.mxu0 %v2057
      %3310 = vmatprep.subr.mxu0 0.0
      %3311 = vmatpush1.msra.mxu0 %v2058
      %3312 = vmatprep.subr.mxu0 0.0
      %3313 = vmatpush1.msra.mxu0 %v2059
      %3314 = vmatprep.subr.mxu0 0.0
      %3315 = vmatpush1.msra.mxu0 %v2060
      %3316 = vmatprep.subr.mxu0 0.0
      %3317 = vmatpush1.msra.mxu0 %v2061
      %3318 = vmatprep.subr.mxu0 0.0
      %3319 = vmatpush1.msra.mxu0 %v2062
      %3320 = vmatprep.subr.mxu0 0.0
      %3321 = vmatpush1.msra.mxu0 %v2063
      %3322 = vmatprep.subr.mxu0 0.0
      %3323 = vmatpush1.msra.mxu0 %v2064
      %3324 = vmatprep.subr.mxu0 0.0
      %3325 = vmatpush1.msra.mxu0 %v2065
      %3326 = vmatprep.subr.mxu0 0.0
      %3327 = vmatpush1.msra.mxu0 %v2066
      %3328 = vmatprep.subr.mxu0 0.0
      %3329 = vmatpush1.msra.mxu0 %v2067
      %3330 = vmatprep.subr.mxu0 0.0
      %3331 = vmatpush1.msra.mxu0 %v2068
      %3332 = vmatprep.subr.mxu0 0.0
      %3333 = vmatpush1.msra.mxu0 %v2069
      %3334 = vmatprep.subr.mxu0 0.0
      %3335 = vmatpush1.msra.mxu0 %v2070
      %3336 = vmatprep.subr.mxu0 0.0
      %3337 = vmatpush1.msra.mxu0 %v2071
      %3338 = vmatprep.subr.mxu0 0.0
      %3339 = vmatpush1.msra.mxu0 %v2072
      %3340 = vmatprep.subr.mxu0 0.0
      %3341 = vmatpush1.msra.mxu0 %v2073
      %3342 = vmatprep.subr.mxu0 0.0
      %3343 = vmatpush1.msra.mxu0 %v2074
      %3344 = vmatprep.subr.mxu0 0.0
      %3345 = vmatpush1.msra.mxu0 %v2075
      %3346 = vmatprep.subr.mxu0 0.0
      %3347 = vmatpush1.msra.mxu0 %v2076
      %3348 = vmatprep.subr.mxu0 0.0
      %3349 = vmatpush1.msra.mxu0 %v2077
      %3350 = vmatprep.subr.mxu0 0.0
      %3351 = vmatpush1.msra.mxu0 %v2078
      %3352 = vmatprep.subr.mxu0 0.0
      %3353 = vmatpush1.msra.mxu0 %v2079
      %3354 = vmatprep.subr.mxu0 0.0
      %3355 = vmatpush1.msra.mxu0 %v2080
      %3356 = vmatprep.subr.mxu0 0.0
      %3357 = vmatpush1.msra.mxu0 %v2081
      %3358 = vmatprep.mubr.f32.mxu0 %v1499
      %3359 = vmatmul.mubr.f32.gmra.mrb[0].mxu0 %v1496
      %v3360 = vpop.f32.mrb[0].mxu0
      %v3361 = vadd.f32 %v3236, %v3360
      %v3362 = vpop.f32.mrb[0].mxu0
      %3363 = vmatprep.mubr.f32.mxu0 %v1519
      %3364 = vmatmul.mubr.f32.gmra.mrb[0].mxu0 %v1518
      %v3365 = vpop.f32.mrb[0].mxu0
      %v3366 = vadd.f32 %v3241, %v3365
      %v3367 = vpop.f32.mrb[0].mxu0
      %3368 = vmatprep.mubr.f32.mxu0 %v1521
      %3369 = vmatmul.mubr.f32.gmra.mrb[0].mxu0 %v1533
      %v3370 = vpop.f32.mrb[0].mxu0
      %v3371 = vadd.f32 %v3246, %v3370
      %v3372 = vpop.f32.mrb[0].mxu0
      %3373 = vmatprep.mubr.f32.mxu0 %v1535
      %3374 = vmatmul.mubr.f32.gmra.mrb[0].mxu0 %v1547
      %v3375 = vpop.f32.mrb[0].mxu0
      %v3376 = vadd.f32 %v3251, %v3375
      %v3377 = vpop.f32.mrb[0].mxu0
      %3378 = vmatprep.mubr.f32.mxu0 %v1549
      %3379 = vmatmul.mubr.f32.gmra.mrb[0].mxu0 %v1561
      %v3380 = vpop.f32.mrb[0].mxu0
      %v3381 = vadd.f32 %v3256, %v3380
      %v3382 = vpop.f32.mrb[0].mxu0
      %3383 = vmatprep.mubr.f32.mxu0 %v1563
      %3384 = vmatmul.mubr.f32.gmra.mrb[0].mxu0 %v1575
      %v3385 = vpop.f32.mrb[0].mxu0
      %v3386 = vadd.f32 %v3261, %v3385
      %v3387 = vpop.f32.mrb[0].mxu0
      %3388 = vmatprep.mubr.f32.mxu0 %v1577
      %3389 = vmatmul.mubr.f32.gmra.mrb[0].mxu0 %v1589
      %v3390 = vpop.f32.mrb[0].mxu0
      %v3391 = vadd.f32 %v3266, %v3390
      %v3392 = vpop.f32.mrb[0].mxu0
      %3393 = vmatprep.mubr.f32.mxu0 %v1591
      %3394 = vmatmul.mubr.f32.gmra.mrb[0].mxu0 %v1603
      %v3395 = vpop.f32.mrb[0].mxu0
      %v3396 = vadd.f32 %v3271, %v3395
      %v3397 = vpop.f32.mrb[0].mxu0
      %3398 = vmatprep.mubr.f32.mxu0 %v1605
      %3399 = vmatmul.mubr.f32.gmra.mrb[0].mxu0 %v1617
      %v3400 = vpop.f32.mrb[0].mxu0
      %v3401 = vadd.f32 %v3276, %v3400
      %v3402 = vpop.f32.mrb[0].mxu0
      %3403 = vmatprep.mubr.f32.mxu0 %v1619
      %3404 = vmatmul.mubr.f32.gmra.mrb[0].mxu0 %v1631
      %v3405 = vpop.f32.mrb[0].mxu0
      %v3406 = vadd.f32 %v3281, %v3405
      %v3407 = vpop.f32.mrb[0].mxu0
      %3408 = vmatprep.mubr.f32.mxu0 %v1633
      %3409 = vmatmul.mubr.f32.gmra.mrb[0].mxu0 %v1645
      %v3410 = vpop.f32.mrb[0].mxu0
      %v3411 = vadd.f32 %v3286, %v3410
      %v3412 = vpop.f32.mrb[0].mxu0
      %3413 = vmatprep.mubr.f32.mxu0 %v1661
      %3414 = vmatmul.mubr.f32.gmra.mrb[0].mxu0 %v1659
      %v3415 = vpop.f32.mrb[0].mxu0
      %v3416 = vadd.f32 %v3291, %v3415
      %v3417 = vpop.f32.mrb[0].mxu0
      %3418 = vdwg.mxu0
      %3419 = vmatprep.subr.mxu0 0.0
      %3420 = vmatpush1.msra.mxu0 %v2082
      %3421 = vmatprep.subr.mxu0 0.0
      %3422 = vmatpush1.msra.mxu0 %v2083
      %3423 = vmatprep.subr.mxu0 0.0
      %3424 = vmatpush1.msra.mxu0 %v2084
      %3425 = vmatprep.subr.mxu0 0.0
      %3426 = vmatpush1.msra.mxu0 %v2085
      %3427 = vmatprep.subr.mxu0 0.0
      %3428 = vmatpush1.msra.mxu0 %v2086
      %3429 = vmatprep.subr.mxu0 0.0
      %3430 = vmatpush1.msra.mxu0 %v2087
      %3431 = vmatprep.subr.mxu0 0.0
      %3432 = vmatpush1.msra.mxu0 %v2088
      %3433 = vmatprep.subr.mxu0 0.0
      %3434 = vmatpush1.msra.mxu0 %v2089
      %3435 = vmatprep.subr.mxu0 0.0
      %3436 = vmatpush1.msra.mxu0 %v2090
      %3437 = vmatprep.subr.mxu0 0.0
      %3438 = vmatpush1.msra.mxu0 %v2091
      %3439 = vmatprep.subr.mxu0 0.0
      %3440 = vmatpush1.msra.mxu0 %v2092
      %3441 = vmatprep.subr.mxu0 0.0
      %3442 = vmatpush1.msra.mxu0 %v2093
      %3443 = vmatprep.subr.mxu0 0.0
      %3444 = vmatpush1.msra.mxu0 %v2094
      %3445 = vmatprep.subr.mxu0 0.0
      %3446 = vmatpush1.msra.mxu0 %v2095
      %3447 = vmatprep.subr.mxu0 0.0
      %3448 = vmatpush1.msra.mxu0 %v2096
      %3449 = vmatprep.subr.mxu0 0.0
      %3450 = vmatpush1.msra.mxu0 %v2097
      %3451 = vmatprep.subr.mxu0 0.0
      %3452 = vmatpush1.msra.mxu0 %v2098
      %3453 = vmatprep.subr.mxu0 0.0
      %3454 = vmatpush1.msra.mxu0 %v2099
      %3455 = vmatprep.subr.mxu0 0.0
      %3456 = vmatpush1.msra.mxu0 %v2100
      %3457 = vmatprep.subr.mxu0 0.0
      %3458 = vmatpush1.msra.mxu0 %v2101
      %3459 = vmatprep.subr.mxu0 0.0
      %3460 = vmatpush1.msra.mxu0 %v2102
      %3461 = vmatprep.subr.mxu0 0.0
      %3462 = vmatpush1.msra.mxu0 %v2103
      %3463 = vmatprep.subr.mxu0 0.0
      %3464 = vmatpush1.msra.mxu0 %v2104
      %3465 = vmatprep.subr.mxu0 0.0
      %3466 = vmatpush1.msra.mxu0 %v2105
      %3467 = vmatprep.subr.mxu0 0.0
      %3468 = vmatpush1.msra.mxu0 %v2106
      %3469 = vmatprep.subr.mxu0 0.0
      %3470 = vmatpush1.msra.mxu0 %v2107
      %3471 = vmatprep.subr.mxu0 0.0
      %3472 = vmatpush1.msra.mxu0 %v2108
      %3473 = vmatprep.subr.mxu0 0.0
      %3474 = vmatpush1.msra.mxu0 %v2109
      %3475 = vmatprep.subr.mxu0 0.0
      %3476 = vmatpush1.msra.mxu0 %v2110
      %3477 = vmatprep.subr.mxu0 0.0
      %3478 = vmatpush1.msra.mxu0 %v2111
      %3479 = vmatprep.subr.mxu0 0.0
      %3480 = vmatpush1.msra.mxu0 %v2112
      %3481 = vmatprep.subr.mxu0 0.0
      %3482 = vmatpush1.msra.mxu0 %v2113
      %3483 = vmatprep.mubr.f32.mxu0 %v1505
      %3484 = vmatmul.mubr.f32.gmra.mrb[0].mxu0 %v1502
      %v3485 = vpop.f32.mrb[0].mxu0
      %v3486 = vadd.f32 %v3361, %v3485
      %v3487 = vpop.f32.mrb[0].mxu0
      %3488 = vmatprep.mubr.f32.mxu0 %v1523
      %3489 = vmatmul.mubr.f32.gmra.mrb[0].mxu0 %v1521
      %v3490 = vpop.f32.mrb[0].mxu0
      %v3491 = vadd.f32 %v3366, %v3490
      %v3492 = vpop.f32.mrb[0].mxu0
      %3493 = vmatprep.mubr.f32.mxu0 %v1537
      %3494 = vmatmul.mubr.f32.gmra.mrb[0].mxu0 %v1535
      %v3495 = vpop.f32.mrb[0].mxu0
      %v3496 = vadd.f32 %v3371, %v3495
      %v3497 = vpop.f32.mrb[0].mxu0
      %3498 = vmatprep.mubr.f32.mxu0 %v1551
      %3499 = vmatmul.mubr.f32.gmra.mrb[0].mxu0 %v1549
      %v3500 = vpop.f32.mrb[0].mxu0
      %v3501 = vadd.f32 %v3376, %v3500
      %v3502 = vpop.f32.mrb[0].mxu0
      %3503 = vmatprep.mubr.f32.mxu0 %v1565
      %3504 = vmatmul.mubr.f32.gmra.mrb[0].mxu0 %v1563
      %v3505 = vpop.f32.mrb[0].mxu0
      %v3506 = vadd.f32 %v3381, %v3505
      %v3507 = vpop.f32.mrb[0].mxu0
      %3508 = vmatprep.mubr.f32.mxu0 %v1579
      %3509 = vmatmul.mubr.f32.gmra.mrb[0].mxu0 %v1577
      %v3510 = vpop.f32.mrb[0].mxu0
      %v3511 = vadd.f32 %v3386, %v3510
      %v3512 = vpop.f32.mrb[0].mxu0
      %3513 = vmatprep.mubr.f32.mxu0 %v1593
      %3514 = vmatmul.mubr.f32.gmra.mrb[0].mxu0 %v1591
      %v3515 = vpop.f32.mrb[0].mxu0
      %v3516 = vadd.f32 %v3391, %v3515
      %v3517 = vpop.f32.mrb[0].mxu0
      %3518 = vmatprep.mubr.f32.mxu0 %v1607
      %3519 = vmatmul.mubr.f32.gmra.mrb[0].mxu0 %v1605
      %v3520 = vpop.f32.mrb[0].mxu0
      %v3521 = vadd.f32 %v3396, %v3520
      %v3522 = vpop.f32.mrb[0].mxu0
      %3523 = vmatprep.mubr.f32.mxu0 %v1621
      %3524 = vmatmul.mubr.f32.gmra.mrb[0].mxu0 %v1619
      %v3525 = vpop.f32.mrb[0].mxu0
      %v3526 = vadd.f32 %v3401, %v3525
      %v3527 = vpop.f32.mrb[0].mxu0
      %3528 = vmatprep.mubr.f32.mxu0 %v1635
      %3529 = vmatmul.mubr.f32.gmra.mrb[0].mxu0 %v1633
      %v3530 = vpop.f32.mrb[0].mxu0
      %v3531 = vadd.f32 %v3406, %v3530
      %v3532 = vpop.f32.mrb[0].mxu0
      %3533 = vmatprep.mubr.f32.mxu0 %v1649
      %3534 = vmatmul.mubr.f32.gmra.mrb[0].mxu0 %v1647
      %v3535 = vpop.f32.mrb[0].mxu0
      %v3536 = vadd.f32 %v3411, %v3535
      %v3537 = vpop.f32.mrb[0].mxu0
      %3538 = vmatprep.mubr.f32.mxu0 %v1665
      %3539 = vmatmul.mubr.f32.gmra.mrb[0].mxu0 %v1663
      %v3540 = vpop.f32.mrb[0].mxu0
      %v3541 = vadd.f32 %v3416, %v3540
      %v3542 = vpop.f32.mrb[0].mxu0
      %3543 = vdwg.mxu0
      %3544 = vmatprep.subr.mxu0 0.0
      %3545 = vmatpush1.msra.mxu0 %v2114
      %3546 = vmatprep.subr.mxu0 0.0
      %3547 = vmatpush1.msra.mxu0 %v2115
      %3548 = vmatprep.subr.mxu0 0.0
      %3549 = vmatpush1.msra.mxu0 %v2116
      %3550 = vmatprep.subr.mxu0 0.0
      %3551 = vmatpush1.msra.mxu0 %v2117
      %3552 = vmatprep.subr.mxu0 0.0
      %3553 = vmatpush1.msra.mxu0 %v2118
      %3554 = vmatprep.subr.mxu0 0.0
      %3555 = vmatpush1.msra.mxu0 %v2119
      %3556 = vmatprep.subr.mxu0 0.0
      %3557 = vmatpush1.msra.mxu0 %v2120
      %3558 = vmatprep.subr.mxu0 0.0
      %3559 = vmatpush1.msra.mxu0 %v2121
      %3560 = vmatprep.subr.mxu0 0.0
      %3561 = vmatpush1.msra.mxu0 %v2122
      %3562 = vmatprep.subr.mxu0 0.0
      %3563 = vmatpush1.msra.mxu0 %v2123
      %3564 = vmatprep.subr.mxu0 0.0
      %3565 = vmatpush1.msra.mxu0 %v2124
      %3566 = vmatprep.subr.mxu0 0.0
      %3567 = vmatpush1.msra.mxu0 %v2125
      %3568 = vmatprep.subr.mxu0 0.0
      %3569 = vmatpush1.msra.mxu0 %v2126
      %3570 = vmatprep.subr.mxu0 0.0
      %3571 = vmatpush1.msra.mxu0 %v2127
      %3572 = vmatprep.subr.mxu0 0.0
      %3573 = vmatpush1.msra.mxu0 %v2128
      %3574 = vmatprep.subr.mxu0 0.0
      %3575 = vmatpush1.msra.mxu0 %v2129
      %3576 = vmatprep.subr.mxu0 0.0
      %3577 = vmatpush1.msra.mxu0 %v2130
      %3578 = vmatprep.subr.mxu0 0.0
      %3579 = vmatpush1.msra.mxu0 %v2131
      %3580 = vmatprep.subr.mxu0 0.0
      %3581 = vmatpush1.msra.mxu0 %v2132
      %3582 = vmatprep.subr.mxu0 0.0
      %3583 = vmatpush1.msra.mxu0 %v2133
      %3584 = vmatprep.subr.mxu0 0.0
      %3585 = vmatpush1.msra.mxu0 %v2134
      %3586 = vmatprep.subr.mxu0 0.0
      %3587 = vmatpush1.msra.mxu0 %v2135
      %3588 = vmatprep.subr.mxu0 0.0
      %3589 = vmatpush1.msra.mxu0 %v2136
      %3590 = vmatprep.subr.mxu0 0.0
      %3591 = vmatpush1.msra.mxu0 %v2137
      %3592 = vmatprep.subr.mxu0 0.0
      %3593 = vmatpush1.msra.mxu0 %v2138
      %3594 = vmatprep.subr.mxu0 0.0
      %3595 = vmatpush1.msra.mxu0 %v2139
      %3596 = vmatprep.subr.mxu0 0.0
      %3597 = vmatpush1.msra.mxu0 %v2140
      %3598 = vmatprep.subr.mxu0 0.0
      %3599 = vmatpush1.msra.mxu0 %v2141
      %3600 = vmatprep.subr.mxu0 0.0
      %3601 = vmatpush1.msra.mxu0 %v2142
      %3602 = vmatprep.subr.mxu0 0.0
      %3603 = vmatpush1.msra.mxu0 %v2143
      %3604 = vmatprep.subr.mxu0 0.0
      %3605 = vmatpush1.msra.mxu0 %v2144
      %3606 = vmatprep.subr.mxu0 0.0
      %3607 = vmatpush1.msra.mxu0 %v2145
      %3608 = vmatprep.mubr.f32.mxu0 %v1511
      %3609 = vmatmul.mubr.f32.gmra.mrb[0].mxu0 %v1508
      %v3610 = vpop.f32.mrb[0].mxu0
      %v3611 = vadd.f32 %v3486, %v3610
      %v3612 = vpop.f32.mrb[0].mxu0
      %3613 = vmatprep.mubr.f32.mxu0 %v1527
      %3614 = vmatmul.mubr.f32.gmra.mrb[0].mxu0 %v1525
      %v3615 = vpop.f32.mrb[0].mxu0
      %v3616 = vadd.f32 %v3491, %v3615
      %v3617 = vpop.f32.mrb[0].mxu0
      %3618 = vmatprep.mubr.f32.mxu0 %v1541
      %3619 = vmatmul.mubr.f32.gmra.mrb[0].mxu0 %v1539
      %v3620 = vpop.f32.mrb[0].mxu0
      %v3621 = vadd.f32 %v3496, %v3620
      %v3622 = vpop.f32.mrb[0].mxu0
      %3623 = vmatprep.mubr.f32.mxu0 %v1555
      %3624 = vmatmul.mubr.f32.gmra.mrb[0].mxu0 %v1553
      %v3625 = vpop.f32.mrb[0].mxu0
      %v3626 = vadd.f32 %v3501, %v3625
      %v3627 = vpop.f32.mrb[0].mxu0
      %3628 = vmatprep.mubr.f32.mxu0 %v1569
      %3629 = vmatmul.mubr.f32.gmra.mrb[0].mxu0 %v1567
      %v3630 = vpop.f32.mrb[0].mxu0
      %v3631 = vadd.f32 %v3506, %v3630
      %v3632 = vpop.f32.mrb[0].mxu0
      %3633 = vmatprep.mubr.f32.mxu0 %v1583
      %3634 = vmatmul.mubr.f32.gmra.mrb[0].mxu0 %v1581
      %v3635 = vpop.f32.mrb[0].mxu0
      %v3636 = vadd.f32 %v3511, %v3635
      %v3637 = vpop.f32.mrb[0].mxu0
      %3638 = vmatprep.mubr.f32.mxu0 %v1597
      %3639 = vmatmul.mubr.f32.gmra.mrb[0].mxu0 %v1595
      %v3640 = vpop.f32.mrb[0].mxu0
      %v3641 = vadd.f32 %v3516, %v3640
      %v3642 = vpop.f32.mrb[0].mxu0
      %3643 = vmatprep.mubr.f32.mxu0 %v1611
      %3644 = vmatmul.mubr.f32.gmra.mrb[0].mxu0 %v1609
      %v3645 = vpop.f32.mrb[0].mxu0
      %v3646 = vadd.f32 %v3521, %v3645
      %v3647 = vpop.f32.mrb[0].mxu0
      %3648 = vmatprep.mubr.f32.mxu0 %v1625
      %3649 = vmatmul.mubr.f32.gmra.mrb[0].mxu0 %v1623
      %v3650 = vpop.f32.mrb[0].mxu0
      %v3651 = vadd.f32 %v3526, %v3650
      %v3652 = vpop.f32.mrb[0].mxu0
      %3653 = vmatprep.mubr.f32.mxu0 %v1639
      %3654 = vmatmul.mubr.f32.gmra.mrb[0].mxu0 %v1637
      %v3655 = vpop.f32.mrb[0].mxu0
      %v3656 = vadd.f32 %v3531, %v3655
      %v3657 = vpop.f32.mrb[0].mxu0
      %3658 = vmatprep.mubr.f32.mxu0 %v1653
      %3659 = vmatmul.mubr.f32.gmra.mrb[0].mxu0 %v1651
      %v3660 = vpop.f32.mrb[0].mxu0
      %v3661 = vadd.f32 %v3536, %v3660
      %v3662 = vpop.f32.mrb[0].mxu0
      %3663 = vmatprep.mubr.f32.mxu0 %v1669
      %3664 = vmatmul.mubr.f32.gmra.mrb[0].mxu0 %v1667
      %v3665 = vpop.f32.mrb[0].mxu0
      %v3666 = vadd.f32 %v3541, %v3665
      %v3667 = vpop.f32.mrb[0].mxu0
      %3668 = vdwg.mxu0
      %3669 = vmatprep.subr.mxu0 0.0
      %3670 = vmatpush1.msra.mxu0 %v2146
      %3671 = vmatprep.subr.mxu0 0.0
      %3672 = vmatpush1.msra.mxu0 %v2147
      %3673 = vmatprep.subr.mxu0 0.0
      %3674 = vmatpush1.msra.mxu0 %v2148
      %3675 = vmatprep.subr.mxu0 0.0
      %3676 = vmatpush1.msra.mxu0 %v2149
      %3677 = vmatprep.subr.mxu0 0.0
      %3678 = vmatpush1.msra.mxu0 %v2150
      %3679 = vmatprep.subr.mxu0 0.0
      %3680 = vmatpush1.msra.mxu0 %v2151
      %3681 = vmatprep.subr.mxu0 0.0
      %3682 = vmatpush1.msra.mxu0 %v2152
      %3683 = vmatprep.subr.mxu0 0.0
      %3684 = vmatpush1.msra.mxu0 %v2153
      %3685 = vmatprep.subr.mxu0 0.0
      %3686 = vmatpush1.msra.mxu0 %v2154
      %3687 = vmatprep.subr.mxu0 0.0
      %3688 = vmatpush1.msra.mxu0 %v2155
      %3689 = vmatprep.subr.mxu0 0.0
      %3690 = vmatpush1.msra.mxu0 %v2156
      %3691 = vmatprep.subr.mxu0 0.0
      %3692 = vmatpush1.msra.mxu0 %v2157
      %3693 = vmatprep.subr.mxu0 0.0
      %3694 = vmatpush1.msra.mxu0 %v2158
      %3695 = vmatprep.subr.mxu0 0.0
      %3696 = vmatpush1.msra.mxu0 %v2159
      %3697 = vmatprep.subr.mxu0 0.0
      %3698 = vmatpush1.msra.mxu0 %v2160
      %3699 = vmatprep.subr.mxu0 0.0
      %3700 = vmatpush1.msra.mxu0 %v2161
      %3701 = vmatprep.subr.mxu0 0.0
      %3702 = vmatpush1.msra.mxu0 0.0
      %3703 = vmatprep.subr.mxu0 0.0
      %3704 = vmatpush1.msra.mxu0 0.0
      %3705 = vmatprep.subr.mxu0 0.0
      %3706 = vmatpush1.msra.mxu0 0.0
      %3707 = vmatprep.subr.mxu0 0.0
      %3708 = vmatpush1.msra.mxu0 0.0
      %3709 = vmatprep.subr.mxu0 0.0
      %3710 = vmatpush1.msra.mxu0 0.0
      %3711 = vmatprep.subr.mxu0 0.0
      %3712 = vmatpush1.msra.mxu0 0.0
      %3713 = vmatprep.subr.mxu0 0.0
      %3714 = vmatpush1.msra.mxu0 0.0
      %3715 = vmatprep.subr.mxu0 0.0
      %3716 = vmatpush1.msra.mxu0 0.0
      %3717 = vmatprep.subr.mxu0 0.0
      %3718 = vmatpush1.msra.mxu0 0.0
      %3719 = vmatprep.subr.mxu0 0.0
      %3720 = vmatpush1.msra.mxu0 0.0
      %3721 = vmatprep.subr.mxu0 0.0
      %3722 = vmatpush1.msra.mxu0 0.0
      %3723 = vmatprep.subr.mxu0 0.0
      %3724 = vmatpush1.msra.mxu0 0.0
      %3725 = vmatprep.subr.mxu0 0.0
      %3726 = vmatpush1.msra.mxu0 0.0
      %3727 = vmatprep.subr.mxu0 0.0
      %3728 = vmatpush1.msra.mxu0 0.0
      %3729 = vmatprep.subr.mxu0 0.0
      %3730 = vmatpush1.msra.mxu0 0.0
      %3731 = vmatprep.subr.mxu0 0.0
      %3732 = vmatpush1.msra.mxu0 0.0
      %3733 = vmatprep.mubr.f32.mxu0 0.0
      %3734 = vmatmul.mubr.f32.gmra.mrb[0].mxu0 %v1514
      %v3735 = vpop.f32.mrb[0].mxu0
      %v3736 = vadd.f32 %v3611, %v3735
      %v3737 = vpop.f32.mrb[0].mxu0
      %3738 = vmatprep.mubr.f32.mxu0 0.0
      %3739 = vmatmul.mubr.f32.gmra.mrb[0].mxu0 %v1529
      %v3740 = vpop.f32.mrb[0].mxu0
      %v3741 = vadd.f32 %v3616, %v3740
      %v3742 = vpop.f32.mrb[0].mxu0
      %3743 = vmatprep.mubr.f32.mxu0 0.0
      %3744 = vmatmul.mubr.f32.gmra.mrb[0].mxu0 %v1543
      %v3745 = vpop.f32.mrb[0].mxu0
      %v3746 = vadd.f32 %v3621, %v3745
      %v3747 = vpop.f32.mrb[0].mxu0
      %3748 = vmatprep.mubr.f32.mxu0 0.0
      %3749 = vmatmul.mubr.f32.gmra.mrb[0].mxu0 %v1557
      %v3750 = vpop.f32.mrb[0].mxu0
      %v3751 = vadd.f32 %v3626, %v3750
      %v3752 = vpop.f32.mrb[0].mxu0
      %3753 = vmatprep.mubr.f32.mxu0 0.0
      %3754 = vmatmul.mubr.f32.gmra.mrb[0].mxu0 %v1571
      %v3755 = vpop.f32.mrb[0].mxu0
      %v3756 = vadd.f32 %v3631, %v3755
      %v3757 = vpop.f32.mrb[0].mxu0
      %3758 = vmatprep.mubr.f32.mxu0 0.0
      %3759 = vmatmul.mubr.f32.gmra.mrb[0].mxu0 %v1585
      %v3760 = vpop.f32.mrb[0].mxu0
      %v3761 = vadd.f32 %v3636, %v3760
      %v3762 = vpop.f32.mrb[0].mxu0
      %3763 = vmatprep.mubr.f32.mxu0 0.0
      %3764 = vmatmul.mubr.f32.gmra.mrb[0].mxu0 %v1599
      %v3765 = vpop.f32.mrb[0].mxu0
      %v3766 = vadd.f32 %v3641, %v3765
      %v3767 = vpop.f32.mrb[0].mxu0
      %3768 = vmatprep.mubr.f32.mxu0 0.0
      %3769 = vmatmul.mubr.f32.gmra.mrb[0].mxu0 %v1613
      %v3770 = vpop.f32.mrb[0].mxu0
      %v3771 = vadd.f32 %v3646, %v3770
      %v3772 = vpop.f32.mrb[0].mxu0
      %3773 = vmatprep.mubr.f32.mxu0 0.0
      %3774 = vmatmul.mubr.f32.gmra.mrb[0].mxu0 %v1627
      %v3775 = vpop.f32.mrb[0].mxu0
      %v3776 = vadd.f32 %v3651, %v3775
      %v3777 = vpop.f32.mrb[0].mxu0
      %3778 = vmatprep.mubr.f32.mxu0 0.0
      %3779 = vmatmul.mubr.f32.gmra.mrb[0].mxu0 %v1641
      %v3780 = vpop.f32.mrb[0].mxu0
      %v3781 = vadd.f32 %v3656, %v3780
      %v3782 = vpop.f32.mrb[0].mxu0
      %3783 = vmatprep.mubr.f32.mxu0 0.0
      %3784 = vmatmul.mubr.f32.gmra.mrb[0].mxu0 %v1655
      %v3785 = vpop.f32.mrb[0].mxu0
      %v3786 = vadd.f32 %v3661, %v3785
      %v3787 = vpop.f32.mrb[0].mxu0
      %3788 = vmatprep.mubr.f32.mxu0 0.0
      %3789 = vmatmul.mubr.f32.gmra.mrb[0].mxu0 %v1671
      %v3790 = vpop.f32.mrb[0].mxu0
      %v3791 = vadd.f32 %v3666, %v3790
      %v3792 = vpop.f32.mrb[0].mxu0
      %3793 = vdwg.mxu0
      %v3801 = vrot.slane %v3736, 1
      %v3802 = vrot.slane %v3741, 1
      %v3803 = vsel %vm1140, %v3801, %v3802
      %v3804 = vrot.slane %v3751, 1
      %v3805 = vrot.slane %v3756, 1
      %v3806 = vsel %vm1140, %v3804, %v3805
      %v3807 = vrot.slane %v3766, 1
      %v3808 = vrot.slane %v3771, 1
      %v3809 = vsel %vm1140, %v3807, %v3808
      %v3810 = vrot.slane %v3781, 1
      %v3815 = vmax.f32 %v3736, %v3803
      %v3816 = vmax.f32 %v3751, %v3806
      %v3817 = vmax.f32 %v3766, %v3809
      %v3818 = vmax.f32 %v3781, %v3810
      %v3824 = vrot.slane %v3746, 1
      %v3825 = vsel %vm1140, %v3802, %v3824
      %v3826 = vsel %vm1140, %v3824, %v3804
      %v3827 = vrot.slane %v3761, 1
      %v3828 = vsel %vm1140, %v3805, %v3827
      %v3829 = vsel %vm1140, %v3827, %v3807
      %v3830 = vrot.slane %v3776, 1
      %v3831 = vsel %vm1140, %v3808, %v3830
      %v3832 = vsel %vm1140, %v3830, %v3810
      %v3833 = vrot.slane %v3786, 1
      %v3834 = vrot.slane %v3791, 1
      %v3835 = vsel %vm1140, %v3833, %v3834
      %v3844 = vmax.f32 %v3741, %v3825
      %v3845 = vmax.f32 %v3746, %v3826
      %v3846 = vmax.f32 %v3756, %v3828
      %v3847 = vmax.f32 %v3761, %v3829
      %v3848 = vmax.f32 %v3771, %v3831
      %v3849 = vmax.f32 %v3776, %v3832
      %v3850 = vmax.f32 %v3786, %v3835
      %v3851 = vmax.f32 %v3791, %v3834
      %v3860 = vrot.slane %v3844, 4
      %v3861 = vrot.slane %v3845, 4
      %v3862 = vsel %vm1248, %v3860, %v3861
      %v3863 = vrot.slane %v3846, 4
      %v3864 = vrot.slane %v3847, 4
      %v3865 = vsel %vm1248, %v3863, %v3864
      %v3866 = vrot.slane %v3848, 4
      %v3867 = vrot.slane %v3849, 4
      %v3868 = vsel %vm1248, %v3866, %v3867
      %v3869 = vrot.slane %v3850, 4
      %v3870 = vrot.slane %v3851, 4
      %v3871 = vsel %vm1248, %v3869, %v3870
      %v3876 = vmax.f32 %v3815, %v3862
      %v3877 = vmax.f32 %v3816, %v3865
      %v3878 = vmax.f32 %v3817, %v3868
      %v3879 = vmax.f32 %v3818, %v3871
      %v3880 = vmax.f32 %v3876, 0.0
      %v3881 = vmax.f32 %v3877, 0.0
      %v3882 = vmax.f32 %v3878, 0.0
      %v3883 = vmax.f32 %v3879, 0.0
      %v3885 = vrot.slane %v3880, 2
      %v3887 = vrot.slane %v3880, 4
      %v3889 = vrot.slane %v3880, 6
      %v3892 = vrot.slane %v3881, 2
      %v3894 = vrot.slane %v3881, 4
      %v3896 = vrot.slane %v3881, 6
      %v3899 = vrot.slane %v3882, 2
      %v3901 = vrot.slane %v3882, 4
      %v3903 = vrot.slane %v3882, 6
      %v3906 = vrot.slane %v3883, 2
      %v3908 = vrot.slane %v3883, 4
      %v3910 = vrot.slane %v3883, 6
      %v3912 = vld [vmem:[%s5] sm:$0xff]
      %v3913 = vld [vmem:[%s5 + $0x8] sm:$0xff]
      %v3914 = vld [vmem:[%s5 + $0x10] sm:$0xff]
      %v3915 = vld [vmem:[%s5 + $0x18] sm:$0xff]
      %v3916 = vld [vmem:[%s5 + $0x20] sm:$0xff]
      %v3917 = vld [vmem:[%s5 + $0x28] sm:$0xff]
      %v3918 = vld [vmem:[%s5 + $0x30] sm:$0xff]
      %v3919 = vld [vmem:[%s5 + $0x38] sm:$0xff]
      %v3920 = vld [vmem:[%s5 + $0x40] sm:$0xff]
      %v3921 = vld [vmem:[%s5 + $0x48] sm:$0xff]
      %v3922 = vld [vmem:[%s5 + $0x50] sm:$0xff]
      %v3923 = vld [vmem:[%s5 + $0x58] sm:$0xff]
      %v3924 = vld [vmem:[%s5 + $0x60] sm:$0xff]
      %v3925 = vld [vmem:[%s5 + $0x68] sm:$0xff]
      %v3926 = vld [vmem:[%s5 + $0x70] sm:$0xff]
      %v3927 = vld [vmem:[%s5 + $0x78] sm:$0xff]
      %v3928 = vld [vmem:[%s5 + $0x80] sm:$0xff]
      %v3929 = vld [vmem:[%s5 + $0x88] sm:$0xff]
      %v3930 = vld [vmem:[%s5 + $0x90] sm:$0xff]
      %v3931 = vld [vmem:[%s5 + $0x98] sm:$0xff]
      %v3932 = vld [vmem:[%s5 + $0xa0] sm:$0xff]
      %v3933 = vld [vmem:[%s5 + $0xa8] sm:$0xff]
      %v3934 = vld [vmem:[%s5 + $0xb0] sm:$0xff]
      %v3935 = vld [vmem:[%s5 + $0xb8] sm:$0xff]
      %v3936 = vld [vmem:[%s5 + $0xc0] sm:$0xff]
      %v3937 = vld [vmem:[%s5 + $0xc8] sm:$0xff]
      %v3938 = vld [vmem:[%s5 + $0xd0] sm:$0xff]
      %v3939 = vld [vmem:[%s5 + $0xd8] sm:$0xff]
      %v3940 = vld [vmem:[%s5 + $0xe0] sm:$0xff]
      %v3941 = vld [vmem:[%s5 + $0xe8] sm:$0xff]
      %v3942 = vld [vmem:[%s5 + $0xf0] sm:$0xff]
      %v3943 = vld [vmem:[%s5 + $0xf8] sm:$0xff]
      %v3944 = vld [vmem:[%s5 + $0x100] sm:$0xff]
      %v3945 = vld [vmem:[%s5 + $0x108] sm:$0xff]
      %v3946 = vld [vmem:[%s5 + $0x110] sm:$0xff]
      %v3947 = vld [vmem:[%s5 + $0x118] sm:$0xff]
      %v3948 = vld [vmem:[%s5 + $0x120] sm:$0xff]
      %v3949 = vld [vmem:[%s5 + $0x128] sm:$0xff]
      %v3950 = vld [vmem:[%s5 + $0x130] sm:$0xff]
      %v3951 = vld [vmem:[%s5 + $0x138] sm:$0xff]
      %v3952 = vld [vmem:[%s5 + $0x140] sm:$0xff]
      %v3953 = vld [vmem:[%s5 + $0x148] sm:$0xff]
      %v3954 = vld [vmem:[%s5 + $0x150] sm:$0xff]
      %v3955 = vld [vmem:[%s5 + $0x158] sm:$0xff]
      %v3956 = vld [vmem:[%s5 + $0x160] sm:$0xff]
      %v3957 = vld [vmem:[%s5 + $0x168] sm:$0xff]
      %v3958 = vld [vmem:[%s5 + $0x170] sm:$0xff]
      %v3959 = vld [vmem:[%s5 + $0x178] sm:$0xff]
      %v3960 = vld [vmem:[%s5 + $0x180] sm:$0xff]
      %v3961 = vld [vmem:[%s5 + $0x188] sm:$0xff]
      %v3962 = vld [vmem:[%s5 + $0x190] sm:$0xff]
      %v3963 = vld [vmem:[%s5 + $0x198] sm:$0xff]
      %v3964 = vld [vmem:[%s5 + $0x1a0] sm:$0xff]
      %v3965 = vld [vmem:[%s5 + $0x1a8] sm:$0xff]
      %v3966 = vld [vmem:[%s5 + $0x1b0] sm:$0xff]
      %v3967 = vld [vmem:[%s5 + $0x1b8] sm:$0xff]
      %v3968 = vld [vmem:[%s5 + $0x1c0] sm:$0xff]
      %v3969 = vld [vmem:[%s5 + $0x1c8] sm:$0xff]
      %v3970 = vld [vmem:[%s5 + $0x1d0] sm:$0xff]
      %v3971 = vld [vmem:[%s5 + $0x1d8] sm:$0xff]
      %v3972 = vld [vmem:[%s5 + $0x1e0] sm:$0xff]
      %v3973 = vld [vmem:[%s5 + $0x1e8] sm:$0xff]
      %v3974 = vld [vmem:[%s5 + $0x1f0] sm:$0xff]
      %v3975 = vld [vmem:[%s5 + $0x1f8] sm:$0xff]
      %v3976 = vld [vmem:[%s5 + $0x200] sm:$0xff]
      %v3977 = vld [vmem:[%s5 + $0x208] sm:$0xff]
      %v3978 = vld [vmem:[%s5 + $0x210] sm:$0xff]
      %v3979 = vld [vmem:[%s5 + $0x218] sm:$0xff]
      %v3980 = vld [vmem:[%s5 + $0x220] sm:$0xff]
      %v3981 = vld [vmem:[%s5 + $0x228] sm:$0xff]
      %v3982 = vld [vmem:[%s5 + $0x230] sm:$0xff]
      %v3983 = vld [vmem:[%s5 + $0x238] sm:$0xff]
      %v3984 = vld [vmem:[%s5 + $0x240] sm:$0xff]
      %v3985 = vld [vmem:[%s5 + $0x248] sm:$0xff]
      %v3986 = vld [vmem:[%s5 + $0x250] sm:$0xff]
      %v3987 = vld [vmem:[%s5 + $0x258] sm:$0xff]
      %v3988 = vld [vmem:[%s5 + $0x260] sm:$0xff]
      %v3989 = vld [vmem:[%s5 + $0x268] sm:$0xff]
      %v3990 = vld [vmem:[%s5 + $0x270] sm:$0xff]
      %v3991 = vld [vmem:[%s5 + $0x278] sm:$0xff]
      %v3992 = vld [vmem:[%s5 + $0x280] sm:$0xff]
      %v3993 = vld [vmem:[%s5 + $0x288] sm:$0xff]
      %v3994 = vld [vmem:[%s5 + $0x290] sm:$0xff]
      %v3995 = vld [vmem:[%s5 + $0x298] sm:$0xff]
      %v3996 = vld [vmem:[%s5 + $0x2a0] sm:$0xff]
      %v3997 = vld [vmem:[%s5 + $0x2a8] sm:$0xff]
      %v3998 = vld [vmem:[%s5 + $0x2b0] sm:$0xff]
      %v3999 = vld [vmem:[%s5 + $0x2b8] sm:$0xff]
      %v4000 = vld [vmem:[%s5 + $0x2c0] sm:$0xff]
      %v4001 = vld [vmem:[%s5 + $0x2c8] sm:$0xff]
      %v4002 = vld [vmem:[%s5 + $0x2d0] sm:$0xff]
      %v4003 = vld [vmem:[%s5 + $0x2d8] sm:$0xff]
      %v4004 = vld [vmem:[%s5 + $0x2e0] sm:$0xff]
      %v4005 = vld [vmem:[%s5 + $0x2e8] sm:$0xff]
      %v4006 = vld [vmem:[%s5 + $0x2f0] sm:$0xff]
      %v4007 = vld [vmem:[%s5 + $0x2f8] sm:$0xff]
      %v4008 = vld [vmem:[%s5 + $0x300] sm:$0xff]
      %v4009 = vld [vmem:[%s5 + $0x308] sm:$0xff]
      %v4010 = vld [vmem:[%s5 + $0x310] sm:$0xff]
      %v4011 = vld [vmem:[%s5 + $0x318] sm:$0xff]
      %v4012 = vld [vmem:[%s5 + $0x320] sm:$0xff]
      %v4013 = vld [vmem:[%s5 + $0x328] sm:$0xff]
      %v4014 = vld [vmem:[%s5 + $0x330] sm:$0xff]
      %v4015 = vld [vmem:[%s5 + $0x338] sm:$0xff]
      %v4016 = vld [vmem:[%s5 + $0x340] sm:$0xff]
      %v4017 = vld [vmem:[%s5 + $0x348] sm:$0xff]
      %v4018 = vld [vmem:[%s5 + $0x350] sm:$0xff]
      %v4019 = vld [vmem:[%s5 + $0x358] sm:$0xff]
      %v4020 = vld [vmem:[%s5 + $0x360] sm:$0xff]
      %v4021 = vld [vmem:[%s5 + $0x368] sm:$0xff]
      %v4022 = vld [vmem:[%s5 + $0x370] sm:$0xff]
      %v4023 = vld [vmem:[%s5 + $0x378] sm:$0xff]
      %v4024 = vld [vmem:[%s5 + $0x380] sm:$0xff]
      %v4025 = vld [vmem:[%s5 + $0x388] sm:$0xff]
      %v4026 = vld [vmem:[%s5 + $0x390] sm:$0xff]
      %v4027 = vld [vmem:[%s5 + $0x398] sm:$0xff]
      %v4028 = vld [vmem:[%s5 + $0x3a0] sm:$0xff]
      %v4029 = vld [vmem:[%s5 + $0x3a8] sm:$0xff]
      %v4030 = vld [vmem:[%s5 + $0x3b0] sm:$0xff]
      %v4031 = vld [vmem:[%s5 + $0x3b8] sm:$0xff]
      %v4032 = vld [vmem:[%s5 + $0x3c0] sm:$0xff]
      %v4033 = vld [vmem:[%s5 + $0x3c8] sm:$0xff]
      %v4034 = vld [vmem:[%s5 + $0x3d0] sm:$0xff]
      %v4035 = vld [vmem:[%s5 + $0x3d8] sm:$0xff]
      %v4036 = vld [vmem:[%s5 + $0x3e0] sm:$0xff]
      %v4037 = vld [vmem:[%s5 + $0x3e8] sm:$0xff]
      %v4038 = vld [vmem:[%s5 + $0x3f0] sm:$0xff]
      %v4039 = vld [vmem:[%s5 + $0x3f8] sm:$0xff]
      %v4040 = vld [vmem:[%s5 + $0x400] sm:$0xff]
      %v4041 = vld [vmem:[%s5 + $0x408] sm:$0xff]
      %v4042 = vld [vmem:[%s5 + $0x410] sm:$0xff]
      %v4043 = vld [vmem:[%s5 + $0x418] sm:$0xff]
      %v4044 = vld [vmem:[%s5 + $0x420] sm:$0xff]
      %v4045 = vld [vmem:[%s5 + $0x428] sm:$0xff]
      %v4046 = vld [vmem:[%s5 + $0x430] sm:$0xff]
      %v4047 = vld [vmem:[%s5 + $0x438] sm:$0xff]
      %v4048 = vld [vmem:[%s5 + $0x440] sm:$0xff]
      %v4049 = vld [vmem:[%s5 + $0x448] sm:$0xff]
      %v4050 = vld [vmem:[%s5 + $0x450] sm:$0xff]
      %v4051 = vld [vmem:[%s5 + $0x458] sm:$0xff]
      %v4052 = vld [vmem:[%s5 + $0x460] sm:$0xff]
      %v4053 = vld [vmem:[%s5 + $0x468] sm:$0xff]
      %v4054 = vld [vmem:[%s5 + $0x470] sm:$0xff]
      %v4055 = vld [vmem:[%s5 + $0x478] sm:$0xff]
      %v4056 = vld [vmem:[%s5 + $0x480] sm:$0xff]
      %v4057 = vld [vmem:[%s5 + $0x488] sm:$0xff]
      %v4058 = vld [vmem:[%s5 + $0x490] sm:$0xff]
      %v4059 = vld [vmem:[%s5 + $0x498] sm:$0xff]
      %v4060 = vld [vmem:[%s5 + $0x4a0] sm:$0xff]
      %v4061 = vld [vmem:[%s5 + $0x4a8] sm:$0xff]
      %v4062 = vld [vmem:[%s5 + $0x4b0] sm:$0xff]
      %v4063 = vld [vmem:[%s5 + $0x4b8] sm:$0xff]
      %v4064 = vld [vmem:[%s5 + $0x4c0] sm:$0xff]
      %v4065 = vld [vmem:[%s5 + $0x4c8] sm:$0xff]
      %v4066 = vld [vmem:[%s5 + $0x4d0] sm:$0xff]
      %v4067 = vld [vmem:[%s5 + $0x4d8] sm:$0xff]
      %v4068 = vld [vmem:[%s5 + $0x4e0] sm:$0xff]
      %v4069 = vld [vmem:[%s5 + $0x4e8] sm:$0xff]
      %v4070 = vld [vmem:[%s5 + $0x4f0] sm:$0xff]
      %v4071 = vld [vmem:[%s5 + $0x4f8] sm:$0xff]
      %v4072 = vld [vmem:[%s5 + $0x500] sm:$0xff]
      %v4073 = vld [vmem:[%s5 + $0x508] sm:$0xff]
      %v4074 = vld [vmem:[%s5 + $0x510] sm:$0xff]
      %v4075 = vld [vmem:[%s5 + $0x518] sm:$0xff]
      %v4076 = vld [vmem:[%s5 + $0x520] sm:$0xff]
      %v4077 = vld [vmem:[%s5 + $0x528] sm:$0xff]
      %v4078 = vld [vmem:[%s5 + $0x530] sm:$0xff]
      %v4079 = vld [vmem:[%s5 + $0x538] sm:$0xff]
      %v4080 = vld [vmem:[%s5 + $0x540] sm:$0xff]
      %v4081 = vld [vmem:[%s5 + $0x548] sm:$0xff]
      %v4082 = vld [vmem:[%s5 + $0x550] sm:$0xff]
      %v4083 = vld [vmem:[%s5 + $0x558] sm:$0xff]
      %v4084 = vld [vmem:[%s5 + $0x560] sm:$0xff]
      %v4085 = vld [vmem:[%s5 + $0x568] sm:$0xff]
      %v4086 = vld [vmem:[%s5 + $0x570] sm:$0xff]
      %v4087 = vld [vmem:[%s5 + $0x578] sm:$0xff]
      %v4088 = vld [vmem:[%s5 + $0x580] sm:$0xff]
      %v4089 = vld [vmem:[%s5 + $0x588] sm:$0xff]
      %v4090 = vld [vmem:[%s5 + $0x590] sm:$0xff]
      %v4091 = vld [vmem:[%s5 + $0x598] sm:$0xff]
      %v4092 = vld [vmem:[%s5 + $0x5a0] sm:$0xff]
      %v4093 = vld [vmem:[%s5 + $0x5a8] sm:$0xff]
      %v4094 = vld [vmem:[%s5 + $0x5b0] sm:$0xff]
      %v4095 = vld [vmem:[%s5 + $0x5b8] sm:$0xff]
      %v4096 = vld [vmem:[%s5 + $0x5c0] sm:$0xff]
      %v4097 = vld [vmem:[%s5 + $0x5c8] sm:$0xff]
      %v4098 = vld [vmem:[%s5 + $0x5d0] sm:$0xff]
      %v4099 = vld [vmem:[%s5 + $0x5d8] sm:$0xff]
      %v4100 = vld [vmem:[%s5 + $0x5e0] sm:$0xff]
      %v4101 = vld [vmem:[%s5 + $0x5e8] sm:$0xff]
      %v4102 = vld [vmem:[%s5 + $0x5f0] sm:$0xff]
      %v4103 = vld [vmem:[%s5 + $0x5f8] sm:$0xff]
      %v4104 = vld [vmem:[%s5 + $0x600] sm:$0xff]
      %v4105 = vld [vmem:[%s5 + $0x608] sm:$0xff]
      %v4106 = vld [vmem:[%s5 + $0x610] sm:$0xff]
      %v4107 = vld [vmem:[%s5 + $0x618] sm:$0xff]
      %v4108 = vld [vmem:[%s5 + $0x620] sm:$0xff]
      %v4109 = vld [vmem:[%s5 + $0x628] sm:$0xff]
      %v4110 = vld [vmem:[%s5 + $0x630] sm:$0xff]
      %v4111 = vld [vmem:[%s5 + $0x638] sm:$0xff]
      %v4112 = vld [vmem:[%s5 + $0x640] sm:$0xff]
      %v4113 = vld [vmem:[%s5 + $0x648] sm:$0xff]
      %v4114 = vld [vmem:[%s5 + $0x650] sm:$0xff]
      %v4115 = vld [vmem:[%s5 + $0x658] sm:$0xff]
      %v4116 = vld [vmem:[%s5 + $0x660] sm:$0xff]
      %v4117 = vld [vmem:[%s5 + $0x668] sm:$0xff]
      %v4118 = vld [vmem:[%s5 + $0x670] sm:$0xff]
      %v4119 = vld [vmem:[%s5 + $0x678] sm:$0xff]
      %v4120 = vld [vmem:[%s5 + $0x680] sm:$0xff]
      %v4121 = vld [vmem:[%s5 + $0x688] sm:$0xff]
      %v4122 = vld [vmem:[%s5 + $0x690] sm:$0xff]
      %v4123 = vld [vmem:[%s5 + $0x698] sm:$0xff]
      %v4124 = vld [vmem:[%s5 + $0x6a0] sm:$0xff]
      %v4125 = vld [vmem:[%s5 + $0x6a8] sm:$0xff]
      %v4126 = vld [vmem:[%s5 + $0x6b0] sm:$0xff]
      %v4127 = vld [vmem:[%s5 + $0x6b8] sm:$0xff]
      %v4128 = vld [vmem:[%s5 + $0x6c0] sm:$0xff]
      %v4129 = vld [vmem:[%s5 + $0x6c8] sm:$0xff]
      %v4130 = vld [vmem:[%s5 + $0x6d0] sm:$0xff]
      %v4131 = vld [vmem:[%s5 + $0x6d8] sm:$0xff]
      %v4132 = vld [vmem:[%s5 + $0x6e0] sm:$0xff]
      %v4133 = vld [vmem:[%s5 + $0x6e8] sm:$0xff]
      %v4134 = vld [vmem:[%s5 + $0x6f0] sm:$0xff]
      %v4135 = vld [vmem:[%s5 + $0x6f8] sm:$0xff]
      %v4136 = vld [vmem:[%s5 + $0x700] sm:$0xff]
      %v4137 = vld [vmem:[%s5 + $0x708] sm:$0xff]
      %v4138 = vld [vmem:[%s5 + $0x710] sm:$0xff]
      %v4139 = vld [vmem:[%s5 + $0x718] sm:$0xff]
      %v4140 = vld [vmem:[%s5 + $0x720] sm:$0xff]
      %v4141 = vld [vmem:[%s5 + $0x728] sm:$0xff]
      %v4142 = vld [vmem:[%s5 + $0x730] sm:$0xff]
      %v4143 = vld [vmem:[%s5 + $0x738] sm:$0xff]
      %v4144 = vld [vmem:[%s5 + $0x740] sm:$0xff]
      %v4145 = vld [vmem:[%s5 + $0x748] sm:$0xff]
      %v4146 = vld [vmem:[%s5 + $0x750] sm:$0xff]
      %v4147 = vld [vmem:[%s5 + $0x758] sm:$0xff]
      %v4148 = vld [vmem:[%s5 + $0x760] sm:$0xff]
      %v4149 = vld [vmem:[%s5 + $0x768] sm:$0xff]
      %v4150 = vld [vmem:[%s5 + $0x770] sm:$0xff]
      %v4151 = vld [vmem:[%s5 + $0x778] sm:$0xff]
      %v4152 = vld [vmem:[%s5 + $0x780] sm:$0xff]
      %v4153 = vld [vmem:[%s5 + $0x788] sm:$0xff]
      %v4154 = vld [vmem:[%s5 + $0x790] sm:$0xff]
      %v4155 = vld [vmem:[%s5 + $0x798] sm:$0xff]
      %v4156 = vld [vmem:[%s5 + $0x7a0] sm:$0xff]
      %v4157 = vld [vmem:[%s5 + $0x7a8] sm:$0xff]
      %v4158 = vld [vmem:[%s5 + $0x7b0] sm:$0xff]
      %v4159 = vld [vmem:[%s5 + $0x7b8] sm:$0xff]
      %v4160 = vld [vmem:[%s5 + $0x7c0] sm:$0xff]
      %v4161 = vld [vmem:[%s5 + $0x7c8] sm:$0xff]
      %v4162 = vld [vmem:[%s5 + $0x7d0] sm:$0xff]
      %v4163 = vld [vmem:[%s5 + $0x7d8] sm:$0xff]
      %v4164 = vld [vmem:[%s5 + $0x7e0] sm:$0xff]
      %v4165 = vld [vmem:[%s5 + $0x7e8] sm:$0xff]
      %v4166 = vld [vmem:[%s5 + $0x7f0] sm:$0xff]
      %v4167 = vld [vmem:[%s5 + $0x7f8] sm:$0xff]
      %v4168 = vld [vmem:[%s6] sm:$0x1]
      %4169 = vmatprep.subr.mxu0 0.0
      %4170 = vmatpush1.msra.mxu0 %v3912
      %4171 = vmatprep.subr.mxu0 0.0
      %4172 = vmatpush1.msra.mxu0 %v3913
      %4173 = vmatprep.subr.mxu0 0.0
      %4174 = vmatpush1.msra.mxu0 %v3914
      %4175 = vmatprep.subr.mxu0 0.0
      %4176 = vmatpush1.msra.mxu0 %v3915
      %4177 = vmatprep.subr.mxu0 0.0
      %4178 = vmatpush1.msra.mxu0 %v3916
      %4179 = vmatprep.subr.mxu0 0.0
      %4180 = vmatpush1.msra.mxu0 %v3917
      %4181 = vmatprep.subr.mxu0 0.0
      %4182 = vmatpush1.msra.mxu0 %v3918
      %4183 = vmatprep.subr.mxu0 0.0
      %4184 = vmatpush1.msra.mxu0 %v3919
      %4185 = vmatprep.subr.mxu0 0.0
      %4186 = vmatpush1.msra.mxu0 %v3920
      %4187 = vmatprep.subr.mxu0 0.0
      %4188 = vmatpush1.msra.mxu0 %v3921
      %4189 = vmatprep.subr.mxu0 0.0
      %4190 = vmatpush1.msra.mxu0 %v3922
      %4191 = vmatprep.subr.mxu0 0.0
      %4192 = vmatpush1.msra.mxu0 %v3923
      %4193 = vmatprep.subr.mxu0 0.0
      %4194 = vmatpush1.msra.mxu0 %v3924
      %4195 = vmatprep.subr.mxu0 0.0
      %4196 = vmatpush1.msra.mxu0 %v3925
      %4197 = vmatprep.subr.mxu0 0.0
      %4198 = vmatpush1.msra.mxu0 %v3926
      %4199 = vmatprep.subr.mxu0 0.0
      %4200 = vmatpush1.msra.mxu0 %v3927
      %4201 = vmatprep.subr.mxu0 0.0
      %4202 = vmatpush1.msra.mxu0 %v3928
      %4203 = vmatprep.subr.mxu0 0.0
      %4204 = vmatpush1.msra.mxu0 %v3929
      %4205 = vmatprep.subr.mxu0 0.0
      %4206 = vmatpush1.msra.mxu0 %v3930
      %4207 = vmatprep.subr.mxu0 0.0
      %4208 = vmatpush1.msra.mxu0 %v3931
      %4209 = vmatprep.subr.mxu0 0.0
      %4210 = vmatpush1.msra.mxu0 %v3932
      %4211 = vmatprep.subr.mxu0 0.0
      %4212 = vmatpush1.msra.mxu0 %v3933
      %4213 = vmatprep.subr.mxu0 0.0
      %4214 = vmatpush1.msra.mxu0 %v3934
      %4215 = vmatprep.subr.mxu0 0.0
      %4216 = vmatpush1.msra.mxu0 %v3935
      %4217 = vmatprep.subr.mxu0 0.0
      %4218 = vmatpush1.msra.mxu0 %v3936
      %4219 = vmatprep.subr.mxu0 0.0
      %4220 = vmatpush1.msra.mxu0 %v3937
      %4221 = vmatprep.subr.mxu0 0.0
      %4222 = vmatpush1.msra.mxu0 %v3938
      %4223 = vmatprep.subr.mxu0 0.0
      %4224 = vmatpush1.msra.mxu0 %v3939
      %4225 = vmatprep.subr.mxu0 0.0
      %4226 = vmatpush1.msra.mxu0 %v3940
      %4227 = vmatprep.subr.mxu0 0.0
      %4228 = vmatpush1.msra.mxu0 %v3941
      %4229 = vmatprep.subr.mxu0 0.0
      %4230 = vmatpush1.msra.mxu0 %v3942
      %4231 = vmatprep.subr.mxu0 0.0
      %4232 = vmatpush1.msra.mxu0 %v3943
      %4233 = vmatprep.mubr.f32.mxu0 %v3885
      %4234 = vmatmul.mubr.f32.gmra.mrb[0].mxu0 %v3880
      %v4235 = vpop.f32.mrb[0].mxu0
      %v4236 = vadd.f32 %v4168, %v4235
      %v4237 = vpop.f32.mrb[0].mxu0
      %4238 = vdwg.mxu0
      %4239 = vmatprep.subr.mxu0 0.0
      %4240 = vmatpush1.msra.mxu0 %v3944
      %4241 = vmatprep.subr.mxu0 0.0
      %4242 = vmatpush1.msra.mxu0 %v3945
      %4243 = vmatprep.subr.mxu0 0.0
      %4244 = vmatpush1.msra.mxu0 %v3946
      %4245 = vmatprep.subr.mxu0 0.0
      %4246 = vmatpush1.msra.mxu0 %v3947
      %4247 = vmatprep.subr.mxu0 0.0
      %4248 = vmatpush1.msra.mxu0 %v3948
      %4249 = vmatprep.subr.mxu0 0.0
      %4250 = vmatpush1.msra.mxu0 %v3949
      %4251 = vmatprep.subr.mxu0 0.0
      %4252 = vmatpush1.msra.mxu0 %v3950
      %4253 = vmatprep.subr.mxu0 0.0
      %4254 = vmatpush1.msra.mxu0 %v3951
      %4255 = vmatprep.subr.mxu0 0.0
      %4256 = vmatpush1.msra.mxu0 %v3952
      %4257 = vmatprep.subr.mxu0 0.0
      %4258 = vmatpush1.msra.mxu0 %v3953
      %4259 = vmatprep.subr.mxu0 0.0
      %4260 = vmatpush1.msra.mxu0 %v3954
      %4261 = vmatprep.subr.mxu0 0.0
      %4262 = vmatpush1.msra.mxu0 %v3955
      %4263 = vmatprep.subr.mxu0 0.0
      %4264 = vmatpush1.msra.mxu0 %v3956
      %4265 = vmatprep.subr.mxu0 0.0
      %4266 = vmatpush1.msra.mxu0 %v3957
      %4267 = vmatprep.subr.mxu0 0.0
      %4268 = vmatpush1.msra.mxu0 %v3958
      %4269 = vmatprep.subr.mxu0 0.0
      %4270 = vmatpush1.msra.mxu0 %v3959
      %4271 = vmatprep.subr.mxu0 0.0
      %4272 = vmatpush1.msra.mxu0 %v3960
      %4273 = vmatprep.subr.mxu0 0.0
      %4274 = vmatpush1.msra.mxu0 %v3961
      %4275 = vmatprep.subr.mxu0 0.0
      %4276 = vmatpush1.msra.mxu0 %v3962
      %4277 = vmatprep.subr.mxu0 0.0
      %4278 = vmatpush1.msra.mxu0 %v3963
      %4279 = vmatprep.subr.mxu0 0.0
      %4280 = vmatpush1.msra.mxu0 %v3964
      %4281 = vmatprep.subr.mxu0 0.0
      %4282 = vmatpush1.msra.mxu0 %v3965
      %4283 = vmatprep.subr.mxu0 0.0
      %4284 = vmatpush1.msra.mxu0 %v3966
      %4285 = vmatprep.subr.mxu0 0.0
      %4286 = vmatpush1.msra.mxu0 %v3967
      %4287 = vmatprep.subr.mxu0 0.0
      %4288 = vmatpush1.msra.mxu0 %v3968
      %4289 = vmatprep.subr.mxu0 0.0
      %4290 = vmatpush1.msra.mxu0 %v3969
      %4291 = vmatprep.subr.mxu0 0.0
      %4292 = vmatpush1.msra.mxu0 %v3970
      %4293 = vmatprep.subr.mxu0 0.0
      %4294 = vmatpush1.msra.mxu0 %v3971
      %4295 = vmatprep.subr.mxu0 0.0
      %4296 = vmatpush1.msra.mxu0 %v3972
      %4297 = vmatprep.subr.mxu0 0.0
      %4298 = vmatpush1.msra.mxu0 %v3973
      %4299 = vmatprep.subr.mxu0 0.0
      %4300 = vmatpush1.msra.mxu0 %v3974
      %4301 = vmatprep.subr.mxu0 0.0
      %4302 = vmatpush1.msra.mxu0 %v3975
      %4303 = vmatprep.mubr.f32.mxu0 %v3889
      %4304 = vmatmul.mubr.f32.gmra.mrb[0].mxu0 %v3887
      %v4305 = vpop.f32.mrb[0].mxu0
      %v4306 = vadd.f32 %v4236, %v4305
      %v4307 = vpop.f32.mrb[0].mxu0
      %4308 = vdwg.mxu0
      %4309 = vmatprep.subr.mxu0 0.0
      %4310 = vmatpush1.msra.mxu0 %v3976
      %4311 = vmatprep.subr.mxu0 0.0
      %4312 = vmatpush1.msra.mxu0 %v3977
      %4313 = vmatprep.subr.mxu0 0.0
      %4314 = vmatpush1.msra.mxu0 %v3978
      %4315 = vmatprep.subr.mxu0 0.0
      %4316 = vmatpush1.msra.mxu0 %v3979
      %4317 = vmatprep.subr.mxu0 0.0
      %4318 = vmatpush1.msra.mxu0 %v3980
      %4319 = vmatprep.subr.mxu0 0.0
      %4320 = vmatpush1.msra.mxu0 %v3981
      %4321 = vmatprep.subr.mxu0 0.0
      %4322 = vmatpush1.msra.mxu0 %v3982
      %4323 = vmatprep.subr.mxu0 0.0
      %4324 = vmatpush1.msra.mxu0 %v3983
      %4325 = vmatprep.subr.mxu0 0.0
      %4326 = vmatpush1.msra.mxu0 %v3984
      %4327 = vmatprep.subr.mxu0 0.0
      %4328 = vmatpush1.msra.mxu0 %v3985
      %4329 = vmatprep.subr.mxu0 0.0
      %4330 = vmatpush1.msra.mxu0 %v3986
      %4331 = vmatprep.subr.mxu0 0.0
      %4332 = vmatpush1.msra.mxu0 %v3987
      %4333 = vmatprep.subr.mxu0 0.0
      %4334 = vmatpush1.msra.mxu0 %v3988
      %4335 = vmatprep.subr.mxu0 0.0
      %4336 = vmatpush1.msra.mxu0 %v3989
      %4337 = vmatprep.subr.mxu0 0.0
      %4338 = vmatpush1.msra.mxu0 %v3990
      %4339 = vmatprep.subr.mxu0 0.0
      %4340 = vmatpush1.msra.mxu0 %v3991
      %4341 = vmatprep.subr.mxu0 0.0
      %4342 = vmatpush1.msra.mxu0 %v3992
      %4343 = vmatprep.subr.mxu0 0.0
      %4344 = vmatpush1.msra.mxu0 %v3993
      %4345 = vmatprep.subr.mxu0 0.0
      %4346 = vmatpush1.msra.mxu0 %v3994
      %4347 = vmatprep.subr.mxu0 0.0
      %4348 = vmatpush1.msra.mxu0 %v3995
      %4349 = vmatprep.subr.mxu0 0.0
      %4350 = vmatpush1.msra.mxu0 %v3996
      %4351 = vmatprep.subr.mxu0 0.0
      %4352 = vmatpush1.msra.mxu0 %v3997
      %4353 = vmatprep.subr.mxu0 0.0
      %4354 = vmatpush1.msra.mxu0 %v3998
      %4355 = vmatprep.subr.mxu0 0.0
      %4356 = vmatpush1.msra.mxu0 %v3999
      %4357 = vmatprep.subr.mxu0 0.0
      %4358 = vmatpush1.msra.mxu0 %v4000
      %4359 = vmatprep.subr.mxu0 0.0
      %4360 = vmatpush1.msra.mxu0 %v4001
      %4361 = vmatprep.subr.mxu0 0.0
      %4362 = vmatpush1.msra.mxu0 %v4002
      %4363 = vmatprep.subr.mxu0 0.0
      %4364 = vmatpush1.msra.mxu0 %v4003
      %4365 = vmatprep.subr.mxu0 0.0
      %4366 = vmatpush1.msra.mxu0 %v4004
      %4367 = vmatprep.subr.mxu0 0.0
      %4368 = vmatpush1.msra.mxu0 %v4005
      %4369 = vmatprep.subr.mxu0 0.0
      %4370 = vmatpush1.msra.mxu0 %v4006
      %4371 = vmatprep.subr.mxu0 0.0
      %4372 = vmatpush1.msra.mxu0 %v4007
      %4373 = vmatprep.mubr.f32.mxu0 %v3892
      %4374 = vmatmul.mubr.f32.gmra.mrb[0].mxu0 %v3881
      %v4375 = vpop.f32.mrb[0].mxu0
      %v4376 = vadd.f32 %v4306, %v4375
      %v4377 = vpop.f32.mrb[0].mxu0
      %4378 = vdwg.mxu0
      %4379 = vmatprep.subr.mxu0 0.0
      %4380 = vmatpush1.msra.mxu0 %v4008
      %4381 = vmatprep.subr.mxu0 0.0
      %4382 = vmatpush1.msra.mxu0 %v4009
      %4383 = vmatprep.subr.mxu0 0.0
      %4384 = vmatpush1.msra.mxu0 %v4010
      %4385 = vmatprep.subr.mxu0 0.0
      %4386 = vmatpush1.msra.mxu0 %v4011
      %4387 = vmatprep.subr.mxu0 0.0
      %4388 = vmatpush1.msra.mxu0 %v4012
      %4389 = vmatprep.subr.mxu0 0.0
      %4390 = vmatpush1.msra.mxu0 %v4013
      %4391 = vmatprep.subr.mxu0 0.0
      %4392 = vmatpush1.msra.mxu0 %v4014
      %4393 = vmatprep.subr.mxu0 0.0
      %4394 = vmatpush1.msra.mxu0 %v4015
      %4395 = vmatprep.subr.mxu0 0.0
      %4396 = vmatpush1.msra.mxu0 %v4016
      %4397 = vmatprep.subr.mxu0 0.0
      %4398 = vmatpush1.msra.mxu0 %v4017
      %4399 = vmatprep.subr.mxu0 0.0
      %4400 = vmatpush1.msra.mxu0 %v4018
      %4401 = vmatprep.subr.mxu0 0.0
      %4402 = vmatpush1.msra.mxu0 %v4019
      %4403 = vmatprep.subr.mxu0 0.0
      %4404 = vmatpush1.msra.mxu0 %v4020
      %4405 = vmatprep.subr.mxu0 0.0
      %4406 = vmatpush1.msra.mxu0 %v4021
      %4407 = vmatprep.subr.mxu0 0.0
      %4408 = vmatpush1.msra.mxu0 %v4022
      %4409 = vmatprep.subr.mxu0 0.0
      %4410 = vmatpush1.msra.mxu0 %v4023
      %4411 = vmatprep.subr.mxu0 0.0
      %4412 = vmatpush1.msra.mxu0 %v4024
      %4413 = vmatprep.subr.mxu0 0.0
      %4414 = vmatpush1.msra.mxu0 %v4025
      %4415 = vmatprep.subr.mxu0 0.0
      %4416 = vmatpush1.msra.mxu0 %v4026
      %4417 = vmatprep.subr.mxu0 0.0
      %4418 = vmatpush1.msra.mxu0 %v4027
      %4419 = vmatprep.subr.mxu0 0.0
      %4420 = vmatpush1.msra.mxu0 %v4028
      %4421 = vmatprep.subr.mxu0 0.0
      %4422 = vmatpush1.msra.mxu0 %v4029
      %4423 = vmatprep.subr.mxu0 0.0
      %4424 = vmatpush1.msra.mxu0 %v4030
      %4425 = vmatprep.subr.mxu0 0.0
      %4426 = vmatpush1.msra.mxu0 %v4031
      %4427 = vmatprep.subr.mxu0 0.0
      %4428 = vmatpush1.msra.mxu0 %v4032
      %4429 = vmatprep.subr.mxu0 0.0
      %4430 = vmatpush1.msra.mxu0 %v4033
      %4431 = vmatprep.subr.mxu0 0.0
      %4432 = vmatpush1.msra.mxu0 %v4034
      %4433 = vmatprep.subr.mxu0 0.0
      %4434 = vmatpush1.msra.mxu0 %v4035
      %4435 = vmatprep.subr.mxu0 0.0
      %4436 = vmatpush1.msra.mxu0 %v4036
      %4437 = vmatprep.subr.mxu0 0.0
      %4438 = vmatpush1.msra.mxu0 %v4037
      %4439 = vmatprep.subr.mxu0 0.0
      %4440 = vmatpush1.msra.mxu0 %v4038
      %4441 = vmatprep.subr.mxu0 0.0
      %4442 = vmatpush1.msra.mxu0 %v4039
      %4443 = vmatprep.mubr.f32.mxu0 %v3896
      %4444 = vmatmul.mubr.f32.gmra.mrb[0].mxu0 %v3894
      %v4445 = vpop.f32.mrb[0].mxu0
      %v4446 = vadd.f32 %v4376, %v4445
      %v4447 = vpop.f32.mrb[0].mxu0
      %4448 = vdwg.mxu0
      %4449 = vmatprep.subr.mxu0 0.0
      %4450 = vmatpush1.msra.mxu0 %v4040
      %4451 = vmatprep.subr.mxu0 0.0
      %4452 = vmatpush1.msra.mxu0 %v4041
      %4453 = vmatprep.subr.mxu0 0.0
      %4454 = vmatpush1.msra.mxu0 %v4042
      %4455 = vmatprep.subr.mxu0 0.0
      %4456 = vmatpush1.msra.mxu0 %v4043
      %4457 = vmatprep.subr.mxu0 0.0
      %4458 = vmatpush1.msra.mxu0 %v4044
      %4459 = vmatprep.subr.mxu0 0.0
      %4460 = vmatpush1.msra.mxu0 %v4045
      %4461 = vmatprep.subr.mxu0 0.0
      %4462 = vmatpush1.msra.mxu0 %v4046
      %4463 = vmatprep.subr.mxu0 0.0
      %4464 = vmatpush1.msra.mxu0 %v4047
      %4465 = vmatprep.subr.mxu0 0.0
      %4466 = vmatpush1.msra.mxu0 %v4048
      %4467 = vmatprep.subr.mxu0 0.0
      %4468 = vmatpush1.msra.mxu0 %v4049
      %4469 = vmatprep.subr.mxu0 0.0
      %4470 = vmatpush1.msra.mxu0 %v4050
      %4471 = vmatprep.subr.mxu0 0.0
      %4472 = vmatpush1.msra.mxu0 %v4051
      %4473 = vmatprep.subr.mxu0 0.0
      %4474 = vmatpush1.msra.mxu0 %v4052
      %4475 = vmatprep.subr.mxu0 0.0
      %4476 = vmatpush1.msra.mxu0 %v4053
      %4477 = vmatprep.subr.mxu0 0.0
      %4478 = vmatpush1.msra.mxu0 %v4054
      %4479 = vmatprep.subr.mxu0 0.0
      %4480 = vmatpush1.msra.mxu0 %v4055
      %4481 = vmatprep.subr.mxu0 0.0
      %4482 = vmatpush1.msra.mxu0 %v4056
      %4483 = vmatprep.subr.mxu0 0.0
      %4484 = vmatpush1.msra.mxu0 %v4057
      %4485 = vmatprep.subr.mxu0 0.0
      %4486 = vmatpush1.msra.mxu0 %v4058
      %4487 = vmatprep.subr.mxu0 0.0
      %4488 = vmatpush1.msra.mxu0 %v4059
      %4489 = vmatprep.subr.mxu0 0.0
      %4490 = vmatpush1.msra.mxu0 %v4060
      %4491 = vmatprep.subr.mxu0 0.0
      %4492 = vmatpush1.msra.mxu0 %v4061
      %4493 = vmatprep.subr.mxu0 0.0
      %4494 = vmatpush1.msra.mxu0 %v4062
      %4495 = vmatprep.subr.mxu0 0.0
      %4496 = vmatpush1.msra.mxu0 %v4063
      %4497 = vmatprep.subr.mxu0 0.0
      %4498 = vmatpush1.msra.mxu0 %v4064
      %4499 = vmatprep.subr.mxu0 0.0
      %4500 = vmatpush1.msra.mxu0 %v4065
      %4501 = vmatprep.subr.mxu0 0.0
      %4502 = vmatpush1.msra.mxu0 %v4066
      %4503 = vmatprep.subr.mxu0 0.0
      %4504 = vmatpush1.msra.mxu0 %v4067
      %4505 = vmatprep.subr.mxu0 0.0
      %4506 = vmatpush1.msra.mxu0 %v4068
      %4507 = vmatprep.subr.mxu0 0.0
      %4508 = vmatpush1.msra.mxu0 %v4069
      %4509 = vmatprep.subr.mxu0 0.0
      %4510 = vmatpush1.msra.mxu0 %v4070
      %4511 = vmatprep.subr.mxu0 0.0
      %4512 = vmatpush1.msra.mxu0 %v4071
      %4513 = vmatprep.mubr.f32.mxu0 %v3899
      %4514 = vmatmul.mubr.f32.gmra.mrb[0].mxu0 %v3882
      %v4515 = vpop.f32.mrb[0].mxu0
      %v4516 = vadd.f32 %v4446, %v4515
      %v4517 = vpop.f32.mrb[0].mxu0
      %4518 = vdwg.mxu0
      %4519 = vmatprep.subr.mxu0 0.0
      %4520 = vmatpush1.msra.mxu0 %v4072
      %4521 = vmatprep.subr.mxu0 0.0
      %4522 = vmatpush1.msra.mxu0 %v4073
      %4523 = vmatprep.subr.mxu0 0.0
      %4524 = vmatpush1.msra.mxu0 %v4074
      %4525 = vmatprep.subr.mxu0 0.0
      %4526 = vmatpush1.msra.mxu0 %v4075
      %4527 = vmatprep.subr.mxu0 0.0
      %4528 = vmatpush1.msra.mxu0 %v4076
      %4529 = vmatprep.subr.mxu0 0.0
      %4530 = vmatpush1.msra.mxu0 %v4077
      %4531 = vmatprep.subr.mxu0 0.0
      %4532 = vmatpush1.msra.mxu0 %v4078
      %4533 = vmatprep.subr.mxu0 0.0
      %4534 = vmatpush1.msra.mxu0 %v4079
      %4535 = vmatprep.subr.mxu0 0.0
      %4536 = vmatpush1.msra.mxu0 %v4080
      %4537 = vmatprep.subr.mxu0 0.0
      %4538 = vmatpush1.msra.mxu0 %v4081
      %4539 = vmatprep.subr.mxu0 0.0
      %4540 = vmatpush1.msra.mxu0 %v4082
      %4541 = vmatprep.subr.mxu0 0.0
      %4542 = vmatpush1.msra.mxu0 %v4083
      %4543 = vmatprep.subr.mxu0 0.0
      %4544 = vmatpush1.msra.mxu0 %v4084
      %4545 = vmatprep.subr.mxu0 0.0
      %4546 = vmatpush1.msra.mxu0 %v4085
      %4547 = vmatprep.subr.mxu0 0.0
      %4548 = vmatpush1.msra.mxu0 %v4086
      %4549 = vmatprep.subr.mxu0 0.0
      %4550 = vmatpush1.msra.mxu0 %v4087
      %4551 = vmatprep.subr.mxu0 0.0
      %4552 = vmatpush1.msra.mxu0 %v4088
      %4553 = vmatprep.subr.mxu0 0.0
      %4554 = vmatpush1.msra.mxu0 %v4089
      %4555 = vmatprep.subr.mxu0 0.0
      %4556 = vmatpush1.msra.mxu0 %v4090
      %4557 = vmatprep.subr.mxu0 0.0
      %4558 = vmatpush1.msra.mxu0 %v4091
      %4559 = vmatprep.subr.mxu0 0.0
      %4560 = vmatpush1.msra.mxu0 %v4092
      %4561 = vmatprep.subr.mxu0 0.0
      %4562 = vmatpush1.msra.mxu0 %v4093
      %4563 = vmatprep.subr.mxu0 0.0
      %4564 = vmatpush1.msra.mxu0 %v4094
      %4565 = vmatprep.subr.mxu0 0.0
      %4566 = vmatpush1.msra.mxu0 %v4095
      %4567 = vmatprep.subr.mxu0 0.0
      %4568 = vmatpush1.msra.mxu0 %v4096
      %4569 = vmatprep.subr.mxu0 0.0
      %4570 = vmatpush1.msra.mxu0 %v4097
      %4571 = vmatprep.subr.mxu0 0.0
      %4572 = vmatpush1.msra.mxu0 %v4098
      %4573 = vmatprep.subr.mxu0 0.0
      %4574 = vmatpush1.msra.mxu0 %v4099
      %4575 = vmatprep.subr.mxu0 0.0
      %4576 = vmatpush1.msra.mxu0 %v4100
      %4577 = vmatprep.subr.mxu0 0.0
      %4578 = vmatpush1.msra.mxu0 %v4101
      %4579 = vmatprep.subr.mxu0 0.0
      %4580 = vmatpush1.msra.mxu0 %v4102
      %4581 = vmatprep.subr.mxu0 0.0
      %4582 = vmatpush1.msra.mxu0 %v4103
      %4583 = vmatprep.mubr.f32.mxu0 %v3903
      %4584 = vmatmul.mubr.f32.gmra.mrb[0].mxu0 %v3901
      %v4585 = vpop.f32.mrb[0].mxu0
      %v4586 = vadd.f32 %v4516, %v4585
      %v4587 = vpop.f32.mrb[0].mxu0
      %4588 = vdwg.mxu0
      %4589 = vmatprep.subr.mxu0 0.0
      %4590 = vmatpush1.msra.mxu0 %v4104
      %4591 = vmatprep.subr.mxu0 0.0
      %4592 = vmatpush1.msra.mxu0 %v4105
      %4593 = vmatprep.subr.mxu0 0.0
      %4594 = vmatpush1.msra.mxu0 %v4106
      %4595 = vmatprep.subr.mxu0 0.0
      %4596 = vmatpush1.msra.mxu0 %v4107
      %4597 = vmatprep.subr.mxu0 0.0
      %4598 = vmatpush1.msra.mxu0 %v4108
      %4599 = vmatprep.subr.mxu0 0.0
      %4600 = vmatpush1.msra.mxu0 %v4109
      %4601 = vmatprep.subr.mxu0 0.0
      %4602 = vmatpush1.msra.mxu0 %v4110
      %4603 = vmatprep.subr.mxu0 0.0
      %4604 = vmatpush1.msra.mxu0 %v4111
      %4605 = vmatprep.subr.mxu0 0.0
      %4606 = vmatpush1.msra.mxu0 %v4112
      %4607 = vmatprep.subr.mxu0 0.0
      %4608 = vmatpush1.msra.mxu0 %v4113
      %4609 = vmatprep.subr.mxu0 0.0
      %4610 = vmatpush1.msra.mxu0 %v4114
      %4611 = vmatprep.subr.mxu0 0.0
      %4612 = vmatpush1.msra.mxu0 %v4115
      %4613 = vmatprep.subr.mxu0 0.0
      %4614 = vmatpush1.msra.mxu0 %v4116
      %4615 = vmatprep.subr.mxu0 0.0
      %4616 = vmatpush1.msra.mxu0 %v4117
      %4617 = vmatprep.subr.mxu0 0.0
      %4618 = vmatpush1.msra.mxu0 %v4118
      %4619 = vmatprep.subr.mxu0 0.0
      %4620 = vmatpush1.msra.mxu0 %v4119
      %4621 = vmatprep.subr.mxu0 0.0
      %4622 = vmatpush1.msra.mxu0 %v4120
      %4623 = vmatprep.subr.mxu0 0.0
      %4624 = vmatpush1.msra.mxu0 %v4121
      %4625 = vmatprep.subr.mxu0 0.0
      %4626 = vmatpush1.msra.mxu0 %v4122
      %4627 = vmatprep.subr.mxu0 0.0
      %4628 = vmatpush1.msra.mxu0 %v4123
      %4629 = vmatprep.subr.mxu0 0.0
      %4630 = vmatpush1.msra.mxu0 %v4124
      %4631 = vmatprep.subr.mxu0 0.0
      %4632 = vmatpush1.msra.mxu0 %v4125
      %4633 = vmatprep.subr.mxu0 0.0
      %4634 = vmatpush1.msra.mxu0 %v4126
      %4635 = vmatprep.subr.mxu0 0.0
      %4636 = vmatpush1.msra.mxu0 %v4127
      %4637 = vmatprep.subr.mxu0 0.0
      %4638 = vmatpush1.msra.mxu0 %v4128
      %4639 = vmatprep.subr.mxu0 0.0
      %4640 = vmatpush1.msra.mxu0 %v4129
      %4641 = vmatprep.subr.mxu0 0.0
      %4642 = vmatpush1.msra.mxu0 %v4130
      %4643 = vmatprep.subr.mxu0 0.0
      %4644 = vmatpush1.msra.mxu0 %v4131
      %4645 = vmatprep.subr.mxu0 0.0
      %4646 = vmatpush1.msra.mxu0 %v4132
      %4647 = vmatprep.subr.mxu0 0.0
      %4648 = vmatpush1.msra.mxu0 %v4133
      %4649 = vmatprep.subr.mxu0 0.0
      %4650 = vmatpush1.msra.mxu0 %v4134
      %4651 = vmatprep.subr.mxu0 0.0
      %4652 = vmatpush1.msra.mxu0 %v4135
      %4653 = vmatprep.mubr.f32.mxu0 %v3906
      %4654 = vmatmul.mubr.f32.gmra.mrb[0].mxu0 %v3883
      %v4655 = vpop.f32.mrb[0].mxu0
      %v4656 = vadd.f32 %v4586, %v4655
      %v4657 = vpop.f32.mrb[0].mxu0
      %4658 = vdwg.mxu0
      %4659 = vmatprep.subr.mxu0 0.0
      %4660 = vmatpush1.msra.mxu0 %v4136
      %4661 = vmatprep.subr.mxu0 0.0
      %4662 = vmatpush1.msra.mxu0 %v4137
      %4663 = vmatprep.subr.mxu0 0.0
      %4664 = vmatpush1.msra.mxu0 %v4138
      %4665 = vmatprep.subr.mxu0 0.0
      %4666 = vmatpush1.msra.mxu0 %v4139
      %4667 = vmatprep.subr.mxu0 0.0
      %4668 = vmatpush1.msra.mxu0 %v4140
      %4669 = vmatprep.subr.mxu0 0.0
      %4670 = vmatpush1.msra.mxu0 %v4141
      %4671 = vmatprep.subr.mxu0 0.0
      %4672 = vmatpush1.msra.mxu0 %v4142
      %4673 = vmatprep.subr.mxu0 0.0
      %4674 = vmatpush1.msra.mxu0 %v4143
      %4675 = vmatprep.subr.mxu0 0.0
      %4676 = vmatpush1.msra.mxu0 %v4144
      %4677 = vmatprep.subr.mxu0 0.0
      %4678 = vmatpush1.msra.mxu0 %v4145
      %4679 = vmatprep.subr.mxu0 0.0
      %4680 = vmatpush1.msra.mxu0 %v4146
      %4681 = vmatprep.subr.mxu0 0.0
      %4682 = vmatpush1.msra.mxu0 %v4147
      %4683 = vmatprep.subr.mxu0 0.0
      %4684 = vmatpush1.msra.mxu0 %v4148
      %4685 = vmatprep.subr.mxu0 0.0
      %4686 = vmatpush1.msra.mxu0 %v4149
      %4687 = vmatprep.subr.mxu0 0.0
      %4688 = vmatpush1.msra.mxu0 %v4150
      %4689 = vmatprep.subr.mxu0 0.0
      %4690 = vmatpush1.msra.mxu0 %v4151
      %4691 = vmatprep.subr.mxu0 0.0
      %4692 = vmatpush1.msra.mxu0 %v4152
      %4693 = vmatprep.subr.mxu0 0.0
      %4694 = vmatpush1.msra.mxu0 %v4153
      %4695 = vmatprep.subr.mxu0 0.0
      %4696 = vmatpush1.msra.mxu0 %v4154
      %4697 = vmatprep.subr.mxu0 0.0
      %4698 = vmatpush1.msra.mxu0 %v4155
      %4699 = vmatprep.subr.mxu0 0.0
      %4700 = vmatpush1.msra.mxu0 %v4156
      %4701 = vmatprep.subr.mxu0 0.0
      %4702 = vmatpush1.msra.mxu0 %v4157
      %4703 = vmatprep.subr.mxu0 0.0
      %4704 = vmatpush1.msra.mxu0 %v4158
      %4705 = vmatprep.subr.mxu0 0.0
      %4706 = vmatpush1.msra.mxu0 %v4159
      %4707 = vmatprep.subr.mxu0 0.0
      %4708 = vmatpush1.msra.mxu0 %v4160
      %4709 = vmatprep.subr.mxu0 0.0
      %4710 = vmatpush1.msra.mxu0 %v4161
      %4711 = vmatprep.subr.mxu0 0.0
      %4712 = vmatpush1.msra.mxu0 %v4162
      %4713 = vmatprep.subr.mxu0 0.0
      %4714 = vmatpush1.msra.mxu0 %v4163
      %4715 = vmatprep.subr.mxu0 0.0
      %4716 = vmatpush1.msra.mxu0 %v4164
      %4717 = vmatprep.subr.mxu0 0.0
      %4718 = vmatpush1.msra.mxu0 %v4165
      %4719 = vmatprep.subr.mxu0 0.0
      %4720 = vmatpush1.msra.mxu0 %v4166
      %4721 = vmatprep.subr.mxu0 0.0
      %4722 = vmatpush1.msra.mxu0 %v4167
      %4723 = vmatprep.mubr.f32.mxu0 %v3910
      %4724 = vmatmul.mubr.f32.gmra.mrb[0].mxu0 %v3908
      %v4725 = vpop.f32.mrb[0].mxu0
      %v4726 = vadd.f32 %v4656, %v4725
      %v4727 = vpop.f32.mrb[0].mxu0
      %4728 = vdwg.mxu0
      %v4729 = vmax.f32 %v4726, 0.0
      %v4730 = vld [vmem:[%s7] sm:$0xff]
      %v4731 = vld [vmem:[%s7 + $0x8] sm:$0xff]
      %v4732 = vld [vmem:[%s7 + $0x10] sm:$0xff]
      %v4733 = vld [vmem:[%s7 + $0x18] sm:$0xff]
      %v4734 = vld [vmem:[%s7 + $0x20] sm:$0xff]
      %v4735 = vld [vmem:[%s7 + $0x28] sm:$0xff]
      %v4736 = vld [vmem:[%s7 + $0x30] sm:$0xff]
      %v4737 = vld [vmem:[%s7 + $0x38] sm:$0xff]
      %v4738 = vld [vmem:[%s7 + $0x40] sm:$0xff]
      %v4739 = vld [vmem:[%s7 + $0x48] sm:$0xff]
      %v4740 = vld [vmem:[%s7 + $0x50] sm:$0xff]
      %v4741 = vld [vmem:[%s7 + $0x58] sm:$0xff]
      %v4742 = vld [vmem:[%s7 + $0x60] sm:$0xff]
      %v4743 = vld [vmem:[%s7 + $0x68] sm:$0xff]
      %v4744 = vld [vmem:[%s7 + $0x70] sm:$0xff]
      %v4745 = vld [vmem:[%s7 + $0x78] sm:$0xff]
      %v4746 = vld [vmem:[%s8] sm:$0x1]
      %4747 = vmatprep.subr.mxu0 0.0
      %4748 = vmatpush1.msra.mxu0 %v4730
      %4749 = vmatprep.subr.mxu0 0.0
      %4750 = vmatpush1.msra.mxu0 %v4731
      %4751 = vmatprep.subr.mxu0 0.0
      %4752 = vmatpush1.msra.mxu0 %v4732
      %4753 = vmatprep.subr.mxu0 0.0
      %4754 = vmatpush1.msra.mxu0 %v4733
      %4755 = vmatprep.subr.mxu0 0.0
      %4756 = vmatpush1.msra.mxu0 %v4734
      %4757 = vmatprep.subr.mxu0 0.0
      %4758 = vmatpush1.msra.mxu0 %v4735
      %4759 = vmatprep.subr.mxu0 0.0
      %4760 = vmatpush1.msra.mxu0 %v4736
      %4761 = vmatprep.subr.mxu0 0.0
      %4762 = vmatpush1.msra.mxu0 %v4737
      %4763 = vmatprep.subr.mxu0 0.0
      %4764 = vmatpush1.msra.mxu0 %v4738
      %4765 = vmatprep.subr.mxu0 0.0
      %4766 = vmatpush1.msra.mxu0 %v4739
      %4767 = vmatprep.subr.mxu0 0.0
      %4768 = vmatpush1.msra.mxu0 %v4740
      %4769 = vmatprep.subr.mxu0 0.0
      %4770 = vmatpush1.msra.mxu0 %v4741
      %4771 = vmatprep.subr.mxu0 0.0
      %4772 = vmatpush1.msra.mxu0 %v4742
      %4773 = vmatprep.subr.mxu0 0.0
      %4774 = vmatpush1.msra.mxu0 %v4743
      %4775 = vmatprep.subr.mxu0 0.0
      %4776 = vmatpush1.msra.mxu0 %v4744
      %4777 = vmatprep.subr.mxu0 0.0
      %4778 = vmatpush1.msra.mxu0 %v4745
      %4779 = vmatprep.subr.mxu0 0.0
      %4780 = vmatpush1.msra.mxu0 0.0
      %4781 = vmatprep.subr.mxu0 0.0
      %4782 = vmatpush1.msra.mxu0 0.0
      %4783 = vmatprep.subr.mxu0 0.0
      %4784 = vmatpush1.msra.mxu0 0.0
      %4785 = vmatprep.subr.mxu0 0.0
      %4786 = vmatpush1.msra.mxu0 0.0
      %4787 = vmatprep.subr.mxu0 0.0
      %4788 = vmatpush1.msra.mxu0 0.0
      %4789 = vmatprep.subr.mxu0 0.0
      %4790 = vmatpush1.msra.mxu0 0.0
      %4791 = vmatprep.subr.mxu0 0.0
      %4792 = vmatpush1.msra.mxu0 0.0
      %4793 = vmatprep.subr.mxu0 0.0
      %4794 = vmatpush1.msra.mxu0 0.0
      %4795 = vmatprep.subr.mxu0 0.0
      %4796 = vmatpush1.msra.mxu0 0.0
      %4797 = vmatprep.subr.mxu0 0.0
      %4798 = vmatpush1.msra.mxu0 0.0
      %4799 = vmatprep.subr.mxu0 0.0
      %4800 = vmatpush1.msra.mxu0 0.0
      %4801 = vmatprep.subr.mxu0 0.0
      %4802 = vmatpush1.msra.mxu0 0.0
      %4803 = vmatprep.subr.mxu0 0.0
      %4804 = vmatpush1.msra.mxu0 0.0
      %4805 = vmatprep.subr.mxu0 0.0
      %4806 = vmatpush1.msra.mxu0 0.0
      %4807 = vmatprep.subr.mxu0 0.0
      %4808 = vmatpush1.msra.mxu0 0.0
      %4809 = vmatprep.subr.mxu0 0.0
      %4810 = vmatpush1.msra.mxu0 0.0
      %4811 = vmatprep.mubr.f32.mxu0 0.0
      %4812 = vmatmul.mubr.f32.gmra.mrb[0].mxu0 %v4729
      %v4813 = vpop.f32.mrb[0].mxu0
      %v4814 = vadd.f32 %v4746, %v4813
      %v4815 = vpop.f32.mrb[0].mxu0
      %4816 = vdwg.mxu0
      %v4817 = vlaneseq
      %v4818 = vand.u32 %v4817, 127
      %vm4819 = vcmp.lt.s32.totalorder %v4818, 10
      %v4820 = vsel %vm4819, %v4814, -1e+30
      %v4821 = vsel %vm1366, %v4820, -inf
      %4822 = vmax.xlane.f32.xlu0 %v4821
      %v4823 = vpop.xlane.xlu0 %4822
      %v4824 = vsub.f32 %v4820, %v4823
      %v4825 = vmul.f32 %v4824, 1.442695
      %v4826 = vpow.pop %v4825
      %v4827 = vsel %vm1366, %v4826, 0.0
      %4828 = vadd.xlane.f32.xlu0 %v4827
      %v4829 = vpop.xlane.xlu0 %4828
      %v4830 = vlog2.pop %v4829
      %v4831 = vmul.f32 %v4830, 0.6931472
      %v4832 = vadd.f32 %v4831, %v4823
      %v4833 = vsub.f32 %v4820, %v4832
      %v4834 = vlaneseq
      %v4835 = vshrl.u32 %v4834, 7
      %v4836 = vsub.s32 0, %v4835
      %v4837 = vrot.slane %v4833, %v4836
      %4838 = vst [vmem:[%s330] sm:$0xff] %v4837
      %p4839 = scmp.lt.s32.totalorder %s20, 1
      %s4840 = scalar_select %p4839, %s20, 1
      %s4841 = smul.addr %s4840, 8
      %s4842 = scalar_lea.vmem %s9, %s4841
      // Predicated region
      $region57: #{net_forward.1} parent=55 // pred_check
        %p4843 = pneg %p232
      $region58: #{net_forward.1} parent=55 // pred_check_branch
        %4845 = sbr.rel (%p4843) target = $region60
      $region59: #{net_forward.1} parent=55 // pred_region
        _
      $region60: #{net_forward.1} parent=55 // pred_fallthru
        _
    $region56: #{net_forward.1} parent=5 // pred_fallthru
      _
    %p4846 = scmp.le.s32.totalorder 2, %s15
    // Predicated region
    $region61: #{net_forward.1} parent=5 // pred_check
      %p4847 = pneg %p4846
    $region62: #{net_forward.1} parent=5 // pred_check_branch
      %4849 = sbr.rel (%p4847) target = $region64
    $region63: #{net_forward.1} parent=5 // pred_region
      %s4850 = ssub.s32 %s15, 2
      // Predicated region
      $region65: #{net_forward.1} parent=63 // pred_check
        %p4851 = pneg %p238
      $region66: #{net_forward.1} parent=63 // pred_check_branch
        %4853 = sbr.rel (%p4851) target = $region68
      $region67: #{net_forward.1} parent=63 // pred_region
        %p4854 = scmp.lt.s32.totalorder %s21, 1
        %s4855 = scalar_select %p4854, %s21, 1
        %s4856 = smul.addr %s4855, 8
        %s4857 = scalar_lea.vmem %s9, %s4856
      $region68: #{net_forward.1} parent=63 // pred_fallthru
        _
    $region64: #{net_forward.1} parent=5 // pred_fallthru
      _
  $region6: #{net_forward.1} parent=0 // loop_footer
    %s19 = sadd.s32 1, %s15
  $region7: #{net_forward.1} parent=0 // loop_footer_branch
    %14 = sbr.rel target = $region3
  $region8: #{net_forward.1} parent=0 // loop_exit
    _

</llo_original>
